<compile_context>
chip_gen: v5e
topology: v5e:2x2
jax: 0.10.0
libtpu: 0.0.40
codegen_flags: <defaults>
</compile_context>

<pallas_src>
import functools

import numpy as np
import jax
import jax.numpy as jnp
from jax import lax
from jax.experimental import pallas as pl
from jax.experimental.pallas import tpu as pltpu


# ----------------------------------------------------------------------------
# Deterministic basis construction (mirrors steerable_A +
# normalize_basis_by_min_scale from the SESN reference implementation).
# ----------------------------------------------------------------------------
def _hermite_poly(X, n):
    coeff = [0.0] * n + [1.0]
    return np.polynomial.hermite_e.hermeval(X, coeff)


def _onescale_grid_hermite_gaussian(size, scale, max_order):
    X = np.linspace(-(size // 2), size // 2, size)
    order_y, order_x = np.indices([max_order + 1, max_order + 1])
    G = np.exp(-X ** 2 / (2 * scale ** 2)) / scale
    basis_x = np.stack([G * _hermite_poly(X / scale, n) for n in order_x.ravel()])
    basis_y = np.stack([G * _hermite_poly(X / scale, n) for n in order_y.ravel()])
    return basis_x[:, :, None] * basis_y[:, None, :]        # [F, size, size]


def steerable_A(size, scales, effective_size):
    max_order = effective_size - 1
    max_scale = max(scales)
    per_scale = []
    for scale in scales:
        size_before_pad = int(size * scale / max_scale) // 2 * 2 + 1
        b = _onescale_grid_hermite_gaussian(size_before_pad, scale, max_order)
        pad = (size - size_before_pad) // 2
        b = np.pad(b, ((0, 0), (pad, pad), (pad, pad)))
        per_scale.append(b)
    return np.stack(per_scale, 1).astype(np.float32)        # [F, S, k, k]


def normalize_basis_by_min_scale(basis):
    norm = np.sqrt((basis ** 2).sum(axis=(2, 3), keepdims=True))[:, [0]]
    return basis / norm


def kaiming_uniform(key, shape, a=5 ** 0.5):
    fan_in = int(np.prod(shape[1:]))
    gain = np.sqrt(2.0 / (1.0 + a ** 2))
    bound = gain * np.sqrt(3.0 / fan_in)
    return jax.random.uniform(key, shape, jnp.float32, -bound, bound)


# ----------------------------------------------------------------------------
# Helpers
# ----------------------------------------------------------------------------
def _round_up(x, m):
    return ((x + m - 1) // m) * m


def _compose_kernel(weight, basis):
    # kernel = weight @ basis : [O*C*ss, F] x [F, S*k*k]  (tiny -> plain XLA)
    O, C, ss, F_ = weight.shape
    _, S, k, _ = basis.shape
    return jnp.dot(weight.reshape(O * C * ss, F_),
                   basis.reshape(F_, S * k * k),
                   precision=lax.Precision.HIGHEST)


# ----------------------------------------------------------------------------
# Pallas kernel: one grid step = one scale, all batches folded into lanes.
#   k_ref:    [1, O, Kp]          per-scale folded filter (bf16), Kp = rnd128(k*k*CCp)
#   x_ref:    [1, CCp, L_total]   scale-windowed input, lanes = batch-major
#                                 flattened padded spatial planes (+halo), bf16
#   o_ref:    [1, O, N]           dense (stride-1) conv output, N = B*L, f32
#   slab_ref: [Kp, N]             VMEM im2col slab (bf16)
# ----------------------------------------------------------------------------
def _ses_fused_gemm_kernel(k_ref, x_ref, o_ref, slab_ref, *, k, Wp, CCp, n_cols):
    taps = k * k
    kdim = taps * CCp
    kp = slab_ref.shape[0]
    if kp > kdim:
        # Zero the padded tail rows so the padded K columns multiply clean zeros.
        slab_ref[pl.ds(kdim, kp - kdim), :] = jnp.zeros(
            (kp - kdim, n_cols), slab_ref.dtype)

    # Implicit im2col: k*k shifted copies of the flattened input window.
    for ky in range(k):
        for kx in range(k):
            t = ky * k + kx
            shift = ky * Wp + kx                               # static flat shift
            slab_ref[pl.ds(t * CCp, CCp), :] = x_ref[0, :, pl.ds(shift, n_cols)]

    # One deep contraction: [O, Kp] @ [Kp, N] with f32 accumulation on the MXU.
    o_ref[0] = jnp.dot(k_ref[0], slab_ref[...],
                       preferred_element_type=jnp.float32)


# ----------------------------------------------------------------------------
# Forward pass (matches SESConv_H_H.forward semantics)
# ----------------------------------------------------------------------------
def ses_conv_h_h_forward(x, weight, basis, *, scale_size, kernel_size,
                         stride=1, padding=0, bias=None,
                         compute_dtype=jnp.bfloat16):
    B, C, S, H, W = x.shape
    O = weight.shape[0]
    k = kernel_size
    ss = scale_size
    p = padding
    CC = ss * C
    CCp = _round_up(CC, 8)          # sublane-aligned channel block per tap
    taps = k * k
    Kdim = taps * CCp
    Kp = _round_up(Kdim, 128)       # MXU-friendly contraction depth

    # ---- compose per-scale conv kernels, folded layout [S, O, Kp] ----
    kernel_flat = _compose_kernel(weight, basis)             # [O*C*ss, S*k*k] f32
    kernel6 = kernel_flat.reshape(O, C, ss, S, k, k)
    # K4[s, o, ky, kx, i, c]  with slab row index = (ky*k+kx)*CCp + i*C + c
    K4 = kernel6.transpose(3, 0, 4, 5, 2, 1)                  # [S, O, k, k, ss, C]
    K4 = K4.reshape(S, O, k, k, CC)
    K4 = jnp.pad(K4, ((0, 0), (0, 0), (0, 0), (0, 0), (0, CCp - CC)))
    K4 = K4.reshape(S, O, Kdim)
    K4 = jnp.pad(K4, ((0, 0), (0, 0), (0, Kp - Kdim))).astype(compute_dtype)

    # NOTE: PyTorch computes `value = x.mean()` when scale_size != 1 but never
    # uses it (dead code) -- intentionally skipped.

    # ---- scale-window + spatial pad + flatten; batch folded into lanes ----
    Hp, Wp = H + 2 * p, W + 2 * p
    xq = x.astype(compute_dtype)                              # cast BEFORE relayout
    x_pad = jnp.pad(xq, ((0, 0), (0, 0), (0, ss - 1), (p, p), (p, p)))
    xw = jnp.stack([x_pad[:, :, i:i + S] for i in range(ss)], axis=2)
    #      [B, C, ss, S, Hp, Wp] -> [S, ss, C, B, Hp, Wp]
    xw = xw.transpose(3, 2, 1, 0, 4, 5).reshape(S, CC, B, Hp * Wp)

    L = _round_up(Hp * Wp, 128)               # per-batch lane segment width
    N = B * L                                 # dense output lane width
    max_shift = (k - 1) * Wp + (k - 1)
    L_total = _round_up(N + max_shift, 128)   # input lane width incl. tail halo

    xw = jnp.pad(xw, ((0, 0), (0, CCp - CC), (0, 0), (0, L - Hp * Wp)))
    xw = xw.reshape(S, CCp, N)
    xw = jnp.pad(xw, ((0, 0), (0, 0), (0, L_total - N)))      # [S, CCp, L_total]

    Ho_d = Hp - k + 1                          # dense (stride-1) output rows
    Ho = (H + 2 * p - k) // stride + 1
    Wo = (W + 2 * p - k) // stride + 1

    # ---- VMEM budget: double-buffered inputs/output + im2col slab ----
    vmem_bytes = (2 * (O * Kp + CCp * L_total) * 2    # bf16 input blocks, 2-deep
                  + 2 * O * N * 4                     # f32 output block, 2-deep
                  + Kp * N * 2)                       # bf16 slab scratch
    vmem_limit = int(min(100 * 1024 * 1024,
                         max(32 * 1024 * 1024, 2 * vmem_bytes)))

    kern = functools.partial(_ses_fused_gemm_kernel,
                             k=k, Wp=Wp, CCp=CCp, n_cols=N)
    out_flat = pl.pallas_call(
        kern,
        out_shape=jax.ShapeDtypeStruct((S, O, N), jnp.float32),
        grid_spec=pltpu.PrefetchScalarGridSpec(
            num_scalar_prefetch=0,
            grid=(S,),
            in_specs=[
                pl.BlockSpec((1, O, Kp), lambda s: (s, 0, 0)),
                pl.BlockSpec((1, CCp, L_total), lambda s: (s, 0, 0)),
            ],
            out_specs=pl.BlockSpec((1, O, N), lambda s: (s, 0, 0)),
            scratch_shapes=[pltpu.VMEM((Kp, N), compute_dtype)],
        ),
        compiler_params=pltpu.CompilerParams(
            dimension_semantics=("parallel",),
            vmem_limit_bytes=vmem_limit),
    )(K4, xw)

    # ---- crop dense flat output back to [Ho, Wo] (and apply stride) ----
    out = out_flat.reshape(S, O, B, L)[..., :Ho_d * Wp]
    out = out.reshape(S, O, B, Ho_d, Wp)
    out = out[:, :, :, ::stride, ::stride][:, :, :, :Ho, :Wo]
    out = out.transpose(2, 1, 0, 3, 4)                        # [B, O, S, Ho, Wo]
    if bias is not None:
        out = out + bias.reshape(1, -1, 1, 1, 1)
    return out


# ----------------------------------------------------------------------------
# Pure-JAX reference (mirrors the PyTorch forward op-for-op) for verification.
# Uses the same bf16 quantization of the operands so only reduction order
# differs between the two paths.
# ----------------------------------------------------------------------------
def _reference_forward(x, weight, basis, ss, k, stride, p,
                       compute_dtype=jnp.bfloat16):
    O, C, _, _ = weight.shape
    S = basis.shape[1]
    B = x.shape[0]
    kernel_flat = _compose_kernel(weight, basis)
    kernel_flat = kernel_flat.astype(compute_dtype).astype(jnp.float32)
    kernel = kernel_flat.reshape(O, C, ss, S, k, k).transpose(3, 0, 1, 2, 4, 5)
    kernel = kernel.reshape(S * O, C, ss, k, k)
    xq = x.astype(compute_dtype).astype(jnp.float32)
    xp = jnp.pad(xq, ((0, 0), (0, 0), (0, ss - 1), (0, 0), (0, 0)))
    out = 0.0
    for i in range(ss):
        x_ = xp[:, :, i:i + S]
        Bb, Cc, Ss, H, W = x_.shape
        x_ = x_.transpose(0, 2, 1, 3, 4).reshape(Bb, Ss * Cc, H, W)
        out = out + lax.conv_general_dilated(
            x_, kernel[:, :, i], (stride, stride), [(p, p), (p, p)],
            feature_group_count=S,
            dimension_numbers=("NCHW", "OIHW", "NCHW"),
            precision=lax.Precision.HIGHEST)
    Ho, Wo = out.shape[2], out.shape[3]
    return out.reshape(B, S, O, Ho, Wo).transpose(0, 2, 1, 3, 4)


if __name__ == "__main__":
    # Small deterministic configuration.
    B, Cin, Cout = 2, 4, 8
    H = W = 16
    kernel_size, effective_size = 7, 4
    scale_size = 2
    scales = [1.0, 1.26, 1.587]
    S = len(scales)
    stride, padding = 1, 3

    basis_np = normalize_basis_by_min_scale(
        steerable_A(kernel_size, scales, effective_size))
    basis = jnp.asarray(basis_np)                      # [F, S, k, k]
    num_funcs = basis.shape[0]

    key = jax.random.PRNGKey(0)
    kw, kx_ = jax.random.split(key)
    weight = kaiming_uniform(kw, (Cout, Cin, scale_size, num_funcs))
    x = jax.random.normal(kx_, (B, Cin, S, H, W), jnp.float32)

    fwd = jax.jit(ses_conv_h_h_forward,
                  static_argnames=("scale_size", "kernel_size",
                                   "stride", "padding"))
    out = fwd(x, weight, basis, scale_size=scale_size,
              kernel_size=kernel_size, stride=stride, padding=padding)
    out = jax.block_until_ready(out)

    Ho = (H + 2 * padding - kernel_size) // stride + 1
    Wo = (W + 2 * padding - kernel_size) // stride + 1
    assert out.shape == (B, Cout, S, Ho, Wo), out.shape

    ref = _reference_forward(x, weight, basis, scale_size, kernel_size,
                             stride, padding)
    np.testing.assert_allclose(np.asarray(out), np.asarray(ref),
                               rtol=2e-3, atol=2e-3)
    print("KERNEL_OK")
</pallas_src>

<mosaic_0001>
module attributes {stable_mosaic.version = 11 : i64} {
  func.func @_ses_fused_gemm_kernel(%arg0: i32, %arg1: memref<1x8x512xbf16, #tpu.memory_space<vmem>>, %arg2: memref<1x8x1280xbf16, #tpu.memory_space<vmem>>, %arg3: memref<1x8x1024xf32, #tpu.memory_space<vmem>>, %arg4: memref<512x1024xbf16, #tpu.memory_space<vmem>>) attributes {dimension_semantics = [#tpu.dimension_semantics<parallel>], iteration_bounds = array<i64: 3>, scalar_prefetch = 0 : i64, scratch_operands = 1 : i64, tpu.core_type = #tpu.core_type<tc>, window_params = [{transform_indices = @transform_0, window_bounds = array<i64: 1, 8, 512>}, {transform_indices = @transform_1, window_bounds = array<i64: 1, 8, 1280>}, {transform_indices = @transform_2, window_bounds = array<i64: 1, 8, 1024>}]} {
    %cst = arith.constant 0.000000e+00 : bf16
    %0 = vector.broadcast %cst : bf16 to vector<120x1024xbf16>
    %c392 = arith.constant 392 : index
    %c0 = arith.constant 0 : index
    %1 = vector.load %arg4[%c392, %c0] : memref<512x1024xbf16, #tpu.memory_space<vmem>>, vector<120x1024xbf16>
    tpu.vector_store %arg4[%c392, %c0], %0 {strides = array<i32>} : memref<512x1024xbf16, #tpu.memory_space<vmem>>, vector<120x1024xbf16>,
    %c0_0 = arith.constant 0 : index
    %c0_1 = arith.constant 0 : index
    %c0_2 = arith.constant 0 : index
    %2 = vector.load %arg2[%c0_0, %c0_1, %c0_2] : memref<1x8x1280xbf16, #tpu.memory_space<vmem>>, vector<1x8x1024xbf16>
    %3 = vector.shape_cast %2 : vector<1x8x1024xbf16> to vector<8x1024xbf16>
    %c0_3 = arith.constant 0 : index
    %c0_4 = arith.constant 0 : index
    %4 = vector.load %arg4[%c0_3, %c0_4] : memref<512x1024xbf16, #tpu.memory_space<vmem>>, vector<8x1024xbf16>
    tpu.vector_store %arg4[%c0_3, %c0_4], %3 {strides = array<i32>} : memref<512x1024xbf16, #tpu.memory_space<vmem>>, vector<8x1024xbf16>,
    %c0_5 = arith.constant 0 : index
    %c0_6 = arith.constant 0 : index
    %c1 = arith.constant 1 : index
    %5 = vector.load %arg2[%c0_5, %c0_6, %c1] : memref<1x8x1280xbf16, #tpu.memory_space<vmem>>, vector<1x8x1024xbf16>
    %6 = vector.shape_cast %5 : vector<1x8x1024xbf16> to vector<8x1024xbf16>
    %c8 = arith.constant 8 : index
    %c0_7 = arith.constant 0 : index
    %7 = vector.load %arg4[%c8, %c0_7] : memref<512x1024xbf16, #tpu.memory_space<vmem>>, vector<8x1024xbf16>
    tpu.vector_store %arg4[%c8, %c0_7], %6 {strides = array<i32>} : memref<512x1024xbf16, #tpu.memory_space<vmem>>, vector<8x1024xbf16>,
    %c0_8 = arith.constant 0 : index
    %c0_9 = arith.constant 0 : index
    %c2 = arith.constant 2 : index
    %8 = vector.load %arg2[%c0_8, %c0_9, %c2] : memref<1x8x1280xbf16, #tpu.memory_space<vmem>>, vector<1x8x1024xbf16>
    %9 = vector.shape_cast %8 : vector<1x8x1024xbf16> to vector<8x1024xbf16>
    %c16 = arith.constant 16 : index
    %c0_10 = arith.constant 0 : index
    %10 = vector.load %arg4[%c16, %c0_10] : memref<512x1024xbf16, #tpu.memory_space<vmem>>, vector<8x1024xbf16>
    tpu.vector_store %arg4[%c16, %c0_10], %9 {strides = array<i32>} : memref<512x1024xbf16, #tpu.memory_space<vmem>>, vector<8x1024xbf16>,
    %c0_11 = arith.constant 0 : index
    %c0_12 = arith.constant 0 : index
    %c3 = arith.constant 3 : index
    %11 = vector.load %arg2[%c0_11, %c0_12, %c3] : memref<1x8x1280xbf16, #tpu.memory_space<vmem>>, vector<1x8x1024xbf16>
    %12 = vector.shape_cast %11 : vector<1x8x1024xbf16> to vector<8x1024xbf16>
    %c24 = arith.constant 24 : index
    %c0_13 = arith.constant 0 : index
    %13 = vector.load %arg4[%c24, %c0_13] : memref<512x1024xbf16, #tpu.memory_space<vmem>>, vector<8x1024xbf16>
    tpu.vector_store %arg4[%c24, %c0_13], %12 {strides = array<i32>} : memref<512x1024xbf16, #tpu.memory_space<vmem>>, vector<8x1024xbf16>,
    %c0_14 = arith.constant 0 : index
    %c0_15 = arith.constant 0 : index
    %c4 = arith.constant 4 : index
    %14 = vector.load %arg2[%c0_14, %c0_15, %c4] : memref<1x8x1280xbf16, #tpu.memory_space<vmem>>, vector<1x8x1024xbf16>
    %15 = vector.shape_cast %14 : vector<1x8x1024xbf16> to vector<8x1024xbf16>
    %c32 = arith.constant 32 : index
    %c0_16 = arith.constant 0 : index
    %16 = vector.load %arg4[%c32, %c0_16] : memref<512x1024xbf16, #tpu.memory_space<vmem>>, vector<8x1024xbf16>
    tpu.vector_store %arg4[%c32, %c0_16], %15 {strides = array<i32>} : memref<512x1024xbf16, #tpu.memory_space<vmem>>, vector<8x1024xbf16>,
    %c0_17 = arith.constant 0 : index
    %c0_18 = arith.constant 0 : index
    %c5 = arith.constant 5 : index
    %17 = vector.load %arg2[%c0_17, %c0_18, %c5] : memref<1x8x1280xbf16, #tpu.memory_space<vmem>>, vector<1x8x1024xbf16>
    %18 = vector.shape_cast %17 : vector<1x8x1024xbf16> to vector<8x1024xbf16>
    %c40 = arith.constant 40 : index
    %c0_19 = arith.constant 0 : index
    %19 = vector.load %arg4[%c40, %c0_19] : memref<512x1024xbf16, #tpu.memory_space<vmem>>, vector<8x1024xbf16>
    tpu.vector_store %arg4[%c40, %c0_19], %18 {strides = array<i32>} : memref<512x1024xbf16, #tpu.memory_space<vmem>>, vector<8x1024xbf16>,
    %c0_20 = arith.constant 0 : index
    %c0_21 = arith.constant 0 : index
    %c6 = arith.constant 6 : index
    %20 = vector.load %arg2[%c0_20, %c0_21, %c6] : memref<1x8x1280xbf16, #tpu.memory_space<vmem>>, vector<1x8x1024xbf16>
    %21 = vector.shape_cast %20 : vector<1x8x1024xbf16> to vector<8x1024xbf16>
    %c48 = arith.constant 48 : index
    %c0_22 = arith.constant 0 : index
    %22 = vector.load %arg4[%c48, %c0_22] : memref<512x1024xbf16, #tpu.memory_space<vmem>>, vector<8x1024xbf16>
    tpu.vector_store %arg4[%c48, %c0_22], %21 {strides = array<i32>} : memref<512x1024xbf16, #tpu.memory_space<vmem>>, vector<8x1024xbf16>,
    %c0_23 = arith.constant 0 : index
    %c0_24 = arith.constant 0 : index
    %c22 = arith.constant 22 : index
    %23 = vector.load %arg2[%c0_23, %c0_24, %c22] : memref<1x8x1280xbf16, #tpu.memory_space<vmem>>, vector<1x8x1024xbf16>
    %24 = vector.shape_cast %23 : vector<1x8x1024xbf16> to vector<8x1024xbf16>
    %c56 = arith.constant 56 : index
    %c0_25 = arith.constant 0 : index
    %25 = vector.load %arg4[%c56, %c0_25] : memref<512x1024xbf16, #tpu.memory_space<vmem>>, vector<8x1024xbf16>
    tpu.vector_store %arg4[%c56, %c0_25], %24 {strides = array<i32>} : memref<512x1024xbf16, #tpu.memory_space<vmem>>, vector<8x1024xbf16>,
    %c0_26 = arith.constant 0 : index
    %c0_27 = arith.constant 0 : index
    %c23 = arith.constant 23 : index
    %26 = vector.load %arg2[%c0_26, %c0_27, %c23] : memref<1x8x1280xbf16, #tpu.memory_space<vmem>>, vector<1x8x1024xbf16>
    %27 = vector.shape_cast %26 : vector<1x8x1024xbf16> to vector<8x1024xbf16>
    %c64 = arith.constant 64 : index
    %c0_28 = arith.constant 0 : index
    %28 = vector.load %arg4[%c64, %c0_28] : memref<512x1024xbf16, #tpu.memory_space<vmem>>, vector<8x1024xbf16>
    tpu.vector_store %arg4[%c64, %c0_28], %27 {strides = array<i32>} : memref<512x1024xbf16, #tpu.memory_space<vmem>>, vector<8x1024xbf16>,
    %c0_29 = arith.constant 0 : index
    %c0_30 = arith.constant 0 : index
    %c24_31 = arith.constant 24 : index
    %29 = vector.load %arg2[%c0_29, %c0_30, %c24_31] : memref<1x8x1280xbf16, #tpu.memory_space<vmem>>, vector<1x8x1024xbf16>
    %30 = vector.shape_cast %29 : vector<1x8x1024xbf16> to vector<8x1024xbf16>
    %c72 = arith.constant 72 : index
    %c0_32 = arith.constant 0 : index
    %31 = vector.load %arg4[%c72, %c0_32] : memref<512x1024xbf16, #tpu.memory_space<vmem>>, vector<8x1024xbf16>
    tpu.vector_store %arg4[%c72, %c0_32], %30 {strides = array<i32>} : memref<512x1024xbf16, #tpu.memory_space<vmem>>, vector<8x1024xbf16>,
    %c0_33 = arith.constant 0 : index
    %c0_34 = arith.constant 0 : index
    %c25 = arith.constant 25 : index
    %32 = vector.load %arg2[%c0_33, %c0_34, %c25] : memref<1x8x1280xbf16, #tpu.memory_space<vmem>>, vector<1x8x1024xbf16>
    %33 = vector.shape_cast %32 : vector<1x8x1024xbf16> to vector<8x1024xbf16>
    %c80 = arith.constant 80 : index
    %c0_35 = arith.constant 0 : index
    %34 = vector.load %arg4[%c80, %c0_35] : memref<512x1024xbf16, #tpu.memory_space<vmem>>, vector<8x1024xbf16>
    tpu.vector_store %arg4[%c80, %c0_35], %33 {strides = array<i32>} : memref<512x1024xbf16, #tpu.memory_space<vmem>>, vector<8x1024xbf16>,
    %c0_36 = arith.constant 0 : index
    %c0_37 = arith.constant 0 : index
    %c26 = arith.constant 26 : index
    %35 = vector.load %arg2[%c0_36, %c0_37, %c26] : memref<1x8x1280xbf16, #tpu.memory_space<vmem>>, vector<1x8x1024xbf16>
    %36 = vector.shape_cast %35 : vector<1x8x1024xbf16> to vector<8x1024xbf16>
    %c88 = arith.constant 88 : index
    %c0_38 = arith.constant 0 : index
    %37 = vector.load %arg4[%c88, %c0_38] : memref<512x1024xbf16, #tpu.memory_space<vmem>>, vector<8x1024xbf16>
    tpu.vector_store %arg4[%c88, %c0_38], %36 {strides = array<i32>} : memref<512x1024xbf16, #tpu.memory_space<vmem>>, vector<8x1024xbf16>,
    %c0_39 = arith.constant 0 : index
    %c0_40 = arith.constant 0 : index
    %c27 = arith.constant 27 : index
    %38 = vector.load %arg2[%c0_39, %c0_40, %c27] : memref<1x8x1280xbf16, #tpu.memory_space<vmem>>, vector<1x8x1024xbf16>
    %39 = vector.shape_cast %38 : vector<1x8x1024xbf16> to vector<8x1024xbf16>
    %c96 = arith.constant 96 : index
    %c0_41 = arith.constant 0 : index
    %40 = vector.load %arg4[%c96, %c0_41] : memref<512x1024xbf16, #tpu.memory_space<vmem>>, vector<8x1024xbf16>
    tpu.vector_store %arg4[%c96, %c0_41], %39 {strides = array<i32>} : memref<512x1024xbf16, #tpu.memory_space<vmem>>, vector<8x1024xbf16>,
    %c0_42 = arith.constant 0 : index
    %c0_43 = arith.constant 0 : index
    %c28 = arith.constant 28 : index
    %41 = vector.load %arg2[%c0_42, %c0_43, %c28] : memref<1x8x1280xbf16, #tpu.memory_space<vmem>>, vector<1x8x1024xbf16>
    %42 = vector.shape_cast %41 : vector<1x8x1024xbf16> to vector<8x1024xbf16>
    %c104 = arith.constant 104 : index
    %c0_44 = arith.constant 0 : index
    %43 = vector.load %arg4[%c104, %c0_44] : memref<512x1024xbf16, #tpu.memory_space<vmem>>, vector<8x1024xbf16>
    tpu.vector_store %arg4[%c104, %c0_44], %42 {strides = array<i32>} : memref<512x1024xbf16, #tpu.memory_space<vmem>>, vector<8x1024xbf16>,
    %c0_45 = arith.constant 0 : index
    %c0_46 = arith.constant 0 : index
    %c44 = arith.constant 44 : index
    %44 = vector.load %arg2[%c0_45, %c0_46, %c44] : memref<1x8x1280xbf16, #tpu.memory_space<vmem>>, vector<1x8x1024xbf16>
    %45 = vector.shape_cast %44 : vector<1x8x1024xbf16> to vector<8x1024xbf16>
    %c112 = arith.constant 112 : index
    %c0_47 = arith.constant 0 : index
    %46 = vector.load %arg4[%c112, %c0_47] : memref<512x1024xbf16, #tpu.memory_space<vmem>>, vector<8x1024xbf16>
    tpu.vector_store %arg4[%c112, %c0_47], %45 {strides = array<i32>} : memref<512x1024xbf16, #tpu.memory_space<vmem>>, vector<8x1024xbf16>,
    %c0_48 = arith.constant 0 : index
    %c0_49 = arith.constant 0 : index
    %c45 = arith.constant 45 : index
    %47 = vector.load %arg2[%c0_48, %c0_49, %c45] : memref<1x8x1280xbf16, #tpu.memory_space<vmem>>, vector<1x8x1024xbf16>
    %48 = vector.shape_cast %47 : vector<1x8x1024xbf16> to vector<8x1024xbf16>
    %c120 = arith.constant 120 : index
    %c0_50 = arith.constant 0 : index
    %49 = vector.load %arg4[%c120, %c0_50] : memref<512x1024xbf16, #tpu.memory_space<vmem>>, vector<8x1024xbf16>
    tpu.vector_store %arg4[%c120, %c0_50], %48 {strides = array<i32>} : memref<512x1024xbf16, #tpu.memory_space<vmem>>, vector<8x1024xbf16>,
    %c0_51 = arith.constant 0 : index
    %c0_52 = arith.constant 0 : index
    %c46 = arith.constant 46 : index
    %50 = vector.load %arg2[%c0_51, %c0_52, %c46] : memref<1x8x1280xbf16, #tpu.memory_space<vmem>>, vector<1x8x1024xbf16>
    %51 = vector.shape_cast %50 : vector<1x8x1024xbf16> to vector<8x1024xbf16>
    %c128 = arith.constant 128 : index
    %c0_53 = arith.constant 0 : index
    %52 = vector.load %arg4[%c128, %c0_53] : memref<512x1024xbf16, #tpu.memory_space<vmem>>, vector<8x1024xbf16>
    tpu.vector_store %arg4[%c128, %c0_53], %51 {strides = array<i32>} : memref<512x1024xbf16, #tpu.memory_space<vmem>>, vector<8x1024xbf16>,
    %c0_54 = arith.constant 0 : index
    %c0_55 = arith.constant 0 : index
    %c47 = arith.constant 47 : index
    %53 = vector.load %arg2[%c0_54, %c0_55, %c47] : memref<1x8x1280xbf16, #tpu.memory_space<vmem>>, vector<1x8x1024xbf16>
    %54 = vector.shape_cast %53 : vector<1x8x1024xbf16> to vector<8x1024xbf16>
    %c136 = arith.constant 136 : index
    %c0_56 = arith.constant 0 : index
    %55 = vector.load %arg4[%c136, %c0_56] : memref<512x1024xbf16, #tpu.memory_space<vmem>>, vector<8x1024xbf16>
    tpu.vector_store %arg4[%c136, %c0_56], %54 {strides = array<i32>} : memref<512x1024xbf16, #tpu.memory_space<vmem>>, vector<8x1024xbf16>,
    %c0_57 = arith.constant 0 : index
    %c0_58 = arith.constant 0 : index
    %c48_59 = arith.constant 48 : index
    %56 = vector.load %arg2[%c0_57, %c0_58, %c48_59] : memref<1x8x1280xbf16, #tpu.memory_space<vmem>>, vector<1x8x1024xbf16>
    %57 = vector.shape_cast %56 : vector<1x8x1024xbf16> to vector<8x1024xbf16>
    %c144 = arith.constant 144 : index
    %c0_60 = arith.constant 0 : index
    %58 = vector.load %arg4[%c144, %c0_60] : memref<512x1024xbf16, #tpu.memory_space<vmem>>, vector<8x1024xbf16>
    tpu.vector_store %arg4[%c144, %c0_60], %57 {strides = array<i32>} : memref<512x1024xbf16, #tpu.memory_space<vmem>>, vector<8x1024xbf16>,
    %c0_61 = arith.constant 0 : index
    %c0_62 = arith.constant 0 : index
    %c49 = arith.constant 49 : index
    %59 = vector.load %arg2[%c0_61, %c0_62, %c49] : memref<1x8x1280xbf16, #tpu.memory_space<vmem>>, vector<1x8x1024xbf16>
    %60 = vector.shape_cast %59 : vector<1x8x1024xbf16> to vector<8x1024xbf16>
    %c152 = arith.constant 152 : index
    %c0_63 = arith.constant 0 : index
    %61 = vector.load %arg4[%c152, %c0_63] : memref<512x1024xbf16, #tpu.memory_space<vmem>>, vector<8x1024xbf16>
    tpu.vector_store %arg4[%c152, %c0_63], %60 {strides = array<i32>} : memref<512x1024xbf16, #tpu.memory_space<vmem>>, vector<8x1024xbf16>,
    %c0_64 = arith.constant 0 : index
    %c0_65 = arith.constant 0 : index
    %c50 = arith.constant 50 : index
    %62 = vector.load %arg2[%c0_64, %c0_65, %c50] : memref<1x8x1280xbf16, #tpu.memory_space<vmem>>, vector<1x8x1024xbf16>
    %63 = vector.shape_cast %62 : vector<1x8x1024xbf16> to vector<8x1024xbf16>
    %c160 = arith.constant 160 : index
    %c0_66 = arith.constant 0 : index
    %64 = vector.load %arg4[%c160, %c0_66] : memref<512x1024xbf16, #tpu.memory_space<vmem>>, vector<8x1024xbf16>
    tpu.vector_store %arg4[%c160, %c0_66], %63 {strides = array<i32>} : memref<512x1024xbf16, #tpu.memory_space<vmem>>, vector<8x1024xbf16>,
    %c0_67 = arith.constant 0 : index
    %c0_68 = arith.constant 0 : index
    %c66 = arith.constant 66 : index
    %65 = vector.load %arg2[%c0_67, %c0_68, %c66] : memref<1x8x1280xbf16, #tpu.memory_space<vmem>>, vector<1x8x1024xbf16>
    %66 = vector.shape_cast %65 : vector<1x8x1024xbf16> to vector<8x1024xbf16>
    %c168 = arith.constant 168 : index
    %c0_69 = arith.constant 0 : index
    %67 = vector.load %arg4[%c168, %c0_69] : memref<512x1024xbf16, #tpu.memory_space<vmem>>, vector<8x1024xbf16>
    tpu.vector_store %arg4[%c168, %c0_69], %66 {strides = array<i32>} : memref<512x1024xbf16, #tpu.memory_space<vmem>>, vector<8x1024xbf16>,
    %c0_70 = arith.constant 0 : index
    %c0_71 = arith.constant 0 : index
    %c67 = arith.constant 67 : index
    %68 = vector.load %arg2[%c0_70, %c0_71, %c67] : memref<1x8x1280xbf16, #tpu.memory_space<vmem>>, vector<1x8x1024xbf16>
    %69 = vector.shape_cast %68 : vector<1x8x1024xbf16> to vector<8x1024xbf16>
    %c176 = arith.constant 176 : index
    %c0_72 = arith.constant 0 : index
    %70 = vector.load %arg4[%c176, %c0_72] : memref<512x1024xbf16, #tpu.memory_space<vmem>>, vector<8x1024xbf16>
    tpu.vector_store %arg4[%c176, %c0_72], %69 {strides = array<i32>} : memref<512x1024xbf16, #tpu.memory_space<vmem>>, vector<8x1024xbf16>,
    %c0_73 = arith.constant 0 : index
    %c0_74 = arith.constant 0 : index
    %c68 = arith.constant 68 : index
    %71 = vector.load %arg2[%c0_73, %c0_74, %c68] : memref<1x8x1280xbf16, #tpu.memory_space<vmem>>, vector<1x8x1024xbf16>
    %72 = vector.shape_cast %71 : vector<1x8x1024xbf16> to vector<8x1024xbf16>
    %c184 = arith.constant 184 : index
    %c0_75 = arith.constant 0 : index
    %73 = vector.load %arg4[%c184, %c0_75] : memref<512x1024xbf16, #tpu.memory_space<vmem>>, vector<8x1024xbf16>
    tpu.vector_store %arg4[%c184, %c0_75], %72 {strides = array<i32>} : memref<512x1024xbf16, #tpu.memory_space<vmem>>, vector<8x1024xbf16>,
    %c0_76 = arith.constant 0 : index
    %c0_77 = arith.constant 0 : index
    %c69 = arith.constant 69 : index
    %74 = vector.load %arg2[%c0_76, %c0_77, %c69] : memref<1x8x1280xbf16, #tpu.memory_space<vmem>>, vector<1x8x1024xbf16>
    %75 = vector.shape_cast %74 : vector<1x8x1024xbf16> to vector<8x1024xbf16>
    %c192 = arith.constant 192 : index
    %c0_78 = arith.constant 0 : index
    %76 = vector.load %arg4[%c192, %c0_78] : memref<512x1024xbf16, #tpu.memory_space<vmem>>, vector<8x1024xbf16>
    tpu.vector_store %arg4[%c192, %c0_78], %75 {strides = array<i32>} : memref<512x1024xbf16, #tpu.memory_space<vmem>>, vector<8x1024xbf16>,
    %c0_79 = arith.constant 0 : index
    %c0_80 = arith.constant 0 : index
    %c70 = arith.constant 70 : index
    %77 = vector.load %arg2[%c0_79, %c0_80, %c70] : memref<1x8x1280xbf16, #tpu.memory_space<vmem>>, vector<1x8x1024xbf16>
    %78 = vector.shape_cast %77 : vector<1x8x1024xbf16> to vector<8x1024xbf16>
    %c200 = arith.constant 200 : index
    %c0_81 = arith.constant 0 : index
    %79 = vector.load %arg4[%c200, %c0_81] : memref<512x1024xbf16, #tpu.memory_space<vmem>>, vector<8x1024xbf16>
    tpu.vector_store %arg4[%c200, %c0_81], %78 {strides = array<i32>} : memref<512x1024xbf16, #tpu.memory_space<vmem>>, vector<8x1024xbf16>,
    %c0_82 = arith.constant 0 : index
    %c0_83 = arith.constant 0 : index
    %c71 = arith.constant 71 : index
    %80 = vector.load %arg2[%c0_82, %c0_83, %c71] : memref<1x8x1280xbf16, #tpu.memory_space<vmem>>, vector<1x8x1024xbf16>
    %81 = vector.shape_cast %80 : vector<1x8x1024xbf16> to vector<8x1024xbf16>
    %c208 = arith.constant 208 : index
    %c0_84 = arith.constant 0 : index
    %82 = vector.load %arg4[%c208, %c0_84] : memref<512x1024xbf16, #tpu.memory_space<vmem>>, vector<8x1024xbf16>
    tpu.vector_store %arg4[%c208, %c0_84], %81 {strides = array<i32>} : memref<512x1024xbf16, #tpu.memory_space<vmem>>, vector<8x1024xbf16>,
    %c0_85 = arith.constant 0 : index
    %c0_86 = arith.constant 0 : index
    %c72_87 = arith.constant 72 : index
    %83 = vector.load %arg2[%c0_85, %c0_86, %c72_87] : memref<1x8x1280xbf16, #tpu.memory_space<vmem>>, vector<1x8x1024xbf16>
    %84 = vector.shape_cast %83 : vector<1x8x1024xbf16> to vector<8x1024xbf16>
    %c216 = arith.constant 216 : index
    %c0_88 = arith.constant 0 : index
    %85 = vector.load %arg4[%c216, %c0_88] : memref<512x1024xbf16, #tpu.memory_space<vmem>>, vector<8x1024xbf16>
    tpu.vector_store %arg4[%c216, %c0_88], %84 {strides = array<i32>} : memref<512x1024xbf16, #tpu.memory_space<vmem>>, vector<8x1024xbf16>,
    %c0_89 = arith.constant 0 : index
    %c0_90 = arith.constant 0 : index
    %c88_91 = arith.constant 88 : index
    %86 = vector.load %arg2[%c0_89, %c0_90, %c88_91] : memref<1x8x1280xbf16, #tpu.memory_space<vmem>>, vector<1x8x1024xbf16>
    %87 = vector.shape_cast %86 : vector<1x8x1024xbf16> to vector<8x1024xbf16>
    %c224 = arith.constant 224 : index
    %c0_92 = arith.constant 0 : index
    %88 = vector.load %arg4[%c224, %c0_92] : memref<512x1024xbf16, #tpu.memory_space<vmem>>, vector<8x1024xbf16>
    tpu.vector_store %arg4[%c224, %c0_92], %87 {strides = array<i32>} : memref<512x1024xbf16, #tpu.memory_space<vmem>>, vector<8x1024xbf16>,
    %c0_93 = arith.constant 0 : index
    %c0_94 = arith.constant 0 : index
    %c89 = arith.constant 89 : index
    %89 = vector.load %arg2[%c0_93, %c0_94, %c89] : memref<1x8x1280xbf16, #tpu.memory_space<vmem>>, vector<1x8x1024xbf16>
    %90 = vector.shape_cast %89 : vector<1x8x1024xbf16> to vector<8x1024xbf16>
    %c232 = arith.constant 232 : index
    %c0_95 = arith.constant 0 : index
    %91 = vector.load %arg4[%c232, %c0_95] : memref<512x1024xbf16, #tpu.memory_space<vmem>>, vector<8x1024xbf16>
    tpu.vector_store %arg4[%c232, %c0_95], %90 {strides = array<i32>} : memref<512x1024xbf16, #tpu.memory_space<vmem>>, vector<8x1024xbf16>,
    %c0_96 = arith.constant 0 : index
    %c0_97 = arith.constant 0 : index
    %c90 = arith.constant 90 : index
    %92 = vector.load %arg2[%c0_96, %c0_97, %c90] : memref<1x8x1280xbf16, #tpu.memory_space<vmem>>, vector<1x8x1024xbf16>
    %93 = vector.shape_cast %92 : vector<1x8x1024xbf16> to vector<8x1024xbf16>
    %c240 = arith.constant 240 : index
    %c0_98 = arith.constant 0 : index
    %94 = vector.load %arg4[%c240, %c0_98] : memref<512x1024xbf16, #tpu.memory_space<vmem>>, vector<8x1024xbf16>
    tpu.vector_store %arg4[%c240, %c0_98], %93 {strides = array<i32>} : memref<512x1024xbf16, #tpu.memory_space<vmem>>, vector<8x1024xbf16>,
    %c0_99 = arith.constant 0 : index
    %c0_100 = arith.constant 0 : index
    %c91 = arith.constant 91 : index
    %95 = vector.load %arg2[%c0_99, %c0_100, %c91] : memref<1x8x1280xbf16, #tpu.memory_space<vmem>>, vector<1x8x1024xbf16>
    %96 = vector.shape_cast %95 : vector<1x8x1024xbf16> to vector<8x1024xbf16>
    %c248 = arith.constant 248 : index
    %c0_101 = arith.constant 0 : index
    %97 = vector.load %arg4[%c248, %c0_101] : memref<512x1024xbf16, #tpu.memory_space<vmem>>, vector<8x1024xbf16>
    tpu.vector_store %arg4[%c248, %c0_101], %96 {strides = array<i32>} : memref<512x1024xbf16, #tpu.memory_space<vmem>>, vector<8x1024xbf16>,
    %c0_102 = arith.constant 0 : index
    %c0_103 = arith.constant 0 : index
    %c92 = arith.constant 92 : index
    %98 = vector.load %arg2[%c0_102, %c0_103, %c92] : memref<1x8x1280xbf16, #tpu.memory_space<vmem>>, vector<1x8x1024xbf16>
    %99 = vector.shape_cast %98 : vector<1x8x1024xbf16> to vector<8x1024xbf16>
    %c256 = arith.constant 256 : index
    %c0_104 = arith.constant 0 : index
    %100 = vector.load %arg4[%c256, %c0_104] : memref<512x1024xbf16, #tpu.memory_space<vmem>>, vector<8x1024xbf16>
    tpu.vector_store %arg4[%c256, %c0_104], %99 {strides = array<i32>} : memref<512x1024xbf16, #tpu.memory_space<vmem>>, vector<8x1024xbf16>,
    %c0_105 = arith.constant 0 : index
    %c0_106 = arith.constant 0 : index
    %c93 = arith.constant 93 : index
    %101 = vector.load %arg2[%c0_105, %c0_106, %c93] : memref<1x8x1280xbf16, #tpu.memory_space<vmem>>, vector<1x8x1024xbf16>
    %102 = vector.shape_cast %101 : vector<1x8x1024xbf16> to vector<8x1024xbf16>
    %c264 = arith.constant 264 : index
    %c0_107 = arith.constant 0 : index
    %103 = vector.load %arg4[%c264, %c0_107] : memref<512x1024xbf16, #tpu.memory_space<vmem>>, vector<8x1024xbf16>
    tpu.vector_store %arg4[%c264, %c0_107], %102 {strides = array<i32>} : memref<512x1024xbf16, #tpu.memory_space<vmem>>, vector<8x1024xbf16>,
    %c0_108 = arith.constant 0 : index
    %c0_109 = arith.constant 0 : index
    %c94 = arith.constant 94 : index
    %104 = vector.load %arg2[%c0_108, %c0_109, %c94] : memref<1x8x1280xbf16, #tpu.memory_space<vmem>>, vector<1x8x1024xbf16>
    %105 = vector.shape_cast %104 : vector<1x8x1024xbf16> to vector<8x1024xbf16>
    %c272 = arith.constant 272 : index
    %c0_110 = arith.constant 0 : index
    %106 = vector.load %arg4[%c272, %c0_110] : memref<512x1024xbf16, #tpu.memory_space<vmem>>, vector<8x1024xbf16>
    tpu.vector_store %arg4[%c272, %c0_110], %105 {strides = array<i32>} : memref<512x1024xbf16, #tpu.memory_space<vmem>>, vector<8x1024xbf16>,
    %c0_111 = arith.constant 0 : index
    %c0_112 = arith.constant 0 : index
    %c110 = arith.constant 110 : index
    %107 = vector.load %arg2[%c0_111, %c0_112, %c110] : memref<1x8x1280xbf16, #tpu.memory_space<vmem>>, vector<1x8x1024xbf16>
    %108 = vector.shape_cast %107 : vector<1x8x1024xbf16> to vector<8x1024xbf16>
    %c280 = arith.constant 280 : index
    %c0_113 = arith.constant 0 : index
    %109 = vector.load %arg4[%c280, %c0_113] : memref<512x1024xbf16, #tpu.memory_space<vmem>>, vector<8x1024xbf16>
    tpu.vector_store %arg4[%c280, %c0_113], %108 {strides = array<i32>} : memref<512x1024xbf16, #tpu.memory_space<vmem>>, vector<8x1024xbf16>,
    %c0_114 = arith.constant 0 : index
    %c0_115 = arith.constant 0 : index
    %c111 = arith.constant 111 : index
    %110 = vector.load %arg2[%c0_114, %c0_115, %c111] : memref<1x8x1280xbf16, #tpu.memory_space<vmem>>, vector<1x8x1024xbf16>
    %111 = vector.shape_cast %110 : vector<1x8x1024xbf16> to vector<8x1024xbf16>
    %c288 = arith.constant 288 : index
    %c0_116 = arith.constant 0 : index
    %112 = vector.load %arg4[%c288, %c0_116] : memref<512x1024xbf16, #tpu.memory_space<vmem>>, vector<8x1024xbf16>
    tpu.vector_store %arg4[%c288, %c0_116], %111 {strides = array<i32>} : memref<512x1024xbf16, #tpu.memory_space<vmem>>, vector<8x1024xbf16>,
    %c0_117 = arith.constant 0 : index
    %c0_118 = arith.constant 0 : index
    %c112_119 = arith.constant 112 : index
    %113 = vector.load %arg2[%c0_117, %c0_118, %c112_119] : memref<1x8x1280xbf16, #tpu.memory_space<vmem>>, vector<1x8x1024xbf16>
    %114 = vector.shape_cast %113 : vector<1x8x1024xbf16> to vector<8x1024xbf16>
    %c296 = arith.constant 296 : index
    %c0_120 = arith.constant 0 : index
    %115 = vector.load %arg4[%c296, %c0_120] : memref<512x1024xbf16, #tpu.memory_space<vmem>>, vector<8x1024xbf16>
    tpu.vector_store %arg4[%c296, %c0_120], %114 {strides = array<i32>} : memref<512x1024xbf16, #tpu.memory_space<vmem>>, vector<8x1024xbf16>,
    %c0_121 = arith.constant 0 : index
    %c0_122 = arith.constant 0 : index
    %c113 = arith.constant 113 : index
    %116 = vector.load %arg2[%c0_121, %c0_122, %c113] : memref<1x8x1280xbf16, #tpu.memory_space<vmem>>, vector<1x8x1024xbf16>
    %117 = vector.shape_cast %116 : vector<1x8x1024xbf16> to vector<8x1024xbf16>
    %c304 = arith.constant 304 : index
    %c0_123 = arith.constant 0 : index
    %118 = vector.load %arg4[%c304, %c0_123] : memref<512x1024xbf16, #tpu.memory_space<vmem>>, vector<8x1024xbf16>
    tpu.vector_store %arg4[%c304, %c0_123], %117 {strides = array<i32>} : memref<512x1024xbf16, #tpu.memory_space<vmem>>, vector<8x1024xbf16>,
    %c0_124 = arith.constant 0 : index
    %c0_125 = arith.constant 0 : index
    %c114 = arith.constant 114 : index
    %119 = vector.load %arg2[%c0_124, %c0_125, %c114] : memref<1x8x1280xbf16, #tpu.memory_space<vmem>>, vector<1x8x1024xbf16>
    %120 = vector.shape_cast %119 : vector<1x8x1024xbf16> to vector<8x1024xbf16>
    %c312 = arith.constant 312 : index
    %c0_126 = arith.constant 0 : index
    %121 = vector.load %arg4[%c312, %c0_126] : memref<512x1024xbf16, #tpu.memory_space<vmem>>, vector<8x1024xbf16>
    tpu.vector_store %arg4[%c312, %c0_126], %120 {strides = array<i32>} : memref<512x1024xbf16, #tpu.memory_space<vmem>>, vector<8x1024xbf16>,
    %c0_127 = arith.constant 0 : index
    %c0_128 = arith.constant 0 : index
    %c115 = arith.constant 115 : index
    %122 = vector.load %arg2[%c0_127, %c0_128, %c115] : memref<1x8x1280xbf16, #tpu.memory_space<vmem>>, vector<1x8x1024xbf16>
    %123 = vector.shape_cast %122 : vector<1x8x1024xbf16> to vector<8x1024xbf16>
    %c320 = arith.constant 320 : index
    %c0_129 = arith.constant 0 : index
    %124 = vector.load %arg4[%c320, %c0_129] : memref<512x1024xbf16, #tpu.memory_space<vmem>>, vector<8x1024xbf16>
    tpu.vector_store %arg4[%c320, %c0_129], %123 {strides = array<i32>} : memref<512x1024xbf16, #tpu.memory_space<vmem>>, vector<8x1024xbf16>,
    %c0_130 = arith.constant 0 : index
    %c0_131 = arith.constant 0 : index
    %c116 = arith.constant 116 : index
    %125 = vector.load %arg2[%c0_130, %c0_131, %c116] : memref<1x8x1280xbf16, #tpu.memory_space<vmem>>, vector<1x8x1024xbf16>
    %126 = vector.shape_cast %125 : vector<1x8x1024xbf16> to vector<8x1024xbf16>
    %c328 = arith.constant 328 : index
    %c0_132 = arith.constant 0 : index
    %127 = vector.load %arg4[%c328, %c0_132] : memref<512x1024xbf16, #tpu.memory_space<vmem>>, vector<8x1024xbf16>
    tpu.vector_store %arg4[%c328, %c0_132], %126 {strides = array<i32>} : memref<512x1024xbf16, #tpu.memory_space<vmem>>, vector<8x1024xbf16>,
    %c0_133 = arith.constant 0 : index
    %c0_134 = arith.constant 0 : index
    %c132 = arith.constant 132 : index
    %128 = vector.load %arg2[%c0_133, %c0_134, %c132] : memref<1x8x1280xbf16, #tpu.memory_space<vmem>>, vector<1x8x1024xbf16>
    %129 = vector.shape_cast %128 : vector<1x8x1024xbf16> to vector<8x1024xbf16>
    %c336 = arith.constant 336 : index
    %c0_135 = arith.constant 0 : index
    %130 = vector.load %arg4[%c336, %c0_135] : memref<512x1024xbf16, #tpu.memory_space<vmem>>, vector<8x1024xbf16>
    tpu.vector_store %arg4[%c336, %c0_135], %129 {strides = array<i32>} : memref<512x1024xbf16, #tpu.memory_space<vmem>>, vector<8x1024xbf16>,
    %c0_136 = arith.constant 0 : index
    %c0_137 = arith.constant 0 : index
    %c133 = arith.constant 133 : index
    %131 = vector.load %arg2[%c0_136, %c0_137, %c133] : memref<1x8x1280xbf16, #tpu.memory_space<vmem>>, vector<1x8x1024xbf16>
    %132 = vector.shape_cast %131 : vector<1x8x1024xbf16> to vector<8x1024xbf16>
    %c344 = arith.constant 344 : index
    %c0_138 = arith.constant 0 : index
    %133 = vector.load %arg4[%c344, %c0_138] : memref<512x1024xbf16, #tpu.memory_space<vmem>>, vector<8x1024xbf16>
    tpu.vector_store %arg4[%c344, %c0_138], %132 {strides = array<i32>} : memref<512x1024xbf16, #tpu.memory_space<vmem>>, vector<8x1024xbf16>,
    %c0_139 = arith.constant 0 : index
    %c0_140 = arith.constant 0 : index
    %c134 = arith.constant 134 : index
    %134 = vector.load %arg2[%c0_139, %c0_140, %c134] : memref<1x8x1280xbf16, #tpu.memory_space<vmem>>, vector<1x8x1024xbf16>
    %135 = vector.shape_cast %134 : vector<1x8x1024xbf16> to vector<8x1024xbf16>
    %c352 = arith.constant 352 : index
    %c0_141 = arith.constant 0 : index
    %136 = vector.load %arg4[%c352, %c0_141] : memref<512x1024xbf16, #tpu.memory_space<vmem>>, vector<8x1024xbf16>
    tpu.vector_store %arg4[%c352, %c0_141], %135 {strides = array<i32>} : memref<512x1024xbf16, #tpu.memory_space<vmem>>, vector<8x1024xbf16>,
    %c0_142 = arith.constant 0 : index
    %c0_143 = arith.constant 0 : index
    %c135 = arith.constant 135 : index
    %137 = vector.load %arg2[%c0_142, %c0_143, %c135] : memref<1x8x1280xbf16, #tpu.memory_space<vmem>>, vector<1x8x1024xbf16>
    %138 = vector.shape_cast %137 : vector<1x8x1024xbf16> to vector<8x1024xbf16>
    %c360 = arith.constant 360 : index
    %c0_144 = arith.constant 0 : index
    %139 = vector.load %arg4[%c360, %c0_144] : memref<512x1024xbf16, #tpu.memory_space<vmem>>, vector<8x1024xbf16>
    tpu.vector_store %arg4[%c360, %c0_144], %138 {strides = array<i32>} : memref<512x1024xbf16, #tpu.memory_space<vmem>>, vector<8x1024xbf16>,
    %c0_145 = arith.constant 0 : index
    %c0_146 = arith.constant 0 : index
    %c136_147 = arith.constant 136 : index
    %140 = vector.load %arg2[%c0_145, %c0_146, %c136_147] : memref<1x8x1280xbf16, #tpu.memory_space<vmem>>, vector<1x8x1024xbf16>
    %141 = vector.shape_cast %140 : vector<1x8x1024xbf16> to vector<8x1024xbf16>
    %c368 = arith.constant 368 : index
    %c0_148 = arith.constant 0 : index
    %142 = vector.load %arg4[%c368, %c0_148] : memref<512x1024xbf16, #tpu.memory_space<vmem>>, vector<8x1024xbf16>
    tpu.vector_store %arg4[%c368, %c0_148], %141 {strides = array<i32>} : memref<512x1024xbf16, #tpu.memory_space<vmem>>, vector<8x1024xbf16>,
    %c0_149 = arith.constant 0 : index
    %c0_150 = arith.constant 0 : index
    %c137 = arith.constant 137 : index
    %143 = vector.load %arg2[%c0_149, %c0_150, %c137] : memref<1x8x1280xbf16, #tpu.memory_space<vmem>>, vector<1x8x1024xbf16>
    %144 = vector.shape_cast %143 : vector<1x8x1024xbf16> to vector<8x1024xbf16>
    %c376 = arith.constant 376 : index
    %c0_151 = arith.constant 0 : index
    %145 = vector.load %arg4[%c376, %c0_151] : memref<512x1024xbf16, #tpu.memory_space<vmem>>, vector<8x1024xbf16>
    tpu.vector_store %arg4[%c376, %c0_151], %144 {strides = array<i32>} : memref<512x1024xbf16, #tpu.memory_space<vmem>>, vector<8x1024xbf16>,
    %c0_152 = arith.constant 0 : index
    %c0_153 = arith.constant 0 : index
    %c138 = arith.constant 138 : index
    %146 = vector.load %arg2[%c0_152, %c0_153, %c138] : memref<1x8x1280xbf16, #tpu.memory_space<vmem>>, vector<1x8x1024xbf16>
    %147 = vector.shape_cast %146 : vector<1x8x1024xbf16> to vector<8x1024xbf16>
    %c384 = arith.constant 384 : index
    %c0_154 = arith.constant 0 : index
    %148 = vector.load %arg4[%c384, %c0_154] : memref<512x1024xbf16, #tpu.memory_space<vmem>>, vector<8x1024xbf16>
    tpu.vector_store %arg4[%c384, %c0_154], %147 {strides = array<i32>} : memref<512x1024xbf16, #tpu.memory_space<vmem>>, vector<8x1024xbf16>,
    %c0_155 = arith.constant 0 : index
    %c0_156 = arith.constant 0 : index
    %c0_157 = arith.constant 0 : index
    %149 = vector.load %arg1[%c0_155, %c0_156, %c0_157] : memref<1x8x512xbf16, #tpu.memory_space<vmem>>, vector<1x8x512xbf16>
    %150 = vector.shape_cast %149 : vector<1x8x512xbf16> to vector<8x512xbf16>
    %c0_158 = arith.constant 0 : index
    %c0_159 = arith.constant 0 : index
    %151 = vector.load %arg4[%c0_158, %c0_159] : memref<512x1024xbf16, #tpu.memory_space<vmem>>, vector<512x1024xbf16>
    %cst_160 = arith.constant dense<0.000000e+00> : vector<8x1024xf32>
    %152 = tpu.matmul %150, %151, %cst_160 {dimension_numbers = #tpu.dot_dimension_numbers<[1], [0], [0], [1], [0, 0, 1, 1], [], []>} : vector<8x512xbf16>, vector<512x1024xbf16>, vector<8x1024xf32> -> vector<8x1024xf32>
    %c0_161 = arith.constant 0 : index
    %c0_162 = arith.constant 0 : index
    %c0_163 = arith.constant 0 : index
    %153 = vector.load %arg3[%c0_161, %c0_162, %c0_163] : memref<1x8x1024xf32, #tpu.memory_space<vmem>>, vector<1x8x1024xf32>
    %154 = vector.shape_cast %153 : vector<1x8x1024xf32> to vector<8x1024xf32>
    %155 = vector.shape_cast %152 : vector<8x1024xf32> to vector<1x8x1024xf32>
    tpu.vector_store %arg3[%c0_161, %c0_162, %c0_163], %155 {strides = array<i32>} : memref<1x8x1024xf32, #tpu.memory_space<vmem>>, vector<1x8x1024xf32>,
    return
  }
  func.func @transform_0(%arg0: i32) -> (i32, i32, i32) {
    %c0_i32 = arith.constant 0 : i32
    %c0_i32_0 = arith.constant 0 : i32
    %c0_i32_1 = arith.constant 0 : i32
    return %arg0, %c0_i32, %c0_i32_0 : i32, i32, i32
  }
  func.func @transform_1(%arg0: i32) -> (i32, i32, i32) {
    %c0_i32 = arith.constant 0 : i32
    %c0_i32_0 = arith.constant 0 : i32
    %c0_i32_1 = arith.constant 0 : i32
    return %arg0, %c0_i32, %c0_i32_0 : i32, i32, i32
  }
  func.func @transform_2(%arg0: i32) -> (i32, i32, i32) {
    %c0_i32 = arith.constant 0 : i32
    %c0_i32_0 = arith.constant 0 : i32
    %c0_i32_1 = arith.constant 0 : i32
    return %arg0, %c0_i32, %c0_i32_0 : i32, i32, i32
  }
}

</mosaic_0001>

<llo_original>
// kernel: ses_conv_h_h_forward.1
$region0: #{ses_conv_h_h_forward.1}
  #allocation0 [shape = 'u32[]', space=smem, size = 0x4, offset = 0x4, fixed_abs, tag = 'smem constant byte address 0x4 - core index']
  #allocation1 [shape = 'u32[72,128]{1,0:T(1,128)}', space=vmem, size = 0x9000, scoped, tag = 'internal scratch']
  #allocation2 [shape = 'bf16[512,1024]{1,0:T(8,128)(2,1)}', space=vmem, size = 0x100000, scoped, tag = 'scratch operand']
  %s0 = inlined_call_operand.vmem [shape: bf16[3,8,512], index: 0, kind: input, shape index: {}]
  %s1 = inlined_call_operand.vmem [shape: bf16[3,8,1280], index: 1, kind: input, shape index: {}]
  %s2 = inlined_call_operand.vmem [shape: f32[3,8,1024], index: 2, kind: output, shape index: {}]
  %s3 = sld [smem:[#allocation0]]
  $region41: #{ses_conv_h_h_forward.1} parent=0
    _
  %s5 = ssub.s32 1, %s3
  %s6 = scalar_select 0, %s5, %s3
  loop: start=0, step=1, limit=5
  $region2: #{ses_conv_h_h_forward.1} parent=0 // loop_pre_header
    _
  $region3: #{ses_conv_h_h_forward.1} parent=0 // loop_header
    %s8 = sphi 0, %s12
    %p9 = scmp.ge.s32.totalorder %s8, 5
    %s18 = sphi 0, %s20
    %s21 = sphi 0, %s18
    %s22 = sphi 0, %s21
    %s38 = sphi 0, %s22
    %s44 = sphi 0, %s46
    %s47 = sphi 0, %s44
    %s48 = sphi 0, %s47
    %s64 = sphi 0, %s48
    %s70 = sphi 0, %s72
    %s73 = sphi 0, %s70
    %s74 = sphi 0, %s73
    %s90 = sphi 0, %s74
  $region4: #{ses_conv_h_h_forward.1} parent=0 // loop_header_branch
    %11 = sbr.rel (%p9) target = $region8
  $region5: #{ses_conv_h_h_forward.1} parent=0 // loop_body
    %s13 = ssub.s32 %s8, 1
    %s14 = ssub.s32 %s8, 2
    %s15 = sadd.s32 %s8, 1
    %s16 = ssub.s32 %s8, %s15
    %p17 = scmp.eq.s32.totalorder %s16, 0
    %s19 = sadd.s32 %s18, 1
    %s20 = scalar_select %p17, %s18, %s19
    %p23 = pneg %p17
    %p24 = scmp.eq.s32.totalorder %s8, 2
    %p25 = por %p23, %p24
    %p26 = scmp.ne.s32.totalorder %s18, %s21
    %p27 = scmp.eq.s32.totalorder %s8, 0
    %p28 = por %p26, %p27
    %p29 = scmp.ne.s32.totalorder %s18, %s21
    %p30 = scmp.eq.s32.totalorder %s13, 2
    %p31 = por %p29, %p30
    %p32 = scmp.ne.s32.totalorder %s21, %s22
    %p33 = scmp.eq.s32.totalorder %s13, 0
    %p34 = por %p32, %p33
    %p35 = scmp.ne.s32.totalorder %s21, %s22
    %p36 = scmp.eq.s32.totalorder %s14, 2
    %p37 = por %p35, %p36
    %p39 = scmp.ne.s32.totalorder %s22, %s38
    %p40 = scmp.eq.s32.totalorder %s14, 0
    %p41 = por %p39, %p40
    %s42 = ssub.s32 %s8, %s15
    %p43 = scmp.eq.s32.totalorder %s42, 0
    %s45 = sadd.s32 %s44, 1
    %s46 = scalar_select %p43, %s44, %s45
    %p49 = pneg %p43
    %p50 = scmp.eq.s32.totalorder %s8, 2
    %p51 = por %p49, %p50
    %p52 = scmp.ne.s32.totalorder %s44, %s47
    %p53 = scmp.eq.s32.totalorder %s8, 0
    %p54 = por %p52, %p53
    %p55 = scmp.ne.s32.totalorder %s44, %s47
    %p56 = scmp.eq.s32.totalorder %s13, 2
    %p57 = por %p55, %p56
    %p58 = scmp.ne.s32.totalorder %s47, %s48
    %p59 = scmp.eq.s32.totalorder %s13, 0
    %p60 = por %p58, %p59
    %p61 = scmp.ne.s32.totalorder %s47, %s48
    %p62 = scmp.eq.s32.totalorder %s14, 2
    %p63 = por %p61, %p62
    %p65 = scmp.ne.s32.totalorder %s48, %s64
    %p66 = scmp.eq.s32.totalorder %s14, 0
    %p67 = por %p65, %p66
    %s68 = ssub.s32 %s8, %s15
    %p69 = scmp.eq.s32.totalorder %s68, 0
    %s71 = sadd.s32 %s70, 1
    %s72 = scalar_select %p69, %s70, %s71
    %p75 = pneg %p69
    %p76 = scmp.eq.s32.totalorder %s8, 2
    %p77 = por %p75, %p76
    %p78 = scmp.ne.s32.totalorder %s70, %s73
    %p79 = scmp.eq.s32.totalorder %s8, 0
    %p80 = por %p78, %p79
    %p81 = scmp.ne.s32.totalorder %s70, %s73
    %p82 = scmp.eq.s32.totalorder %s13, 2
    %p83 = por %p81, %p82
    %p84 = scmp.ne.s32.totalorder %s73, %s74
    %p85 = scmp.eq.s32.totalorder %s13, 0
    %p86 = por %p84, %p85
    %p87 = scmp.ne.s32.totalorder %s73, %s74
    %p88 = scmp.eq.s32.totalorder %s14, 2
    %p89 = por %p87, %p88
    %p91 = scmp.ne.s32.totalorder %s74, %s90
    %p92 = scmp.eq.s32.totalorder %s14, 0
    %p93 = por %p91, %p92
    %p94 = scmp.le.s32.totalorder 1, %s8
    %p95 = scmp.lt.s32.totalorder %s8, 4
    %p96 = pnand %p94, %p95
    %p97 = pneg %p96
    // Predicated region
    $region9: #{ses_conv_h_h_forward.1} parent=5 // pred_check
      _
    $region10: #{ses_conv_h_h_forward.1} parent=5 // pred_check_branch
      %99 = sbr.rel (%p96) target = $region12
    $region11: #{ses_conv_h_h_forward.1} parent=5 // pred_region
      %s100 = ssub.s32 %s8, 1
    $region12: #{ses_conv_h_h_forward.1} parent=5 // pred_fallthru
      _
    %p101 = scmp.lt.s32.totalorder %s8, 3
    // Predicated region
    $region13: #{ses_conv_h_h_forward.1} parent=5 // pred_check
      %p102 = pneg %p101
    $region14: #{ses_conv_h_h_forward.1} parent=5 // pred_check_branch
      %104 = sbr.rel (%p102) target = $region16
    $region15: #{ses_conv_h_h_forward.1} parent=5 // pred_region
      // Predicated region
      $region17: #{ses_conv_h_h_forward.1} parent=15 // pred_check
        %p105 = pneg %p28
      $region18: #{ses_conv_h_h_forward.1} parent=15 // pred_check_branch
        %107 = sbr.rel (%p105) target = $region20
      $region19: #{ses_conv_h_h_forward.1} parent=15 // pred_region
        %p108 = scmp.lt.s32.totalorder %s8, 2
        %s109 = scalar_select %p108, %s8, 2
        %s110 = smul.addr %s109, 4
        %s111 = smul.addr %s110, 4
        %s112 = scalar_lea.vmem %s0, %s111
      $region20: #{ses_conv_h_h_forward.1} parent=15 // pred_fallthru
        _
      // Predicated region
      $region21: #{ses_conv_h_h_forward.1} parent=15 // pred_check
        %p113 = pneg %p54
      $region22: #{ses_conv_h_h_forward.1} parent=15 // pred_check_branch
        %115 = sbr.rel (%p113) target = $region24
      $region23: #{ses_conv_h_h_forward.1} parent=15 // pred_region
        %p116 = scmp.lt.s32.totalorder %s8, 2
        %s117 = scalar_select %p116, %s8, 2
        %s118 = smul.addr %s117, 10
        %s119 = smul.addr %s118, 4
        %s120 = scalar_lea.vmem %s1, %s119
      $region24: #{ses_conv_h_h_forward.1} parent=15 // pred_fallthru
        _
    $region16: #{ses_conv_h_h_forward.1} parent=5 // pred_fallthru
      _
    %p121 = scmp.le.s32.totalorder 1, %s8
    %p122 = scmp.lt.s32.totalorder %s8, 4
    %p123 = pnand %p121, %p122
    %p124 = pneg %p123
    // Predicated region
    $region25: #{ses_conv_h_h_forward.1} parent=5 // pred_check
      _
    $region26: #{ses_conv_h_h_forward.1} parent=5 // pred_check_branch
      %126 = sbr.rel (%p123) target = $region28
    $region27: #{ses_conv_h_h_forward.1} parent=5 // pred_region
      %s127 = ssub.s32 %s8, 1
      %p128 = scmp.lt.s32.totalorder %s13, 2
      %s129 = scalar_select %p128, %s13, 2
      %s130 = smul.addr %s129, 4
      %s131 = smul.addr %s130, 4
      %s132 = scalar_lea.vmem %s0, %s131
      %p133 = pneg %p34
      %p134 = pneg %p31
      %p135 = scmp.lt.s32.totalorder %s13, 2
      %s136 = scalar_select %p135, %s13, 2
      %s137 = smul.addr %s136, 10
      %s138 = smul.addr %s137, 4
      %s139 = scalar_lea.vmem %s1, %s138
      %p140 = pneg %p60
      %p141 = pneg %p57
      %p142 = pneg %p86
      %p143 = pneg %p83
      %p144 = scmp.lt.s32.totalorder %s13, 2
      %s145 = scalar_select %p144, %s13, 2
      %s146 = smul.addr %s145, 8
      %s147 = smul.addr %s146, 8
      %s148 = scalar_lea.vmem %s2, %s147
      %p149 = scmp.lt.s32.totalorder %s13, 2
      %s150 = scalar_select %p149, %s13, 2
      %s151 = smul.addr %s150, 4
      %s152 = smul.addr %s151, 4
      %s153 = scalar_lea.vmem %s0, %s152
      %p154 = scmp.lt.s32.totalorder %s13, 2
      %s155 = scalar_select %p154, %s13, 2
      %s156 = smul.addr %s155, 10
      %s157 = smul.addr %s156, 4
      %s158 = scalar_lea.vmem %s1, %s157
      %p159 = scmp.lt.s32.totalorder %s13, 2
      %s160 = scalar_select %p159, %s13, 2
      %s161 = smul.addr %s160, 8
      %s162 = smul.addr %s161, 8
      %s163 = scalar_lea.vmem %s2, %s162
      %165 = vst [vmem:[#allocation2 + $0x620] sm:$0xff] 0
      %166 = vst [vmem:[#allocation2 + $0x628] sm:$0xff] 0
      %167 = vst [vmem:[#allocation2 + $0x630] sm:$0xff] 0
      %168 = vst [vmem:[#allocation2 + $0x638] sm:$0xff] 0
      %169 = vst [vmem:[#allocation2 + $0x640] sm:$0xff] 0
      %170 = vst [vmem:[#allocation2 + $0x648] sm:$0xff] 0
      %171 = vst [vmem:[#allocation2 + $0x650] sm:$0xff] 0
      %172 = vst [vmem:[#allocation2 + $0x658] sm:$0xff] 0
      %173 = vst [vmem:[#allocation2 + $0x660] sm:$0xff] 0
      %174 = vst [vmem:[#allocation2 + $0x668] sm:$0xff] 0
      %175 = vst [vmem:[#allocation2 + $0x670] sm:$0xff] 0
      %176 = vst [vmem:[#allocation2 + $0x678] sm:$0xff] 0
      %177 = vst [vmem:[#allocation2 + $0x680] sm:$0xff] 0
      %178 = vst [vmem:[#allocation2 + $0x688] sm:$0xff] 0
      %179 = vst [vmem:[#allocation2 + $0x690] sm:$0xff] 0
      %180 = vst [vmem:[#allocation2 + $0x698] sm:$0xff] 0
      %181 = vst [vmem:[#allocation2 + $0x6a0] sm:$0xff] 0
      %182 = vst [vmem:[#allocation2 + $0x6a8] sm:$0xff] 0
      %183 = vst [vmem:[#allocation2 + $0x6b0] sm:$0xff] 0
      %184 = vst [vmem:[#allocation2 + $0x6b8] sm:$0xff] 0
      %185 = vst [vmem:[#allocation2 + $0x6c0] sm:$0xff] 0
      %186 = vst [vmem:[#allocation2 + $0x6c8] sm:$0xff] 0
      %187 = vst [vmem:[#allocation2 + $0x6d0] sm:$0xff] 0
      %188 = vst [vmem:[#allocation2 + $0x6d8] sm:$0xff] 0
      %189 = vst [vmem:[#allocation2 + $0x6e0] sm:$0xff] 0
      %190 = vst [vmem:[#allocation2 + $0x6e8] sm:$0xff] 0
      %191 = vst [vmem:[#allocation2 + $0x6f0] sm:$0xff] 0
      %192 = vst [vmem:[#allocation2 + $0x6f8] sm:$0xff] 0
      %193 = vst [vmem:[#allocation2 + $0x700] sm:$0xff] 0
      %194 = vst [vmem:[#allocation2 + $0x708] sm:$0xff] 0
      %195 = vst [vmem:[#allocation2 + $0x710] sm:$0xff] 0
      %196 = vst [vmem:[#allocation2 + $0x718] sm:$0xff] 0
      %197 = vst [vmem:[#allocation2 + $0x720] sm:$0xff] 0
      %198 = vst [vmem:[#allocation2 + $0x728] sm:$0xff] 0
      %199 = vst [vmem:[#allocation2 + $0x730] sm:$0xff] 0
      %200 = vst [vmem:[#allocation2 + $0x738] sm:$0xff] 0
      %201 = vst [vmem:[#allocation2 + $0x740] sm:$0xff] 0
      %202 = vst [vmem:[#allocation2 + $0x748] sm:$0xff] 0
      %203 = vst [vmem:[#allocation2 + $0x750] sm:$0xff] 0
      %204 = vst [vmem:[#allocation2 + $0x758] sm:$0xff] 0
      %205 = vst [vmem:[#allocation2 + $0x760] sm:$0xff] 0
      %206 = vst [vmem:[#allocation2 + $0x768] sm:$0xff] 0
      %207 = vst [vmem:[#allocation2 + $0x770] sm:$0xff] 0
      %208 = vst [vmem:[#allocation2 + $0x778] sm:$0xff] 0
      %209 = vst [vmem:[#allocation2 + $0x780] sm:$0xff] 0
      %210 = vst [vmem:[#allocation2 + $0x788] sm:$0xff] 0
      %211 = vst [vmem:[#allocation2 + $0x790] sm:$0xff] 0
      %212 = vst [vmem:[#allocation2 + $0x798] sm:$0xff] 0
      %213 = vst [vmem:[#allocation2 + $0x7a0] sm:$0xff] 0
      %214 = vst [vmem:[#allocation2 + $0x7a8] sm:$0xff] 0
      %215 = vst [vmem:[#allocation2 + $0x7b0] sm:$0xff] 0
      %216 = vst [vmem:[#allocation2 + $0x7b8] sm:$0xff] 0
      %217 = vst [vmem:[#allocation2 + $0x7c0] sm:$0xff] 0
      %218 = vst [vmem:[#allocation2 + $0x7c8] sm:$0xff] 0
      %219 = vst [vmem:[#allocation2 + $0x7d0] sm:$0xff] 0
      %220 = vst [vmem:[#allocation2 + $0x7d8] sm:$0xff] 0
      %221 = vst [vmem:[#allocation2 + $0x7e0] sm:$0xff] 0
      %222 = vst [vmem:[#allocation2 + $0x7e8] sm:$0xff] 0
      %223 = vst [vmem:[#allocation2 + $0x7f0] sm:$0xff] 0
      %224 = vst [vmem:[#allocation2 + $0x7f8] sm:$0xff] 0
      %v225 = vld [vmem:[%s158] sm:$0xff]
      %v226 = vld [vmem:[%s158 + $0x8] sm:$0xff]
      %v227 = vld [vmem:[%s158 + $0x10] sm:$0xff]
      %v228 = vld [vmem:[%s158 + $0x18] sm:$0xff]
      %229 = vst [vmem:[#allocation2] sm:$0xff] %v225
      %230 = vst [vmem:[#allocation2 + $0x8] sm:$0xff] %v226
      %231 = vst [vmem:[#allocation2 + $0x10] sm:$0xff] %v227
      %232 = vst [vmem:[#allocation2 + $0x18] sm:$0xff] %v228
      %v233 = vld [vmem:[%s158] sm:$0xff]
      %v234 = vld [vmem:[%s158 + $0x8] sm:$0xff]
      %v235 = vld [vmem:[%s158 + $0x10] sm:$0xff]
      %v236 = vld [vmem:[%s158 + $0x18] sm:$0xff]
      %v237 = vld [vmem:[%s158 + $0x20] sm:$0xf]
      %243 = vrot.lane.b32.xlu0 %v233, 127
      %v244 = vpop.permute.xlu0 %243
      %245 = vrot.lane.b32.xlu0 %v234, 127
      %v246 = vpop.permute.xlu0 %245
      %247 = vrot.lane.b32.xlu0 %v235, 127
      %v248 = vpop.permute.xlu0 %247
      %249 = vrot.lane.b32.xlu0 %v236, 127
      %v250 = vpop.permute.xlu0 %249
      %251 = vrot.lane.b32.xlu0 %v237, 127
      %v252 = vpop.permute.xlu0 %251
      %v253 = vrot.slane %v244, 4
      %v254 = vrot.slane %v246, 4
      %v255 = vrot.slane %v248, 4
      %v256 = vrot.slane %v250, 4
      %v257 = vrot.slane %v252, 4
      %vm258 = vcmask 1043456
      %v259 = vsel %vm258, %v253, %v254
      %vm260 = vcmask 1039360
      %v261 = vsel %vm260, %v244, %v259
      %v262 = vsel %vm258, %v254, %v255
      %v263 = vsel %vm260, %v246, %v262
      %v264 = vsel %vm258, %v255, %v256
      %v265 = vsel %vm260, %v248, %v264
      %v266 = vsel %vm258, %v256, %v257
      %v267 = vsel %vm260, %v250, %v266
      %272 = vst [vmem:[#allocation2 + $0x20] sm:$0xff] %v261
      %273 = vst [vmem:[#allocation2 + $0x28] sm:$0xff] %v263
      %274 = vst [vmem:[#allocation2 + $0x30] sm:$0xff] %v265
      %275 = vst [vmem:[#allocation2 + $0x38] sm:$0xff] %v267
      %v276 = vld [vmem:[%s158] sm:$0xff]
      %v277 = vld [vmem:[%s158 + $0x8] sm:$0xff]
      %v278 = vld [vmem:[%s158 + $0x10] sm:$0xff]
      %v279 = vld [vmem:[%s158 + $0x18] sm:$0xff]
      %v280 = vld [vmem:[%s158 + $0x20] sm:$0xf]
      %286 = vrot.lane.b32.xlu0 %v276, 126
      %v287 = vpop.permute.xlu0 %286
      %288 = vrot.lane.b32.xlu0 %v277, 126
      %v289 = vpop.permute.xlu0 %288
      %290 = vrot.lane.b32.xlu0 %v278, 126
      %v291 = vpop.permute.xlu0 %290
      %292 = vrot.lane.b32.xlu0 %v279, 126
      %v293 = vpop.permute.xlu0 %292
      %294 = vrot.lane.b32.xlu0 %v280, 126
      %v295 = vpop.permute.xlu0 %294
      %v296 = vrot.slane %v287, 4
      %v297 = vrot.slane %v289, 4
      %v298 = vrot.slane %v291, 4
      %v299 = vrot.slane %v293, 4
      %v300 = vrot.slane %v295, 4
      %v301 = vsel %vm258, %v296, %v297
      %vm302 = vcmask 1031168
      %v303 = vsel %vm302, %v287, %v301
      %v304 = vsel %vm258, %v297, %v298
      %v305 = vsel %vm302, %v289, %v304
      %v306 = vsel %vm258, %v298, %v299
      %v307 = vsel %vm302, %v291, %v306
      %v308 = vsel %vm258, %v299, %v300
      %v309 = vsel %vm302, %v293, %v308
      %314 = vst [vmem:[#allocation2 + $0x40] sm:$0xff] %v303
      %315 = vst [vmem:[#allocation2 + $0x48] sm:$0xff] %v305
      %316 = vst [vmem:[#allocation2 + $0x50] sm:$0xff] %v307
      %317 = vst [vmem:[#allocation2 + $0x58] sm:$0xff] %v309
      %v318 = vld [vmem:[%s158] sm:$0xff]
      %v319 = vld [vmem:[%s158 + $0x8] sm:$0xff]
      %v320 = vld [vmem:[%s158 + $0x10] sm:$0xff]
      %v321 = vld [vmem:[%s158 + $0x18] sm:$0xff]
      %v322 = vld [vmem:[%s158 + $0x20] sm:$0xf]
      %328 = vrot.lane.b32.xlu0 %v318, 125
      %v329 = vpop.permute.xlu0 %328
      %330 = vrot.lane.b32.xlu0 %v319, 125
      %v331 = vpop.permute.xlu0 %330
      %332 = vrot.lane.b32.xlu0 %v320, 125
      %v333 = vpop.permute.xlu0 %332
      %334 = vrot.lane.b32.xlu0 %v321, 125
      %v335 = vpop.permute.xlu0 %334
      %336 = vrot.lane.b32.xlu0 %v322, 125
      %v337 = vpop.permute.xlu0 %336
      %v338 = vrot.slane %v329, 4
      %v339 = vrot.slane %v331, 4
      %v340 = vrot.slane %v333, 4
      %v341 = vrot.slane %v335, 4
      %v342 = vrot.slane %v337, 4
      %v343 = vsel %vm258, %v338, %v339
      %vm344 = vcmask 1022976
      %v345 = vsel %vm344, %v329, %v343
      %v346 = vsel %vm258, %v339, %v340
      %v347 = vsel %vm344, %v331, %v346
      %v348 = vsel %vm258, %v340, %v341
      %v349 = vsel %vm344, %v333, %v348
      %v350 = vsel %vm258, %v341, %v342
      %v351 = vsel %vm344, %v335, %v350
      %356 = vst [vmem:[#allocation2 + $0x60] sm:$0xff] %v345
      %357 = vst [vmem:[#allocation2 + $0x68] sm:$0xff] %v347
      %358 = vst [vmem:[#allocation2 + $0x70] sm:$0xff] %v349
      %359 = vst [vmem:[#allocation2 + $0x78] sm:$0xff] %v351
      %v360 = vld [vmem:[%s158] sm:$0xff]
      %v361 = vld [vmem:[%s158 + $0x8] sm:$0xff]
      %v362 = vld [vmem:[%s158 + $0x10] sm:$0xff]
      %v363 = vld [vmem:[%s158 + $0x18] sm:$0xff]
      %v364 = vld [vmem:[%s158 + $0x20] sm:$0xf]
      %370 = vrot.lane.b32.xlu0 %v360, 124
      %v371 = vpop.permute.xlu0 %370
      %372 = vrot.lane.b32.xlu0 %v361, 124
      %v373 = vpop.permute.xlu0 %372
      %374 = vrot.lane.b32.xlu0 %v362, 124
      %v375 = vpop.permute.xlu0 %374
      %376 = vrot.lane.b32.xlu0 %v363, 124
      %v377 = vpop.permute.xlu0 %376
      %378 = vrot.lane.b32.xlu0 %v364, 124
      %v379 = vpop.permute.xlu0 %378
      %v380 = vrot.slane %v371, 4
      %v381 = vrot.slane %v373, 4
      %v382 = vrot.slane %v375, 4
      %v383 = vrot.slane %v377, 4
      %v384 = vrot.slane %v379, 4
      %v385 = vsel %vm258, %v380, %v381
      %vm386 = vcmask 1014784
      %v387 = vsel %vm386, %v371, %v385
      %v388 = vsel %vm258, %v381, %v382
      %v389 = vsel %vm386, %v373, %v388
      %v390 = vsel %vm258, %v382, %v383
      %v391 = vsel %vm386, %v375, %v390
      %v392 = vsel %vm258, %v383, %v384
      %v393 = vsel %vm386, %v377, %v392
      %398 = vst [vmem:[#allocation2 + $0x80] sm:$0xff] %v387
      %399 = vst [vmem:[#allocation2 + $0x88] sm:$0xff] %v389
      %400 = vst [vmem:[#allocation2 + $0x90] sm:$0xff] %v391
      %401 = vst [vmem:[#allocation2 + $0x98] sm:$0xff] %v393
      %v402 = vld [vmem:[%s158] sm:$0xff]
      %v403 = vld [vmem:[%s158 + $0x8] sm:$0xff]
      %v404 = vld [vmem:[%s158 + $0x10] sm:$0xff]
      %v405 = vld [vmem:[%s158 + $0x18] sm:$0xff]
      %v406 = vld [vmem:[%s158 + $0x20] sm:$0xf]
      %412 = vrot.lane.b32.xlu0 %v402, 123
      %v413 = vpop.permute.xlu0 %412
      %414 = vrot.lane.b32.xlu0 %v403, 123
      %v415 = vpop.permute.xlu0 %414
      %416 = vrot.lane.b32.xlu0 %v404, 123
      %v417 = vpop.permute.xlu0 %416
      %418 = vrot.lane.b32.xlu0 %v405, 123
      %v419 = vpop.permute.xlu0 %418
      %420 = vrot.lane.b32.xlu0 %v406, 123
      %v421 = vpop.permute.xlu0 %420
      %v422 = vrot.slane %v413, 4
      %v423 = vrot.slane %v415, 4
      %v424 = vrot.slane %v417, 4
      %v425 = vrot.slane %v419, 4
      %v426 = vrot.slane %v421, 4
      %v427 = vsel %vm258, %v422, %v423
      %vm428 = vcmask 1006592
      %v429 = vsel %vm428, %v413, %v427
      %v430 = vsel %vm258, %v423, %v424
      %v431 = vsel %vm428, %v415, %v430
      %v432 = vsel %vm258, %v424, %v425
      %v433 = vsel %vm428, %v417, %v432
      %v434 = vsel %vm258, %v425, %v426
      %v435 = vsel %vm428, %v419, %v434
      %440 = vst [vmem:[#allocation2 + $0xa0] sm:$0xff] %v429
      %441 = vst [vmem:[#allocation2 + $0xa8] sm:$0xff] %v431
      %442 = vst [vmem:[#allocation2 + $0xb0] sm:$0xff] %v433
      %443 = vst [vmem:[#allocation2 + $0xb8] sm:$0xff] %v435
      %v444 = vld [vmem:[%s158] sm:$0xff]
      %v445 = vld [vmem:[%s158 + $0x8] sm:$0xff]
      %v446 = vld [vmem:[%s158 + $0x10] sm:$0xff]
      %v447 = vld [vmem:[%s158 + $0x18] sm:$0xff]
      %v448 = vld [vmem:[%s158 + $0x20] sm:$0xf]
      %454 = vrot.lane.b32.xlu0 %v444, 122
      %v455 = vpop.permute.xlu0 %454
      %456 = vrot.lane.b32.xlu0 %v445, 122
      %v457 = vpop.permute.xlu0 %456
      %458 = vrot.lane.b32.xlu0 %v446, 122
      %v459 = vpop.permute.xlu0 %458
      %460 = vrot.lane.b32.xlu0 %v447, 122
      %v461 = vpop.permute.xlu0 %460
      %462 = vrot.lane.b32.xlu0 %v448, 122
      %v463 = vpop.permute.xlu0 %462
      %v464 = vrot.slane %v455, 4
      %v465 = vrot.slane %v457, 4
      %v466 = vrot.slane %v459, 4
      %v467 = vrot.slane %v461, 4
      %v468 = vrot.slane %v463, 4
      %v469 = vsel %vm258, %v464, %v465
      %vm470 = vcmask 998400
      %v471 = vsel %vm470, %v455, %v469
      %v472 = vsel %vm258, %v465, %v466
      %v473 = vsel %vm470, %v457, %v472
      %v474 = vsel %vm258, %v466, %v467
      %v475 = vsel %vm470, %v459, %v474
      %v476 = vsel %vm258, %v467, %v468
      %v477 = vsel %vm470, %v461, %v476
      %482 = vst [vmem:[#allocation2 + $0xc0] sm:$0xff] %v471
      %483 = vst [vmem:[#allocation2 + $0xc8] sm:$0xff] %v473
      %484 = vst [vmem:[#allocation2 + $0xd0] sm:$0xff] %v475
      %485 = vst [vmem:[#allocation2 + $0xd8] sm:$0xff] %v477
      %v486 = vld [vmem:[%s158] sm:$0xff]
      %v487 = vld [vmem:[%s158 + $0x8] sm:$0xff]
      %v488 = vld [vmem:[%s158 + $0x10] sm:$0xff]
      %v489 = vld [vmem:[%s158 + $0x18] sm:$0xff]
      %v490 = vld [vmem:[%s158 + $0x20] sm:$0xf]
      %496 = vrot.lane.b32.xlu0 %v486, 106
      %v497 = vpop.permute.xlu0 %496
      %498 = vrot.lane.b32.xlu0 %v487, 106
      %v499 = vpop.permute.xlu0 %498
      %500 = vrot.lane.b32.xlu0 %v488, 106
      %v501 = vpop.permute.xlu0 %500
      %502 = vrot.lane.b32.xlu0 %v489, 106
      %v503 = vpop.permute.xlu0 %502
      %504 = vrot.lane.b32.xlu0 %v490, 106
      %v505 = vpop.permute.xlu0 %504
      %v506 = vrot.slane %v497, 4
      %v507 = vrot.slane %v499, 4
      %v508 = vrot.slane %v501, 4
      %v509 = vrot.slane %v503, 4
      %v510 = vrot.slane %v505, 4
      %v511 = vsel %vm258, %v506, %v507
      %vm512 = vcmask 867328
      %v513 = vsel %vm512, %v497, %v511
      %v514 = vsel %vm258, %v507, %v508
      %v515 = vsel %vm512, %v499, %v514
      %v516 = vsel %vm258, %v508, %v509
      %v517 = vsel %vm512, %v501, %v516
      %v518 = vsel %vm258, %v509, %v510
      %v519 = vsel %vm512, %v503, %v518
      %524 = vst [vmem:[#allocation2 + $0xe0] sm:$0xff] %v513
      %525 = vst [vmem:[#allocation2 + $0xe8] sm:$0xff] %v515
      %526 = vst [vmem:[#allocation2 + $0xf0] sm:$0xff] %v517
      %527 = vst [vmem:[#allocation2 + $0xf8] sm:$0xff] %v519
      %v528 = vld [vmem:[%s158] sm:$0xff]
      %v529 = vld [vmem:[%s158 + $0x8] sm:$0xff]
      %v530 = vld [vmem:[%s158 + $0x10] sm:$0xff]
      %v531 = vld [vmem:[%s158 + $0x18] sm:$0xff]
      %v532 = vld [vmem:[%s158 + $0x20] sm:$0xf]
      %538 = vrot.lane.b32.xlu0 %v528, 105
      %v539 = vpop.permute.xlu0 %538
      %540 = vrot.lane.b32.xlu0 %v529, 105
      %v541 = vpop.permute.xlu0 %540
      %542 = vrot.lane.b32.xlu0 %v530, 105
      %v543 = vpop.permute.xlu0 %542
      %544 = vrot.lane.b32.xlu0 %v531, 105
      %v545 = vpop.permute.xlu0 %544
      %546 = vrot.lane.b32.xlu0 %v532, 105
      %v547 = vpop.permute.xlu0 %546
      %v548 = vrot.slane %v539, 4
      %v549 = vrot.slane %v541, 4
      %v550 = vrot.slane %v543, 4
      %v551 = vrot.slane %v545, 4
      %v552 = vrot.slane %v547, 4
      %v553 = vsel %vm258, %v548, %v549
      %vm554 = vcmask 859136
      %v555 = vsel %vm554, %v539, %v553
      %v556 = vsel %vm258, %v549, %v550
      %v557 = vsel %vm554, %v541, %v556
      %v558 = vsel %vm258, %v550, %v551
      %v559 = vsel %vm554, %v543, %v558
      %v560 = vsel %vm258, %v551, %v552
      %v561 = vsel %vm554, %v545, %v560
      %566 = vst [vmem:[#allocation2 + $0x100] sm:$0xff] %v555
      %567 = vst [vmem:[#allocation2 + $0x108] sm:$0xff] %v557
      %568 = vst [vmem:[#allocation2 + $0x110] sm:$0xff] %v559
      %569 = vst [vmem:[#allocation2 + $0x118] sm:$0xff] %v561
      %v570 = vld [vmem:[%s158] sm:$0xff]
      %v571 = vld [vmem:[%s158 + $0x8] sm:$0xff]
      %v572 = vld [vmem:[%s158 + $0x10] sm:$0xff]
      %v573 = vld [vmem:[%s158 + $0x18] sm:$0xff]
      %v574 = vld [vmem:[%s158 + $0x20] sm:$0xf]
      %580 = vrot.lane.b32.xlu0 %v570, 104
      %v581 = vpop.permute.xlu0 %580
      %582 = vrot.lane.b32.xlu0 %v571, 104
      %v583 = vpop.permute.xlu0 %582
      %584 = vrot.lane.b32.xlu0 %v572, 104
      %v585 = vpop.permute.xlu0 %584
      %586 = vrot.lane.b32.xlu0 %v573, 104
      %v587 = vpop.permute.xlu0 %586
      %588 = vrot.lane.b32.xlu0 %v574, 104
      %v589 = vpop.permute.xlu0 %588
      %v590 = vrot.slane %v581, 4
      %v591 = vrot.slane %v583, 4
      %v592 = vrot.slane %v585, 4
      %v593 = vrot.slane %v587, 4
      %v594 = vrot.slane %v589, 4
      %v595 = vsel %vm258, %v590, %v591
      %vm596 = vcmask 850944
      %v597 = vsel %vm596, %v581, %v595
      %v598 = vsel %vm258, %v591, %v592
      %v599 = vsel %vm596, %v583, %v598
      %v600 = vsel %vm258, %v592, %v593
      %v601 = vsel %vm596, %v585, %v600
      %v602 = vsel %vm258, %v593, %v594
      %v603 = vsel %vm596, %v587, %v602
      %608 = vst [vmem:[#allocation2 + $0x120] sm:$0xff] %v597
      %609 = vst [vmem:[#allocation2 + $0x128] sm:$0xff] %v599
      %610 = vst [vmem:[#allocation2 + $0x130] sm:$0xff] %v601
      %611 = vst [vmem:[#allocation2 + $0x138] sm:$0xff] %v603
      %v612 = vld [vmem:[%s158] sm:$0xff]
      %v613 = vld [vmem:[%s158 + $0x8] sm:$0xff]
      %v614 = vld [vmem:[%s158 + $0x10] sm:$0xff]
      %v615 = vld [vmem:[%s158 + $0x18] sm:$0xff]
      %v616 = vld [vmem:[%s158 + $0x20] sm:$0xf]
      %622 = vrot.lane.b32.xlu0 %v612, 103
      %v623 = vpop.permute.xlu0 %622
      %624 = vrot.lane.b32.xlu0 %v613, 103
      %v625 = vpop.permute.xlu0 %624
      %626 = vrot.lane.b32.xlu0 %v614, 103
      %v627 = vpop.permute.xlu0 %626
      %628 = vrot.lane.b32.xlu0 %v615, 103
      %v629 = vpop.permute.xlu0 %628
      %630 = vrot.lane.b32.xlu0 %v616, 103
      %v631 = vpop.permute.xlu0 %630
      %v632 = vrot.slane %v623, 4
      %v633 = vrot.slane %v625, 4
      %v634 = vrot.slane %v627, 4
      %v635 = vrot.slane %v629, 4
      %v636 = vrot.slane %v631, 4
      %v637 = vsel %vm258, %v632, %v633
      %vm638 = vcmask 842752
      %v639 = vsel %vm638, %v623, %v637
      %v640 = vsel %vm258, %v633, %v634
      %v641 = vsel %vm638, %v625, %v640
      %v642 = vsel %vm258, %v634, %v635
      %v643 = vsel %vm638, %v627, %v642
      %v644 = vsel %vm258, %v635, %v636
      %v645 = vsel %vm638, %v629, %v644
      %650 = vst [vmem:[#allocation2 + $0x140] sm:$0xff] %v639
      %651 = vst [vmem:[#allocation2 + $0x148] sm:$0xff] %v641
      %652 = vst [vmem:[#allocation2 + $0x150] sm:$0xff] %v643
      %653 = vst [vmem:[#allocation2 + $0x158] sm:$0xff] %v645
      %v654 = vld [vmem:[%s158] sm:$0xff]
      %v655 = vld [vmem:[%s158 + $0x8] sm:$0xff]
      %v656 = vld [vmem:[%s158 + $0x10] sm:$0xff]
      %v657 = vld [vmem:[%s158 + $0x18] sm:$0xff]
      %v658 = vld [vmem:[%s158 + $0x20] sm:$0xf]
      %664 = vrot.lane.b32.xlu0 %v654, 102
      %v665 = vpop.permute.xlu0 %664
      %666 = vrot.lane.b32.xlu0 %v655, 102
      %v667 = vpop.permute.xlu0 %666
      %668 = vrot.lane.b32.xlu0 %v656, 102
      %v669 = vpop.permute.xlu0 %668
      %670 = vrot.lane.b32.xlu0 %v657, 102
      %v671 = vpop.permute.xlu0 %670
      %672 = vrot.lane.b32.xlu0 %v658, 102
      %v673 = vpop.permute.xlu0 %672
      %v674 = vrot.slane %v665, 4
      %v675 = vrot.slane %v667, 4
      %v676 = vrot.slane %v669, 4
      %v677 = vrot.slane %v671, 4
      %v678 = vrot.slane %v673, 4
      %v679 = vsel %vm258, %v674, %v675
      %vm680 = vcmask 834560
      %v681 = vsel %vm680, %v665, %v679
      %v682 = vsel %vm258, %v675, %v676
      %v683 = vsel %vm680, %v667, %v682
      %v684 = vsel %vm258, %v676, %v677
      %v685 = vsel %vm680, %v669, %v684
      %v686 = vsel %vm258, %v677, %v678
      %v687 = vsel %vm680, %v671, %v686
      %692 = vst [vmem:[#allocation2 + $0x160] sm:$0xff] %v681
      %693 = vst [vmem:[#allocation2 + $0x168] sm:$0xff] %v683
      %694 = vst [vmem:[#allocation2 + $0x170] sm:$0xff] %v685
      %695 = vst [vmem:[#allocation2 + $0x178] sm:$0xff] %v687
      %v696 = vld [vmem:[%s158] sm:$0xff]
      %v697 = vld [vmem:[%s158 + $0x8] sm:$0xff]
      %v698 = vld [vmem:[%s158 + $0x10] sm:$0xff]
      %v699 = vld [vmem:[%s158 + $0x18] sm:$0xff]
      %v700 = vld [vmem:[%s158 + $0x20] sm:$0xf]
      %706 = vrot.lane.b32.xlu0 %v696, 101
      %v707 = vpop.permute.xlu0 %706
      %708 = vrot.lane.b32.xlu0 %v697, 101
      %v709 = vpop.permute.xlu0 %708
      %710 = vrot.lane.b32.xlu0 %v698, 101
      %v711 = vpop.permute.xlu0 %710
      %712 = vrot.lane.b32.xlu0 %v699, 101
      %v713 = vpop.permute.xlu0 %712
      %714 = vrot.lane.b32.xlu0 %v700, 101
      %v715 = vpop.permute.xlu0 %714
      %v716 = vrot.slane %v707, 4
      %v717 = vrot.slane %v709, 4
      %v718 = vrot.slane %v711, 4
      %v719 = vrot.slane %v713, 4
      %v720 = vrot.slane %v715, 4
      %v721 = vsel %vm258, %v716, %v717
      %vm722 = vcmask 826368
      %v723 = vsel %vm722, %v707, %v721
      %v724 = vsel %vm258, %v717, %v718
      %v725 = vsel %vm722, %v709, %v724
      %v726 = vsel %vm258, %v718, %v719
      %v727 = vsel %vm722, %v711, %v726
      %v728 = vsel %vm258, %v719, %v720
      %v729 = vsel %vm722, %v713, %v728
      %734 = vst [vmem:[#allocation2 + $0x180] sm:$0xff] %v723
      %735 = vst [vmem:[#allocation2 + $0x188] sm:$0xff] %v725
      %736 = vst [vmem:[#allocation2 + $0x190] sm:$0xff] %v727
      %737 = vst [vmem:[#allocation2 + $0x198] sm:$0xff] %v729
      %v738 = vld [vmem:[%s158] sm:$0xff]
      %v739 = vld [vmem:[%s158 + $0x8] sm:$0xff]
      %v740 = vld [vmem:[%s158 + $0x10] sm:$0xff]
      %v741 = vld [vmem:[%s158 + $0x18] sm:$0xff]
      %v742 = vld [vmem:[%s158 + $0x20] sm:$0xf]
      %748 = vrot.lane.b32.xlu0 %v738, 100
      %v749 = vpop.permute.xlu0 %748
      %750 = vrot.lane.b32.xlu0 %v739, 100
      %v751 = vpop.permute.xlu0 %750
      %752 = vrot.lane.b32.xlu0 %v740, 100
      %v753 = vpop.permute.xlu0 %752
      %754 = vrot.lane.b32.xlu0 %v741, 100
      %v755 = vpop.permute.xlu0 %754
      %756 = vrot.lane.b32.xlu0 %v742, 100
      %v757 = vpop.permute.xlu0 %756
      %v758 = vrot.slane %v749, 4
      %v759 = vrot.slane %v751, 4
      %v760 = vrot.slane %v753, 4
      %v761 = vrot.slane %v755, 4
      %v762 = vrot.slane %v757, 4
      %v763 = vsel %vm258, %v758, %v759
      %vm764 = vcmask 818176
      %v765 = vsel %vm764, %v749, %v763
      %v766 = vsel %vm258, %v759, %v760
      %v767 = vsel %vm764, %v751, %v766
      %v768 = vsel %vm258, %v760, %v761
      %v769 = vsel %vm764, %v753, %v768
      %v770 = vsel %vm258, %v761, %v762
      %v771 = vsel %vm764, %v755, %v770
      %776 = vst [vmem:[#allocation2 + $0x1a0] sm:$0xff] %v765
      %777 = vst [vmem:[#allocation2 + $0x1a8] sm:$0xff] %v767
      %778 = vst [vmem:[#allocation2 + $0x1b0] sm:$0xff] %v769
      %779 = vst [vmem:[#allocation2 + $0x1b8] sm:$0xff] %v771
      %v780 = vld [vmem:[%s158] sm:$0xff]
      %v781 = vld [vmem:[%s158 + $0x8] sm:$0xff]
      %v782 = vld [vmem:[%s158 + $0x10] sm:$0xff]
      %v783 = vld [vmem:[%s158 + $0x18] sm:$0xff]
      %v784 = vld [vmem:[%s158 + $0x20] sm:$0xf]
      %790 = vrot.lane.b32.xlu0 %v780, 84
      %v791 = vpop.permute.xlu0 %790
      %792 = vrot.lane.b32.xlu0 %v781, 84
      %v793 = vpop.permute.xlu0 %792
      %794 = vrot.lane.b32.xlu0 %v782, 84
      %v795 = vpop.permute.xlu0 %794
      %796 = vrot.lane.b32.xlu0 %v783, 84
      %v797 = vpop.permute.xlu0 %796
      %798 = vrot.lane.b32.xlu0 %v784, 84
      %v799 = vpop.permute.xlu0 %798
      %v800 = vrot.slane %v791, 4
      %v801 = vrot.slane %v793, 4
      %v802 = vrot.slane %v795, 4
      %v803 = vrot.slane %v797, 4
      %v804 = vrot.slane %v799, 4
      %v805 = vsel %vm258, %v800, %v801
      %vm806 = vcmask 687104
      %v807 = vsel %vm806, %v791, %v805
      %v808 = vsel %vm258, %v801, %v802
      %v809 = vsel %vm806, %v793, %v808
      %v810 = vsel %vm258, %v802, %v803
      %v811 = vsel %vm806, %v795, %v810
      %v812 = vsel %vm258, %v803, %v804
      %v813 = vsel %vm806, %v797, %v812
      %818 = vst [vmem:[#allocation2 + $0x1c0] sm:$0xff] %v807
      %819 = vst [vmem:[#allocation2 + $0x1c8] sm:$0xff] %v809
      %820 = vst [vmem:[#allocation2 + $0x1d0] sm:$0xff] %v811
      %821 = vst [vmem:[#allocation2 + $0x1d8] sm:$0xff] %v813
      %v822 = vld [vmem:[%s158] sm:$0xff]
      %v823 = vld [vmem:[%s158 + $0x8] sm:$0xff]
      %v824 = vld [vmem:[%s158 + $0x10] sm:$0xff]
      %v825 = vld [vmem:[%s158 + $0x18] sm:$0xff]
      %v826 = vld [vmem:[%s158 + $0x20] sm:$0xf]
      %832 = vrot.lane.b32.xlu0 %v822, 83
      %v833 = vpop.permute.xlu0 %832
      %834 = vrot.lane.b32.xlu0 %v823, 83
      %v835 = vpop.permute.xlu0 %834
      %836 = vrot.lane.b32.xlu0 %v824, 83
      %v837 = vpop.permute.xlu0 %836
      %838 = vrot.lane.b32.xlu0 %v825, 83
      %v839 = vpop.permute.xlu0 %838
      %840 = vrot.lane.b32.xlu0 %v826, 83
      %v841 = vpop.permute.xlu0 %840
      %v842 = vrot.slane %v833, 4
      %v843 = vrot.slane %v835, 4
      %v844 = vrot.slane %v837, 4
      %v845 = vrot.slane %v839, 4
      %v846 = vrot.slane %v841, 4
      %v847 = vsel %vm258, %v842, %v843
      %vm848 = vcmask 678912
      %v849 = vsel %vm848, %v833, %v847
      %v850 = vsel %vm258, %v843, %v844
      %v851 = vsel %vm848, %v835, %v850
      %v852 = vsel %vm258, %v844, %v845
      %v853 = vsel %vm848, %v837, %v852
      %v854 = vsel %vm258, %v845, %v846
      %v855 = vsel %vm848, %v839, %v854
      %860 = vst [vmem:[#allocation2 + $0x1e0] sm:$0xff] %v849
      %861 = vst [vmem:[#allocation2 + $0x1e8] sm:$0xff] %v851
      %862 = vst [vmem:[#allocation2 + $0x1f0] sm:$0xff] %v853
      %863 = vst [vmem:[#allocation2 + $0x1f8] sm:$0xff] %v855
      %v864 = vld [vmem:[%s158] sm:$0xff]
      %v865 = vld [vmem:[%s158 + $0x8] sm:$0xff]
      %v866 = vld [vmem:[%s158 + $0x10] sm:$0xff]
      %v867 = vld [vmem:[%s158 + $0x18] sm:$0xff]
      %v868 = vld [vmem:[%s158 + $0x20] sm:$0xf]
      %874 = vrot.lane.b32.xlu0 %v864, 82
      %v875 = vpop.permute.xlu0 %874
      %876 = vrot.lane.b32.xlu0 %v865, 82
      %v877 = vpop.permute.xlu0 %876
      %878 = vrot.lane.b32.xlu0 %v866, 82
      %v879 = vpop.permute.xlu0 %878
      %880 = vrot.lane.b32.xlu0 %v867, 82
      %v881 = vpop.permute.xlu0 %880
      %882 = vrot.lane.b32.xlu0 %v868, 82
      %v883 = vpop.permute.xlu0 %882
      %v884 = vrot.slane %v875, 4
      %v885 = vrot.slane %v877, 4
      %v886 = vrot.slane %v879, 4
      %v887 = vrot.slane %v881, 4
      %v888 = vrot.slane %v883, 4
      %v889 = vsel %vm258, %v884, %v885
      %vm890 = vcmask 670720
      %v891 = vsel %vm890, %v875, %v889
      %v892 = vsel %vm258, %v885, %v886
      %v893 = vsel %vm890, %v877, %v892
      %v894 = vsel %vm258, %v886, %v887
      %v895 = vsel %vm890, %v879, %v894
      %v896 = vsel %vm258, %v887, %v888
      %v897 = vsel %vm890, %v881, %v896
      %902 = vst [vmem:[#allocation2 + $0x200] sm:$0xff] %v891
      %903 = vst [vmem:[#allocation2 + $0x208] sm:$0xff] %v893
      %904 = vst [vmem:[#allocation2 + $0x210] sm:$0xff] %v895
      %905 = vst [vmem:[#allocation2 + $0x218] sm:$0xff] %v897
      %v906 = vld [vmem:[%s158] sm:$0xff]
      %v907 = vld [vmem:[%s158 + $0x8] sm:$0xff]
      %v908 = vld [vmem:[%s158 + $0x10] sm:$0xff]
      %v909 = vld [vmem:[%s158 + $0x18] sm:$0xff]
      %v910 = vld [vmem:[%s158 + $0x20] sm:$0xf]
      %916 = vrot.lane.b32.xlu0 %v906, 81
      %v917 = vpop.permute.xlu0 %916
      %918 = vrot.lane.b32.xlu0 %v907, 81
      %v919 = vpop.permute.xlu0 %918
      %920 = vrot.lane.b32.xlu0 %v908, 81
      %v921 = vpop.permute.xlu0 %920
      %922 = vrot.lane.b32.xlu0 %v909, 81
      %v923 = vpop.permute.xlu0 %922
      %924 = vrot.lane.b32.xlu0 %v910, 81
      %v925 = vpop.permute.xlu0 %924
      %v926 = vrot.slane %v917, 4
      %v927 = vrot.slane %v919, 4
      %v928 = vrot.slane %v921, 4
      %v929 = vrot.slane %v923, 4
      %v930 = vrot.slane %v925, 4
      %v931 = vsel %vm258, %v926, %v927
      %vm932 = vcmask 662528
      %v933 = vsel %vm932, %v917, %v931
      %v934 = vsel %vm258, %v927, %v928
      %v935 = vsel %vm932, %v919, %v934
      %v936 = vsel %vm258, %v928, %v929
      %v937 = vsel %vm932, %v921, %v936
      %v938 = vsel %vm258, %v929, %v930
      %v939 = vsel %vm932, %v923, %v938
      %944 = vst [vmem:[#allocation2 + $0x220] sm:$0xff] %v933
      %945 = vst [vmem:[#allocation2 + $0x228] sm:$0xff] %v935
      %946 = vst [vmem:[#allocation2 + $0x230] sm:$0xff] %v937
      %947 = vst [vmem:[#allocation2 + $0x238] sm:$0xff] %v939
      %v948 = vld [vmem:[%s158] sm:$0xff]
      %v949 = vld [vmem:[%s158 + $0x8] sm:$0xff]
      %v950 = vld [vmem:[%s158 + $0x10] sm:$0xff]
      %v951 = vld [vmem:[%s158 + $0x18] sm:$0xff]
      %v952 = vld [vmem:[%s158 + $0x20] sm:$0xf]
      %958 = vrot.lane.b32.xlu0 %v948, 80
      %v959 = vpop.permute.xlu0 %958
      %960 = vrot.lane.b32.xlu0 %v949, 80
      %v961 = vpop.permute.xlu0 %960
      %962 = vrot.lane.b32.xlu0 %v950, 80
      %v963 = vpop.permute.xlu0 %962
      %964 = vrot.lane.b32.xlu0 %v951, 80
      %v965 = vpop.permute.xlu0 %964
      %966 = vrot.lane.b32.xlu0 %v952, 80
      %v967 = vpop.permute.xlu0 %966
      %v968 = vrot.slane %v959, 4
      %v969 = vrot.slane %v961, 4
      %v970 = vrot.slane %v963, 4
      %v971 = vrot.slane %v965, 4
      %v972 = vrot.slane %v967, 4
      %v973 = vsel %vm258, %v968, %v969
      %vm974 = vcmask 654336
      %v975 = vsel %vm974, %v959, %v973
      %v976 = vsel %vm258, %v969, %v970
      %v977 = vsel %vm974, %v961, %v976
      %v978 = vsel %vm258, %v970, %v971
      %v979 = vsel %vm974, %v963, %v978
      %v980 = vsel %vm258, %v971, %v972
      %v981 = vsel %vm974, %v965, %v980
      %986 = vst [vmem:[#allocation2 + $0x240] sm:$0xff] %v975
      %987 = vst [vmem:[#allocation2 + $0x248] sm:$0xff] %v977
      %988 = vst [vmem:[#allocation2 + $0x250] sm:$0xff] %v979
      %989 = vst [vmem:[#allocation2 + $0x258] sm:$0xff] %v981
      %v990 = vld [vmem:[%s158] sm:$0xff]
      %v991 = vld [vmem:[%s158 + $0x8] sm:$0xff]
      %v992 = vld [vmem:[%s158 + $0x10] sm:$0xff]
      %v993 = vld [vmem:[%s158 + $0x18] sm:$0xff]
      %v994 = vld [vmem:[%s158 + $0x20] sm:$0xf]
      %1000 = vrot.lane.b32.xlu0 %v990, 79
      %v1001 = vpop.permute.xlu0 %1000
      %1002 = vrot.lane.b32.xlu0 %v991, 79
      %v1003 = vpop.permute.xlu0 %1002
      %1004 = vrot.lane.b32.xlu0 %v992, 79
      %v1005 = vpop.permute.xlu0 %1004
      %1006 = vrot.lane.b32.xlu0 %v993, 79
      %v1007 = vpop.permute.xlu0 %1006
      %1008 = vrot.lane.b32.xlu0 %v994, 79
      %v1009 = vpop.permute.xlu0 %1008
      %v1010 = vrot.slane %v1001, 4
      %v1011 = vrot.slane %v1003, 4
      %v1012 = vrot.slane %v1005, 4
      %v1013 = vrot.slane %v1007, 4
      %v1014 = vrot.slane %v1009, 4
      %v1015 = vsel %vm258, %v1010, %v1011
      %vm1016 = vcmask 646144
      %v1017 = vsel %vm1016, %v1001, %v1015
      %v1018 = vsel %vm258, %v1011, %v1012
      %v1019 = vsel %vm1016, %v1003, %v1018
      %v1020 = vsel %vm258, %v1012, %v1013
      %v1021 = vsel %vm1016, %v1005, %v1020
      %v1022 = vsel %vm258, %v1013, %v1014
      %v1023 = vsel %vm1016, %v1007, %v1022
      %1028 = vst [vmem:[#allocation2 + $0x260] sm:$0xff] %v1017
      %1029 = vst [vmem:[#allocation2 + $0x268] sm:$0xff] %v1019
      %1030 = vst [vmem:[#allocation2 + $0x270] sm:$0xff] %v1021
      %1031 = vst [vmem:[#allocation2 + $0x278] sm:$0xff] %v1023
      %v1032 = vld [vmem:[%s158] sm:$0xff]
      %v1033 = vld [vmem:[%s158 + $0x8] sm:$0xff]
      %v1034 = vld [vmem:[%s158 + $0x10] sm:$0xff]
      %v1035 = vld [vmem:[%s158 + $0x18] sm:$0xff]
      %v1036 = vld [vmem:[%s158 + $0x20] sm:$0xf]
      %1042 = vrot.lane.b32.xlu0 %v1032, 78
      %v1043 = vpop.permute.xlu0 %1042
      %1044 = vrot.lane.b32.xlu0 %v1033, 78
      %v1045 = vpop.permute.xlu0 %1044
      %1046 = vrot.lane.b32.xlu0 %v1034, 78
      %v1047 = vpop.permute.xlu0 %1046
      %1048 = vrot.lane.b32.xlu0 %v1035, 78
      %v1049 = vpop.permute.xlu0 %1048
      %1050 = vrot.lane.b32.xlu0 %v1036, 78
      %v1051 = vpop.permute.xlu0 %1050
      %v1052 = vrot.slane %v1043, 4
      %v1053 = vrot.slane %v1045, 4
      %v1054 = vrot.slane %v1047, 4
      %v1055 = vrot.slane %v1049, 4
      %v1056 = vrot.slane %v1051, 4
      %v1057 = vsel %vm258, %v1052, %v1053
      %vm1058 = vcmask 637952
      %v1059 = vsel %vm1058, %v1043, %v1057
      %v1060 = vsel %vm258, %v1053, %v1054
      %v1061 = vsel %vm1058, %v1045, %v1060
      %v1062 = vsel %vm258, %v1054, %v1055
      %v1063 = vsel %vm1058, %v1047, %v1062
      %v1064 = vsel %vm258, %v1055, %v1056
      %v1065 = vsel %vm1058, %v1049, %v1064
      %1070 = vst [vmem:[#allocation2 + $0x280] sm:$0xff] %v1059
      %1071 = vst [vmem:[#allocation2 + $0x288] sm:$0xff] %v1061
      %1072 = vst [vmem:[#allocation2 + $0x290] sm:$0xff] %v1063
      %1073 = vst [vmem:[#allocation2 + $0x298] sm:$0xff] %v1065
      %v1074 = vld [vmem:[%s158] sm:$0xff]
      %v1075 = vld [vmem:[%s158 + $0x8] sm:$0xff]
      %v1076 = vld [vmem:[%s158 + $0x10] sm:$0xff]
      %v1077 = vld [vmem:[%s158 + $0x18] sm:$0xff]
      %v1078 = vld [vmem:[%s158 + $0x20] sm:$0xf]
      %1084 = vrot.lane.b32.xlu0 %v1074, 62
      %v1085 = vpop.permute.xlu0 %1084
      %1086 = vrot.lane.b32.xlu0 %v1075, 62
      %v1087 = vpop.permute.xlu0 %1086
      %1088 = vrot.lane.b32.xlu0 %v1076, 62
      %v1089 = vpop.permute.xlu0 %1088
      %1090 = vrot.lane.b32.xlu0 %v1077, 62
      %v1091 = vpop.permute.xlu0 %1090
      %1092 = vrot.lane.b32.xlu0 %v1078, 62
      %v1093 = vpop.permute.xlu0 %1092
      %v1094 = vrot.slane %v1085, 4
      %v1095 = vrot.slane %v1087, 4
      %v1096 = vrot.slane %v1089, 4
      %v1097 = vrot.slane %v1091, 4
      %v1098 = vrot.slane %v1093, 4
      %v1099 = vsel %vm258, %v1094, %v1095
      %vm1100 = vcmask 506880
      %v1101 = vsel %vm1100, %v1085, %v1099
      %v1102 = vsel %vm258, %v1095, %v1096
      %v1103 = vsel %vm1100, %v1087, %v1102
      %v1104 = vsel %vm258, %v1096, %v1097
      %v1105 = vsel %vm1100, %v1089, %v1104
      %v1106 = vsel %vm258, %v1097, %v1098
      %v1107 = vsel %vm1100, %v1091, %v1106
      %1112 = vst [vmem:[#allocation2 + $0x2a0] sm:$0xff] %v1101
      %1113 = vst [vmem:[#allocation2 + $0x2a8] sm:$0xff] %v1103
      %1114 = vst [vmem:[#allocation2 + $0x2b0] sm:$0xff] %v1105
      %1115 = vst [vmem:[#allocation2 + $0x2b8] sm:$0xff] %v1107
      %v1116 = vld [vmem:[%s158] sm:$0xff]
      %v1117 = vld [vmem:[%s158 + $0x8] sm:$0xff]
      %v1118 = vld [vmem:[%s158 + $0x10] sm:$0xff]
      %v1119 = vld [vmem:[%s158 + $0x18] sm:$0xff]
      %v1120 = vld [vmem:[%s158 + $0x20] sm:$0xf]
      %1126 = vrot.lane.b32.xlu0 %v1116, 61
      %v1127 = vpop.permute.xlu0 %1126
      %1128 = vrot.lane.b32.xlu0 %v1117, 61
      %v1129 = vpop.permute.xlu0 %1128
      %1130 = vrot.lane.b32.xlu0 %v1118, 61
      %v1131 = vpop.permute.xlu0 %1130
      %1132 = vrot.lane.b32.xlu0 %v1119, 61
      %v1133 = vpop.permute.xlu0 %1132
      %1134 = vrot.lane.b32.xlu0 %v1120, 61
      %v1135 = vpop.permute.xlu0 %1134
      %v1136 = vrot.slane %v1127, 4
      %v1137 = vrot.slane %v1129, 4
      %v1138 = vrot.slane %v1131, 4
      %v1139 = vrot.slane %v1133, 4
      %v1140 = vrot.slane %v1135, 4
      %v1141 = vsel %vm258, %v1136, %v1137
      %vm1142 = vcmask 498688
      %v1143 = vsel %vm1142, %v1127, %v1141
      %v1144 = vsel %vm258, %v1137, %v1138
      %v1145 = vsel %vm1142, %v1129, %v1144
      %v1146 = vsel %vm258, %v1138, %v1139
      %v1147 = vsel %vm1142, %v1131, %v1146
      %v1148 = vsel %vm258, %v1139, %v1140
      %v1149 = vsel %vm1142, %v1133, %v1148
      %1154 = vst [vmem:[#allocation2 + $0x2c0] sm:$0xff] %v1143
      %1155 = vst [vmem:[#allocation2 + $0x2c8] sm:$0xff] %v1145
      %1156 = vst [vmem:[#allocation2 + $0x2d0] sm:$0xff] %v1147
      %1157 = vst [vmem:[#allocation2 + $0x2d8] sm:$0xff] %v1149
      %v1158 = vld [vmem:[%s158] sm:$0xff]
      %v1159 = vld [vmem:[%s158 + $0x8] sm:$0xff]
      %v1160 = vld [vmem:[%s158 + $0x10] sm:$0xff]
      %v1161 = vld [vmem:[%s158 + $0x18] sm:$0xff]
      %v1162 = vld [vmem:[%s158 + $0x20] sm:$0xf]
      %1168 = vrot.lane.b32.xlu0 %v1158, 60
      %v1169 = vpop.permute.xlu0 %1168
      %1170 = vrot.lane.b32.xlu0 %v1159, 60
      %v1171 = vpop.permute.xlu0 %1170
      %1172 = vrot.lane.b32.xlu0 %v1160, 60
      %v1173 = vpop.permute.xlu0 %1172
      %1174 = vrot.lane.b32.xlu0 %v1161, 60
      %v1175 = vpop.permute.xlu0 %1174
      %1176 = vrot.lane.b32.xlu0 %v1162, 60
      %v1177 = vpop.permute.xlu0 %1176
      %v1178 = vrot.slane %v1169, 4
      %v1179 = vrot.slane %v1171, 4
      %v1180 = vrot.slane %v1173, 4
      %v1181 = vrot.slane %v1175, 4
      %v1182 = vrot.slane %v1177, 4
      %v1183 = vsel %vm258, %v1178, %v1179
      %vm1184 = vcmask 490496
      %v1185 = vsel %vm1184, %v1169, %v1183
      %v1186 = vsel %vm258, %v1179, %v1180
      %v1187 = vsel %vm1184, %v1171, %v1186
      %v1188 = vsel %vm258, %v1180, %v1181
      %v1189 = vsel %vm1184, %v1173, %v1188
      %v1190 = vsel %vm258, %v1181, %v1182
      %v1191 = vsel %vm1184, %v1175, %v1190
      %1196 = vst [vmem:[#allocation2 + $0x2e0] sm:$0xff] %v1185
      %1197 = vst [vmem:[#allocation2 + $0x2e8] sm:$0xff] %v1187
      %1198 = vst [vmem:[#allocation2 + $0x2f0] sm:$0xff] %v1189
      %1199 = vst [vmem:[#allocation2 + $0x2f8] sm:$0xff] %v1191
      %v1200 = vld [vmem:[%s158] sm:$0xff]
      %v1201 = vld [vmem:[%s158 + $0x8] sm:$0xff]
      %v1202 = vld [vmem:[%s158 + $0x10] sm:$0xff]
      %v1203 = vld [vmem:[%s158 + $0x18] sm:$0xff]
      %v1204 = vld [vmem:[%s158 + $0x20] sm:$0xf]
      %1210 = vrot.lane.b32.xlu0 %v1200, 59
      %v1211 = vpop.permute.xlu0 %1210
      %1212 = vrot.lane.b32.xlu0 %v1201, 59
      %v1213 = vpop.permute.xlu0 %1212
      %1214 = vrot.lane.b32.xlu0 %v1202, 59
      %v1215 = vpop.permute.xlu0 %1214
      %1216 = vrot.lane.b32.xlu0 %v1203, 59
      %v1217 = vpop.permute.xlu0 %1216
      %1218 = vrot.lane.b32.xlu0 %v1204, 59
      %v1219 = vpop.permute.xlu0 %1218
      %v1220 = vrot.slane %v1211, 4
      %v1221 = vrot.slane %v1213, 4
      %v1222 = vrot.slane %v1215, 4
      %v1223 = vrot.slane %v1217, 4
      %v1224 = vrot.slane %v1219, 4
      %v1225 = vsel %vm258, %v1220, %v1221
      %vm1226 = vcmask 482304
      %v1227 = vsel %vm1226, %v1211, %v1225
      %v1228 = vsel %vm258, %v1221, %v1222
      %v1229 = vsel %vm1226, %v1213, %v1228
      %v1230 = vsel %vm258, %v1222, %v1223
      %v1231 = vsel %vm1226, %v1215, %v1230
      %v1232 = vsel %vm258, %v1223, %v1224
      %v1233 = vsel %vm1226, %v1217, %v1232
      %1238 = vst [vmem:[#allocation2 + $0x300] sm:$0xff] %v1227
      %1239 = vst [vmem:[#allocation2 + $0x308] sm:$0xff] %v1229
      %1240 = vst [vmem:[#allocation2 + $0x310] sm:$0xff] %v1231
      %1241 = vst [vmem:[#allocation2 + $0x318] sm:$0xff] %v1233
      %v1242 = vld [vmem:[%s158] sm:$0xff]
      %v1243 = vld [vmem:[%s158 + $0x8] sm:$0xff]
      %v1244 = vld [vmem:[%s158 + $0x10] sm:$0xff]
      %v1245 = vld [vmem:[%s158 + $0x18] sm:$0xff]
      %v1246 = vld [vmem:[%s158 + $0x20] sm:$0xf]
      %1252 = vrot.lane.b32.xlu0 %v1242, 58
      %v1253 = vpop.permute.xlu0 %1252
      %1254 = vrot.lane.b32.xlu0 %v1243, 58
      %v1255 = vpop.permute.xlu0 %1254
      %1256 = vrot.lane.b32.xlu0 %v1244, 58
      %v1257 = vpop.permute.xlu0 %1256
      %1258 = vrot.lane.b32.xlu0 %v1245, 58
      %v1259 = vpop.permute.xlu0 %1258
      %1260 = vrot.lane.b32.xlu0 %v1246, 58
      %v1261 = vpop.permute.xlu0 %1260
      %v1262 = vrot.slane %v1253, 4
      %v1263 = vrot.slane %v1255, 4
      %v1264 = vrot.slane %v1257, 4
      %v1265 = vrot.slane %v1259, 4
      %v1266 = vrot.slane %v1261, 4
      %v1267 = vsel %vm258, %v1262, %v1263
      %vm1268 = vcmask 474112
      %v1269 = vsel %vm1268, %v1253, %v1267
      %v1270 = vsel %vm258, %v1263, %v1264
      %v1271 = vsel %vm1268, %v1255, %v1270
      %v1272 = vsel %vm258, %v1264, %v1265
      %v1273 = vsel %vm1268, %v1257, %v1272
      %v1274 = vsel %vm258, %v1265, %v1266
      %v1275 = vsel %vm1268, %v1259, %v1274
      %1280 = vst [vmem:[#allocation2 + $0x320] sm:$0xff] %v1269
      %1281 = vst [vmem:[#allocation2 + $0x328] sm:$0xff] %v1271
      %1282 = vst [vmem:[#allocation2 + $0x330] sm:$0xff] %v1273
      %1283 = vst [vmem:[#allocation2 + $0x338] sm:$0xff] %v1275
      %v1284 = vld [vmem:[%s158] sm:$0xff]
      %v1285 = vld [vmem:[%s158 + $0x8] sm:$0xff]
      %v1286 = vld [vmem:[%s158 + $0x10] sm:$0xff]
      %v1287 = vld [vmem:[%s158 + $0x18] sm:$0xff]
      %v1288 = vld [vmem:[%s158 + $0x20] sm:$0xf]
      %1294 = vrot.lane.b32.xlu0 %v1284, 57
      %v1295 = vpop.permute.xlu0 %1294
      %1296 = vrot.lane.b32.xlu0 %v1285, 57
      %v1297 = vpop.permute.xlu0 %1296
      %1298 = vrot.lane.b32.xlu0 %v1286, 57
      %v1299 = vpop.permute.xlu0 %1298
      %1300 = vrot.lane.b32.xlu0 %v1287, 57
      %v1301 = vpop.permute.xlu0 %1300
      %1302 = vrot.lane.b32.xlu0 %v1288, 57
      %v1303 = vpop.permute.xlu0 %1302
      %v1304 = vrot.slane %v1295, 4
      %v1305 = vrot.slane %v1297, 4
      %v1306 = vrot.slane %v1299, 4
      %v1307 = vrot.slane %v1301, 4
      %v1308 = vrot.slane %v1303, 4
      %v1309 = vsel %vm258, %v1304, %v1305
      %vm1310 = vcmask 465920
      %v1311 = vsel %vm1310, %v1295, %v1309
      %v1312 = vsel %vm258, %v1305, %v1306
      %v1313 = vsel %vm1310, %v1297, %v1312
      %v1314 = vsel %vm258, %v1306, %v1307
      %v1315 = vsel %vm1310, %v1299, %v1314
      %v1316 = vsel %vm258, %v1307, %v1308
      %v1317 = vsel %vm1310, %v1301, %v1316
      %1322 = vst [vmem:[#allocation2 + $0x340] sm:$0xff] %v1311
      %1323 = vst [vmem:[#allocation2 + $0x348] sm:$0xff] %v1313
      %1324 = vst [vmem:[#allocation2 + $0x350] sm:$0xff] %v1315
      %1325 = vst [vmem:[#allocation2 + $0x358] sm:$0xff] %v1317
      %v1326 = vld [vmem:[%s158] sm:$0xff]
      %v1327 = vld [vmem:[%s158 + $0x8] sm:$0xff]
      %v1328 = vld [vmem:[%s158 + $0x10] sm:$0xff]
      %v1329 = vld [vmem:[%s158 + $0x18] sm:$0xff]
      %v1330 = vld [vmem:[%s158 + $0x20] sm:$0xf]
      %1336 = vrot.lane.b32.xlu0 %v1326, 56
      %v1337 = vpop.permute.xlu0 %1336
      %1338 = vrot.lane.b32.xlu0 %v1327, 56
      %v1339 = vpop.permute.xlu0 %1338
      %1340 = vrot.lane.b32.xlu0 %v1328, 56
      %v1341 = vpop.permute.xlu0 %1340
      %1342 = vrot.lane.b32.xlu0 %v1329, 56
      %v1343 = vpop.permute.xlu0 %1342
      %1344 = vrot.lane.b32.xlu0 %v1330, 56
      %v1345 = vpop.permute.xlu0 %1344
      %v1346 = vrot.slane %v1337, 4
      %v1347 = vrot.slane %v1339, 4
      %v1348 = vrot.slane %v1341, 4
      %v1349 = vrot.slane %v1343, 4
      %v1350 = vrot.slane %v1345, 4
      %v1351 = vsel %vm258, %v1346, %v1347
      %vm1352 = vcmask 457728
      %v1353 = vsel %vm1352, %v1337, %v1351
      %v1354 = vsel %vm258, %v1347, %v1348
      %v1355 = vsel %vm1352, %v1339, %v1354
      %v1356 = vsel %vm258, %v1348, %v1349
      %v1357 = vsel %vm1352, %v1341, %v1356
      %v1358 = vsel %vm258, %v1349, %v1350
      %v1359 = vsel %vm1352, %v1343, %v1358
      %1364 = vst [vmem:[#allocation2 + $0x360] sm:$0xff] %v1353
      %1365 = vst [vmem:[#allocation2 + $0x368] sm:$0xff] %v1355
      %1366 = vst [vmem:[#allocation2 + $0x370] sm:$0xff] %v1357
      %1367 = vst [vmem:[#allocation2 + $0x378] sm:$0xff] %v1359
      %v1368 = vld [vmem:[%s158] sm:$0xff]
      %v1369 = vld [vmem:[%s158 + $0x8] sm:$0xff]
      %v1370 = vld [vmem:[%s158 + $0x10] sm:$0xff]
      %v1371 = vld [vmem:[%s158 + $0x18] sm:$0xff]
      %v1372 = vld [vmem:[%s158 + $0x20] sm:$0xf]
      %1378 = vrot.lane.b32.xlu0 %v1368, 40
      %v1379 = vpop.permute.xlu0 %1378
      %1380 = vrot.lane.b32.xlu0 %v1369, 40
      %v1381 = vpop.permute.xlu0 %1380
      %1382 = vrot.lane.b32.xlu0 %v1370, 40
      %v1383 = vpop.permute.xlu0 %1382
      %1384 = vrot.lane.b32.xlu0 %v1371, 40
      %v1385 = vpop.permute.xlu0 %1384
      %1386 = vrot.lane.b32.xlu0 %v1372, 40
      %v1387 = vpop.permute.xlu0 %1386
      %v1388 = vrot.slane %v1379, 4
      %v1389 = vrot.slane %v1381, 4
      %v1390 = vrot.slane %v1383, 4
      %v1391 = vrot.slane %v1385, 4
      %v1392 = vrot.slane %v1387, 4
      %v1393 = vsel %vm258, %v1388, %v1389
      %vm1394 = vcmask 326656
      %v1395 = vsel %vm1394, %v1379, %v1393
      %v1396 = vsel %vm258, %v1389, %v1390
      %v1397 = vsel %vm1394, %v1381, %v1396
      %v1398 = vsel %vm258, %v1390, %v1391
      %v1399 = vsel %vm1394, %v1383, %v1398
      %v1400 = vsel %vm258, %v1391, %v1392
      %v1401 = vsel %vm1394, %v1385, %v1400
      %1406 = vst [vmem:[#allocation2 + $0x380] sm:$0xff] %v1395
      %1407 = vst [vmem:[#allocation2 + $0x388] sm:$0xff] %v1397
      %1408 = vst [vmem:[#allocation2 + $0x390] sm:$0xff] %v1399
      %1409 = vst [vmem:[#allocation2 + $0x398] sm:$0xff] %v1401
      %v1410 = vld [vmem:[%s158] sm:$0xff]
      %v1411 = vld [vmem:[%s158 + $0x8] sm:$0xff]
      %v1412 = vld [vmem:[%s158 + $0x10] sm:$0xff]
      %v1413 = vld [vmem:[%s158 + $0x18] sm:$0xff]
      %v1414 = vld [vmem:[%s158 + $0x20] sm:$0xf]
      %1420 = vrot.lane.b32.xlu0 %v1410, 39
      %v1421 = vpop.permute.xlu0 %1420
      %1422 = vrot.lane.b32.xlu0 %v1411, 39
      %v1423 = vpop.permute.xlu0 %1422
      %1424 = vrot.lane.b32.xlu0 %v1412, 39
      %v1425 = vpop.permute.xlu0 %1424
      %1426 = vrot.lane.b32.xlu0 %v1413, 39
      %v1427 = vpop.permute.xlu0 %1426
      %1428 = vrot.lane.b32.xlu0 %v1414, 39
      %v1429 = vpop.permute.xlu0 %1428
      %v1430 = vrot.slane %v1421, 4
      %v1431 = vrot.slane %v1423, 4
      %v1432 = vrot.slane %v1425, 4
      %v1433 = vrot.slane %v1427, 4
      %v1434 = vrot.slane %v1429, 4
      %v1435 = vsel %vm258, %v1430, %v1431
      %vm1436 = vcmask 318464
      %v1437 = vsel %vm1436, %v1421, %v1435
      %v1438 = vsel %vm258, %v1431, %v1432
      %v1439 = vsel %vm1436, %v1423, %v1438
      %v1440 = vsel %vm258, %v1432, %v1433
      %v1441 = vsel %vm1436, %v1425, %v1440
      %v1442 = vsel %vm258, %v1433, %v1434
      %v1443 = vsel %vm1436, %v1427, %v1442
      %1448 = vst [vmem:[#allocation2 + $0x3a0] sm:$0xff] %v1437
      %1449 = vst [vmem:[#allocation2 + $0x3a8] sm:$0xff] %v1439
      %1450 = vst [vmem:[#allocation2 + $0x3b0] sm:$0xff] %v1441
      %1451 = vst [vmem:[#allocation2 + $0x3b8] sm:$0xff] %v1443
      %v1452 = vld [vmem:[%s158] sm:$0xff]
      %v1453 = vld [vmem:[%s158 + $0x8] sm:$0xff]
      %v1454 = vld [vmem:[%s158 + $0x10] sm:$0xff]
      %v1455 = vld [vmem:[%s158 + $0x18] sm:$0xff]
      %v1456 = vld [vmem:[%s158 + $0x20] sm:$0xf]
      %1462 = vrot.lane.b32.xlu0 %v1452, 38
      %v1463 = vpop.permute.xlu0 %1462
      %1464 = vrot.lane.b32.xlu0 %v1453, 38
      %v1465 = vpop.permute.xlu0 %1464
      %1466 = vrot.lane.b32.xlu0 %v1454, 38
      %v1467 = vpop.permute.xlu0 %1466
      %1468 = vrot.lane.b32.xlu0 %v1455, 38
      %v1469 = vpop.permute.xlu0 %1468
      %1470 = vrot.lane.b32.xlu0 %v1456, 38
      %v1471 = vpop.permute.xlu0 %1470
      %v1472 = vrot.slane %v1463, 4
      %v1473 = vrot.slane %v1465, 4
      %v1474 = vrot.slane %v1467, 4
      %v1475 = vrot.slane %v1469, 4
      %v1476 = vrot.slane %v1471, 4
      %v1477 = vsel %vm258, %v1472, %v1473
      %vm1478 = vcmask 310272
      %v1479 = vsel %vm1478, %v1463, %v1477
      %v1480 = vsel %vm258, %v1473, %v1474
      %v1481 = vsel %vm1478, %v1465, %v1480
      %v1482 = vsel %vm258, %v1474, %v1475
      %v1483 = vsel %vm1478, %v1467, %v1482
      %v1484 = vsel %vm258, %v1475, %v1476
      %v1485 = vsel %vm1478, %v1469, %v1484
      %1490 = vst [vmem:[#allocation2 + $0x3c0] sm:$0xff] %v1479
      %1491 = vst [vmem:[#allocation2 + $0x3c8] sm:$0xff] %v1481
      %1492 = vst [vmem:[#allocation2 + $0x3d0] sm:$0xff] %v1483
      %1493 = vst [vmem:[#allocation2 + $0x3d8] sm:$0xff] %v1485
      %v1494 = vld [vmem:[%s158] sm:$0xff]
      %v1495 = vld [vmem:[%s158 + $0x8] sm:$0xff]
      %v1496 = vld [vmem:[%s158 + $0x10] sm:$0xff]
      %v1497 = vld [vmem:[%s158 + $0x18] sm:$0xff]
      %v1498 = vld [vmem:[%s158 + $0x20] sm:$0xf]
      %1504 = vrot.lane.b32.xlu0 %v1494, 37
      %v1505 = vpop.permute.xlu0 %1504
      %1506 = vrot.lane.b32.xlu0 %v1495, 37
      %v1507 = vpop.permute.xlu0 %1506
      %1508 = vrot.lane.b32.xlu0 %v1496, 37
      %v1509 = vpop.permute.xlu0 %1508
      %1510 = vrot.lane.b32.xlu0 %v1497, 37
      %v1511 = vpop.permute.xlu0 %1510
      %1512 = vrot.lane.b32.xlu0 %v1498, 37
      %v1513 = vpop.permute.xlu0 %1512
      %v1514 = vrot.slane %v1505, 4
      %v1515 = vrot.slane %v1507, 4
      %v1516 = vrot.slane %v1509, 4
      %v1517 = vrot.slane %v1511, 4
      %v1518 = vrot.slane %v1513, 4
      %v1519 = vsel %vm258, %v1514, %v1515
      %vm1520 = vcmask 302080
      %v1521 = vsel %vm1520, %v1505, %v1519
      %v1522 = vsel %vm258, %v1515, %v1516
      %v1523 = vsel %vm1520, %v1507, %v1522
      %v1524 = vsel %vm258, %v1516, %v1517
      %v1525 = vsel %vm1520, %v1509, %v1524
      %v1526 = vsel %vm258, %v1517, %v1518
      %v1527 = vsel %vm1520, %v1511, %v1526
      %1532 = vst [vmem:[#allocation2 + $0x3e0] sm:$0xff] %v1521
      %1533 = vst [vmem:[#allocation2 + $0x3e8] sm:$0xff] %v1523
      %1534 = vst [vmem:[#allocation2 + $0x3f0] sm:$0xff] %v1525
      %1535 = vst [vmem:[#allocation2 + $0x3f8] sm:$0xff] %v1527
      %v1536 = vld [vmem:[%s158] sm:$0xff]
      %v1537 = vld [vmem:[%s158 + $0x8] sm:$0xff]
      %v1538 = vld [vmem:[%s158 + $0x10] sm:$0xff]
      %v1539 = vld [vmem:[%s158 + $0x18] sm:$0xff]
      %v1540 = vld [vmem:[%s158 + $0x20] sm:$0xf]
      %1546 = vrot.lane.b32.xlu0 %v1536, 36
      %v1547 = vpop.permute.xlu0 %1546
      %1548 = vrot.lane.b32.xlu0 %v1537, 36
      %v1549 = vpop.permute.xlu0 %1548
      %1550 = vrot.lane.b32.xlu0 %v1538, 36
      %v1551 = vpop.permute.xlu0 %1550
      %1552 = vrot.lane.b32.xlu0 %v1539, 36
      %v1553 = vpop.permute.xlu0 %1552
      %1554 = vrot.lane.b32.xlu0 %v1540, 36
      %v1555 = vpop.permute.xlu0 %1554
      %v1556 = vrot.slane %v1547, 4
      %v1557 = vrot.slane %v1549, 4
      %v1558 = vrot.slane %v1551, 4
      %v1559 = vrot.slane %v1553, 4
      %v1560 = vrot.slane %v1555, 4
      %v1561 = vsel %vm258, %v1556, %v1557
      %vm1562 = vcmask 293888
      %v1563 = vsel %vm1562, %v1547, %v1561
      %v1564 = vsel %vm258, %v1557, %v1558
      %v1565 = vsel %vm1562, %v1549, %v1564
      %v1566 = vsel %vm258, %v1558, %v1559
      %v1567 = vsel %vm1562, %v1551, %v1566
      %v1568 = vsel %vm258, %v1559, %v1560
      %v1569 = vsel %vm1562, %v1553, %v1568
      %1574 = vst [vmem:[#allocation2 + $0x400] sm:$0xff] %v1563
      %1575 = vst [vmem:[#allocation2 + $0x408] sm:$0xff] %v1565
      %1576 = vst [vmem:[#allocation2 + $0x410] sm:$0xff] %v1567
      %1577 = vst [vmem:[#allocation2 + $0x418] sm:$0xff] %v1569
      %v1578 = vld [vmem:[%s158] sm:$0xff]
      %v1579 = vld [vmem:[%s158 + $0x8] sm:$0xff]
      %v1580 = vld [vmem:[%s158 + $0x10] sm:$0xff]
      %v1581 = vld [vmem:[%s158 + $0x18] sm:$0xff]
      %v1582 = vld [vmem:[%s158 + $0x20] sm:$0xf]
      %1588 = vrot.lane.b32.xlu0 %v1578, 35
      %v1589 = vpop.permute.xlu0 %1588
      %1590 = vrot.lane.b32.xlu0 %v1579, 35
      %v1591 = vpop.permute.xlu0 %1590
      %1592 = vrot.lane.b32.xlu0 %v1580, 35
      %v1593 = vpop.permute.xlu0 %1592
      %1594 = vrot.lane.b32.xlu0 %v1581, 35
      %v1595 = vpop.permute.xlu0 %1594
      %1596 = vrot.lane.b32.xlu0 %v1582, 35
      %v1597 = vpop.permute.xlu0 %1596
      %v1598 = vrot.slane %v1589, 4
      %v1599 = vrot.slane %v1591, 4
      %v1600 = vrot.slane %v1593, 4
      %v1601 = vrot.slane %v1595, 4
      %v1602 = vrot.slane %v1597, 4
      %v1603 = vsel %vm258, %v1598, %v1599
      %vm1604 = vcmask 285696
      %v1605 = vsel %vm1604, %v1589, %v1603
      %v1606 = vsel %vm258, %v1599, %v1600
      %v1607 = vsel %vm1604, %v1591, %v1606
      %v1608 = vsel %vm258, %v1600, %v1601
      %v1609 = vsel %vm1604, %v1593, %v1608
      %v1610 = vsel %vm258, %v1601, %v1602
      %v1611 = vsel %vm1604, %v1595, %v1610
      %1616 = vst [vmem:[#allocation2 + $0x420] sm:$0xff] %v1605
      %1617 = vst [vmem:[#allocation2 + $0x428] sm:$0xff] %v1607
      %1618 = vst [vmem:[#allocation2 + $0x430] sm:$0xff] %v1609
      %1619 = vst [vmem:[#allocation2 + $0x438] sm:$0xff] %v1611
      %v1620 = vld [vmem:[%s158] sm:$0xff]
      %v1621 = vld [vmem:[%s158 + $0x8] sm:$0xff]
      %v1622 = vld [vmem:[%s158 + $0x10] sm:$0xff]
      %v1623 = vld [vmem:[%s158 + $0x18] sm:$0xff]
      %v1624 = vld [vmem:[%s158 + $0x20] sm:$0xf]
      %1630 = vrot.lane.b32.xlu0 %v1620, 34
      %v1631 = vpop.permute.xlu0 %1630
      %1632 = vrot.lane.b32.xlu0 %v1621, 34
      %v1633 = vpop.permute.xlu0 %1632
      %1634 = vrot.lane.b32.xlu0 %v1622, 34
      %v1635 = vpop.permute.xlu0 %1634
      %1636 = vrot.lane.b32.xlu0 %v1623, 34
      %v1637 = vpop.permute.xlu0 %1636
      %1638 = vrot.lane.b32.xlu0 %v1624, 34
      %v1639 = vpop.permute.xlu0 %1638
      %v1640 = vrot.slane %v1631, 4
      %v1641 = vrot.slane %v1633, 4
      %v1642 = vrot.slane %v1635, 4
      %v1643 = vrot.slane %v1637, 4
      %v1644 = vrot.slane %v1639, 4
      %v1645 = vsel %vm258, %v1640, %v1641
      %vm1646 = vcmask 277504
      %v1647 = vsel %vm1646, %v1631, %v1645
      %v1648 = vsel %vm258, %v1641, %v1642
      %v1649 = vsel %vm1646, %v1633, %v1648
      %v1650 = vsel %vm258, %v1642, %v1643
      %v1651 = vsel %vm1646, %v1635, %v1650
      %v1652 = vsel %vm258, %v1643, %v1644
      %v1653 = vsel %vm1646, %v1637, %v1652
      %1658 = vst [vmem:[#allocation2 + $0x440] sm:$0xff] %v1647
      %1659 = vst [vmem:[#allocation2 + $0x448] sm:$0xff] %v1649
      %1660 = vst [vmem:[#allocation2 + $0x450] sm:$0xff] %v1651
      %1661 = vst [vmem:[#allocation2 + $0x458] sm:$0xff] %v1653
      %v1662 = vld [vmem:[%s158] sm:$0xff]
      %v1663 = vld [vmem:[%s158 + $0x8] sm:$0xff]
      %v1664 = vld [vmem:[%s158 + $0x10] sm:$0xff]
      %v1665 = vld [vmem:[%s158 + $0x18] sm:$0xff]
      %v1666 = vld [vmem:[%s158 + $0x20] sm:$0xf]
      %1672 = vrot.lane.b32.xlu0 %v1662, 18
      %v1673 = vpop.permute.xlu0 %1672
      %1674 = vrot.lane.b32.xlu0 %v1663, 18
      %v1675 = vpop.permute.xlu0 %1674
      %1676 = vrot.lane.b32.xlu0 %v1664, 18
      %v1677 = vpop.permute.xlu0 %1676
      %1678 = vrot.lane.b32.xlu0 %v1665, 18
      %v1679 = vpop.permute.xlu0 %1678
      %1680 = vrot.lane.b32.xlu0 %v1666, 18
      %v1681 = vpop.permute.xlu0 %1680
      %v1682 = vrot.slane %v1673, 4
      %v1683 = vrot.slane %v1675, 4
      %v1684 = vrot.slane %v1677, 4
      %v1685 = vrot.slane %v1679, 4
      %v1686 = vrot.slane %v1681, 4
      %v1687 = vsel %vm258, %v1682, %v1683
      %vm1688 = vcmask 146432
      %v1689 = vsel %vm1688, %v1673, %v1687
      %v1690 = vsel %vm258, %v1683, %v1684
      %v1691 = vsel %vm1688, %v1675, %v1690
      %v1692 = vsel %vm258, %v1684, %v1685
      %v1693 = vsel %vm1688, %v1677, %v1692
      %v1694 = vsel %vm258, %v1685, %v1686
      %v1695 = vsel %vm1688, %v1679, %v1694
      %1700 = vst [vmem:[#allocation2 + $0x460] sm:$0xff] %v1689
      %1701 = vst [vmem:[#allocation2 + $0x468] sm:$0xff] %v1691
      %1702 = vst [vmem:[#allocation2 + $0x470] sm:$0xff] %v1693
      %1703 = vst [vmem:[#allocation2 + $0x478] sm:$0xff] %v1695
      %v1704 = vld [vmem:[%s158] sm:$0xff]
      %v1705 = vld [vmem:[%s158 + $0x8] sm:$0xff]
      %v1706 = vld [vmem:[%s158 + $0x10] sm:$0xff]
      %v1707 = vld [vmem:[%s158 + $0x18] sm:$0xff]
      %v1708 = vld [vmem:[%s158 + $0x20] sm:$0xf]
      %1714 = vrot.lane.b32.xlu0 %v1704, 17
      %v1715 = vpop.permute.xlu0 %1714
      %1716 = vrot.lane.b32.xlu0 %v1705, 17
      %v1717 = vpop.permute.xlu0 %1716
      %1718 = vrot.lane.b32.xlu0 %v1706, 17
      %v1719 = vpop.permute.xlu0 %1718
      %1720 = vrot.lane.b32.xlu0 %v1707, 17
      %v1721 = vpop.permute.xlu0 %1720
      %1722 = vrot.lane.b32.xlu0 %v1708, 17
      %v1723 = vpop.permute.xlu0 %1722
      %v1724 = vrot.slane %v1715, 4
      %v1725 = vrot.slane %v1717, 4
      %v1726 = vrot.slane %v1719, 4
      %v1727 = vrot.slane %v1721, 4
      %v1728 = vrot.slane %v1723, 4
      %v1729 = vsel %vm258, %v1724, %v1725
      %vm1730 = vcmask 138240
      %v1731 = vsel %vm1730, %v1715, %v1729
      %v1732 = vsel %vm258, %v1725, %v1726
      %v1733 = vsel %vm1730, %v1717, %v1732
      %v1734 = vsel %vm258, %v1726, %v1727
      %v1735 = vsel %vm1730, %v1719, %v1734
      %v1736 = vsel %vm258, %v1727, %v1728
      %v1737 = vsel %vm1730, %v1721, %v1736
      %1742 = vst [vmem:[#allocation2 + $0x480] sm:$0xff] %v1731
      %1743 = vst [vmem:[#allocation2 + $0x488] sm:$0xff] %v1733
      %1744 = vst [vmem:[#allocation2 + $0x490] sm:$0xff] %v1735
      %1745 = vst [vmem:[#allocation2 + $0x498] sm:$0xff] %v1737
      %v1746 = vld [vmem:[%s158] sm:$0xff]
      %v1747 = vld [vmem:[%s158 + $0x8] sm:$0xff]
      %v1748 = vld [vmem:[%s158 + $0x10] sm:$0xff]
      %v1749 = vld [vmem:[%s158 + $0x18] sm:$0xff]
      %v1750 = vld [vmem:[%s158 + $0x20] sm:$0xf]
      %1756 = vrot.lane.b32.xlu0 %v1746, 16
      %v1757 = vpop.permute.xlu0 %1756
      %1758 = vrot.lane.b32.xlu0 %v1747, 16
      %v1759 = vpop.permute.xlu0 %1758
      %1760 = vrot.lane.b32.xlu0 %v1748, 16
      %v1761 = vpop.permute.xlu0 %1760
      %1762 = vrot.lane.b32.xlu0 %v1749, 16
      %v1763 = vpop.permute.xlu0 %1762
      %1764 = vrot.lane.b32.xlu0 %v1750, 16
      %v1765 = vpop.permute.xlu0 %1764
      %v1766 = vrot.slane %v1757, 4
      %v1767 = vrot.slane %v1759, 4
      %v1768 = vrot.slane %v1761, 4
      %v1769 = vrot.slane %v1763, 4
      %v1770 = vrot.slane %v1765, 4
      %v1771 = vsel %vm258, %v1766, %v1767
      %vm1772 = vcmask 130048
      %v1773 = vsel %vm1772, %v1757, %v1771
      %v1774 = vsel %vm258, %v1767, %v1768
      %v1775 = vsel %vm1772, %v1759, %v1774
      %v1776 = vsel %vm258, %v1768, %v1769
      %v1777 = vsel %vm1772, %v1761, %v1776
      %v1778 = vsel %vm258, %v1769, %v1770
      %v1779 = vsel %vm1772, %v1763, %v1778
      %1784 = vst [vmem:[#allocation2 + $0x4a0] sm:$0xff] %v1773
      %1785 = vst [vmem:[#allocation2 + $0x4a8] sm:$0xff] %v1775
      %1786 = vst [vmem:[#allocation2 + $0x4b0] sm:$0xff] %v1777
      %1787 = vst [vmem:[#allocation2 + $0x4b8] sm:$0xff] %v1779
      %v1788 = vld [vmem:[%s158] sm:$0xff]
      %v1789 = vld [vmem:[%s158 + $0x8] sm:$0xff]
      %v1790 = vld [vmem:[%s158 + $0x10] sm:$0xff]
      %v1791 = vld [vmem:[%s158 + $0x18] sm:$0xff]
      %v1792 = vld [vmem:[%s158 + $0x20] sm:$0xf]
      %1798 = vrot.lane.b32.xlu0 %v1788, 15
      %v1799 = vpop.permute.xlu0 %1798
      %1800 = vrot.lane.b32.xlu0 %v1789, 15
      %v1801 = vpop.permute.xlu0 %1800
      %1802 = vrot.lane.b32.xlu0 %v1790, 15
      %v1803 = vpop.permute.xlu0 %1802
      %1804 = vrot.lane.b32.xlu0 %v1791, 15
      %v1805 = vpop.permute.xlu0 %1804
      %1806 = vrot.lane.b32.xlu0 %v1792, 15
      %v1807 = vpop.permute.xlu0 %1806
      %v1808 = vrot.slane %v1799, 4
      %v1809 = vrot.slane %v1801, 4
      %v1810 = vrot.slane %v1803, 4
      %v1811 = vrot.slane %v1805, 4
      %v1812 = vrot.slane %v1807, 4
      %v1813 = vsel %vm258, %v1808, %v1809
      %vm1814 = vcmask 121856
      %v1815 = vsel %vm1814, %v1799, %v1813
      %v1816 = vsel %vm258, %v1809, %v1810
      %v1817 = vsel %vm1814, %v1801, %v1816
      %v1818 = vsel %vm258, %v1810, %v1811
      %v1819 = vsel %vm1814, %v1803, %v1818
      %v1820 = vsel %vm258, %v1811, %v1812
      %v1821 = vsel %vm1814, %v1805, %v1820
      %1826 = vst [vmem:[#allocation2 + $0x4c0] sm:$0xff] %v1815
      %1827 = vst [vmem:[#allocation2 + $0x4c8] sm:$0xff] %v1817
      %1828 = vst [vmem:[#allocation2 + $0x4d0] sm:$0xff] %v1819
      %1829 = vst [vmem:[#allocation2 + $0x4d8] sm:$0xff] %v1821
      %v1830 = vld [vmem:[%s158] sm:$0xff]
      %v1831 = vld [vmem:[%s158 + $0x8] sm:$0xff]
      %v1832 = vld [vmem:[%s158 + $0x10] sm:$0xff]
      %v1833 = vld [vmem:[%s158 + $0x18] sm:$0xff]
      %v1834 = vld [vmem:[%s158 + $0x20] sm:$0xf]
      %1840 = vrot.lane.b32.xlu0 %v1830, 14
      %v1841 = vpop.permute.xlu0 %1840
      %1842 = vrot.lane.b32.xlu0 %v1831, 14
      %v1843 = vpop.permute.xlu0 %1842
      %1844 = vrot.lane.b32.xlu0 %v1832, 14
      %v1845 = vpop.permute.xlu0 %1844
      %1846 = vrot.lane.b32.xlu0 %v1833, 14
      %v1847 = vpop.permute.xlu0 %1846
      %1848 = vrot.lane.b32.xlu0 %v1834, 14
      %v1849 = vpop.permute.xlu0 %1848
      %v1850 = vrot.slane %v1841, 4
      %v1851 = vrot.slane %v1843, 4
      %v1852 = vrot.slane %v1845, 4
      %v1853 = vrot.slane %v1847, 4
      %v1854 = vrot.slane %v1849, 4
      %v1855 = vsel %vm258, %v1850, %v1851
      %vm1856 = vcmask 113664
      %v1857 = vsel %vm1856, %v1841, %v1855
      %v1858 = vsel %vm258, %v1851, %v1852
      %v1859 = vsel %vm1856, %v1843, %v1858
      %v1860 = vsel %vm258, %v1852, %v1853
      %v1861 = vsel %vm1856, %v1845, %v1860
      %v1862 = vsel %vm258, %v1853, %v1854
      %v1863 = vsel %vm1856, %v1847, %v1862
      %1868 = vst [vmem:[#allocation2 + $0x4e0] sm:$0xff] %v1857
      %1869 = vst [vmem:[#allocation2 + $0x4e8] sm:$0xff] %v1859
      %1870 = vst [vmem:[#allocation2 + $0x4f0] sm:$0xff] %v1861
      %1871 = vst [vmem:[#allocation2 + $0x4f8] sm:$0xff] %v1863
      %v1872 = vld [vmem:[%s158] sm:$0xff]
      %v1873 = vld [vmem:[%s158 + $0x8] sm:$0xff]
      %v1874 = vld [vmem:[%s158 + $0x10] sm:$0xff]
      %v1875 = vld [vmem:[%s158 + $0x18] sm:$0xff]
      %v1876 = vld [vmem:[%s158 + $0x20] sm:$0xf]
      %1882 = vrot.lane.b32.xlu0 %v1872, 13
      %v1883 = vpop.permute.xlu0 %1882
      %1884 = vrot.lane.b32.xlu0 %v1873, 13
      %v1885 = vpop.permute.xlu0 %1884
      %1886 = vrot.lane.b32.xlu0 %v1874, 13
      %v1887 = vpop.permute.xlu0 %1886
      %1888 = vrot.lane.b32.xlu0 %v1875, 13
      %v1889 = vpop.permute.xlu0 %1888
      %1890 = vrot.lane.b32.xlu0 %v1876, 13
      %v1891 = vpop.permute.xlu0 %1890
      %v1892 = vrot.slane %v1883, 4
      %v1893 = vrot.slane %v1885, 4
      %v1894 = vrot.slane %v1887, 4
      %v1895 = vrot.slane %v1889, 4
      %v1896 = vrot.slane %v1891, 4
      %v1897 = vsel %vm258, %v1892, %v1893
      %vm1898 = vcmask 105472
      %v1899 = vsel %vm1898, %v1883, %v1897
      %v1900 = vsel %vm258, %v1893, %v1894
      %v1901 = vsel %vm1898, %v1885, %v1900
      %v1902 = vsel %vm258, %v1894, %v1895
      %v1903 = vsel %vm1898, %v1887, %v1902
      %v1904 = vsel %vm258, %v1895, %v1896
      %v1905 = vsel %vm1898, %v1889, %v1904
      %1910 = vst [vmem:[#allocation2 + $0x500] sm:$0xff] %v1899
      %1911 = vst [vmem:[#allocation2 + $0x508] sm:$0xff] %v1901
      %1912 = vst [vmem:[#allocation2 + $0x510] sm:$0xff] %v1903
      %1913 = vst [vmem:[#allocation2 + $0x518] sm:$0xff] %v1905
      %v1914 = vld [vmem:[%s158] sm:$0xff]
      %v1915 = vld [vmem:[%s158 + $0x8] sm:$0xff]
      %v1916 = vld [vmem:[%s158 + $0x10] sm:$0xff]
      %v1917 = vld [vmem:[%s158 + $0x18] sm:$0xff]
      %v1918 = vld [vmem:[%s158 + $0x20] sm:$0xf]
      %1924 = vrot.lane.b32.xlu0 %v1914, 12
      %v1925 = vpop.permute.xlu0 %1924
      %1926 = vrot.lane.b32.xlu0 %v1915, 12
      %v1927 = vpop.permute.xlu0 %1926
      %1928 = vrot.lane.b32.xlu0 %v1916, 12
      %v1929 = vpop.permute.xlu0 %1928
      %1930 = vrot.lane.b32.xlu0 %v1917, 12
      %v1931 = vpop.permute.xlu0 %1930
      %1932 = vrot.lane.b32.xlu0 %v1918, 12
      %v1933 = vpop.permute.xlu0 %1932
      %v1934 = vrot.slane %v1925, 4
      %v1935 = vrot.slane %v1927, 4
      %v1936 = vrot.slane %v1929, 4
      %v1937 = vrot.slane %v1931, 4
      %v1938 = vrot.slane %v1933, 4
      %v1939 = vsel %vm258, %v1934, %v1935
      %vm1940 = vcmask 97280
      %v1941 = vsel %vm1940, %v1925, %v1939
      %v1942 = vsel %vm258, %v1935, %v1936
      %v1943 = vsel %vm1940, %v1927, %v1942
      %v1944 = vsel %vm258, %v1936, %v1937
      %v1945 = vsel %vm1940, %v1929, %v1944
      %v1946 = vsel %vm258, %v1937, %v1938
      %v1947 = vsel %vm1940, %v1931, %v1946
      %1952 = vst [vmem:[#allocation2 + $0x520] sm:$0xff] %v1941
      %1953 = vst [vmem:[#allocation2 + $0x528] sm:$0xff] %v1943
      %1954 = vst [vmem:[#allocation2 + $0x530] sm:$0xff] %v1945
      %1955 = vst [vmem:[#allocation2 + $0x538] sm:$0xff] %v1947
      %v1956 = vld [vmem:[%s158 + $0x4] sm:$0xff]
      %v1957 = vld [vmem:[%s158 + $0xc] sm:$0xff]
      %v1958 = vld [vmem:[%s158 + $0x14] sm:$0xff]
      %v1959 = vld [vmem:[%s158 + $0x1c] sm:$0xff]
      %v1960 = vld [vmem:[%s158 + $0x24] sm:$0xf]
      %1966 = vrot.lane.b32.xlu0 %v1956, 124
      %v1967 = vpop.permute.xlu0 %1966
      %1968 = vrot.lane.b32.xlu0 %v1957, 124
      %v1969 = vpop.permute.xlu0 %1968
      %1970 = vrot.lane.b32.xlu0 %v1958, 124
      %v1971 = vpop.permute.xlu0 %1970
      %1972 = vrot.lane.b32.xlu0 %v1959, 124
      %v1973 = vpop.permute.xlu0 %1972
      %1974 = vrot.lane.b32.xlu0 %v1960, 124
      %v1975 = vpop.permute.xlu0 %1974
      %v1976 = vrot.slane %v1967, 4
      %v1977 = vrot.slane %v1969, 4
      %v1978 = vrot.slane %v1971, 4
      %v1979 = vrot.slane %v1973, 4
      %v1980 = vrot.slane %v1975, 4
      %v1981 = vsel %vm258, %v1976, %v1977
      %v1982 = vsel %vm386, %v1967, %v1981
      %v1983 = vsel %vm258, %v1977, %v1978
      %v1984 = vsel %vm386, %v1969, %v1983
      %v1985 = vsel %vm258, %v1978, %v1979
      %v1986 = vsel %vm386, %v1971, %v1985
      %v1987 = vsel %vm258, %v1979, %v1980
      %v1988 = vsel %vm386, %v1973, %v1987
      %1993 = vst [vmem:[#allocation2 + $0x540] sm:$0xff] %v1982
      %1994 = vst [vmem:[#allocation2 + $0x548] sm:$0xff] %v1984
      %1995 = vst [vmem:[#allocation2 + $0x550] sm:$0xff] %v1986
      %1996 = vst [vmem:[#allocation2 + $0x558] sm:$0xff] %v1988
      %v1997 = vld [vmem:[%s158 + $0x4] sm:$0xff]
      %v1998 = vld [vmem:[%s158 + $0xc] sm:$0xff]
      %v1999 = vld [vmem:[%s158 + $0x14] sm:$0xff]
      %v2000 = vld [vmem:[%s158 + $0x1c] sm:$0xff]
      %v2001 = vld [vmem:[%s158 + $0x24] sm:$0xf]
      %2007 = vrot.lane.b32.xlu0 %v1997, 123
      %v2008 = vpop.permute.xlu0 %2007
      %2009 = vrot.lane.b32.xlu0 %v1998, 123
      %v2010 = vpop.permute.xlu0 %2009
      %2011 = vrot.lane.b32.xlu0 %v1999, 123
      %v2012 = vpop.permute.xlu0 %2011
      %2013 = vrot.lane.b32.xlu0 %v2000, 123
      %v2014 = vpop.permute.xlu0 %2013
      %2015 = vrot.lane.b32.xlu0 %v2001, 123
      %v2016 = vpop.permute.xlu0 %2015
      %v2017 = vrot.slane %v2008, 4
      %v2018 = vrot.slane %v2010, 4
      %v2019 = vrot.slane %v2012, 4
      %v2020 = vrot.slane %v2014, 4
      %v2021 = vrot.slane %v2016, 4
      %v2022 = vsel %vm258, %v2017, %v2018
      %v2023 = vsel %vm428, %v2008, %v2022
      %v2024 = vsel %vm258, %v2018, %v2019
      %v2025 = vsel %vm428, %v2010, %v2024
      %v2026 = vsel %vm258, %v2019, %v2020
      %v2027 = vsel %vm428, %v2012, %v2026
      %v2028 = vsel %vm258, %v2020, %v2021
      %v2029 = vsel %vm428, %v2014, %v2028
      %2034 = vst [vmem:[#allocation2 + $0x560] sm:$0xff] %v2023
      %2035 = vst [vmem:[#allocation2 + $0x568] sm:$0xff] %v2025
      %2036 = vst [vmem:[#allocation2 + $0x570] sm:$0xff] %v2027
      %2037 = vst [vmem:[#allocation2 + $0x578] sm:$0xff] %v2029
      %v2038 = vld [vmem:[%s158 + $0x4] sm:$0xff]
      %v2039 = vld [vmem:[%s158 + $0xc] sm:$0xff]
      %v2040 = vld [vmem:[%s158 + $0x14] sm:$0xff]
      %v2041 = vld [vmem:[%s158 + $0x1c] sm:$0xff]
      %v2042 = vld [vmem:[%s158 + $0x24] sm:$0xf]
      %2048 = vrot.lane.b32.xlu0 %v2038, 122
      %v2049 = vpop.permute.xlu0 %2048
      %2050 = vrot.lane.b32.xlu0 %v2039, 122
      %v2051 = vpop.permute.xlu0 %2050
      %2052 = vrot.lane.b32.xlu0 %v2040, 122
      %v2053 = vpop.permute.xlu0 %2052
      %2054 = vrot.lane.b32.xlu0 %v2041, 122
      %v2055 = vpop.permute.xlu0 %2054
      %2056 = vrot.lane.b32.xlu0 %v2042, 122
      %v2057 = vpop.permute.xlu0 %2056
      %v2058 = vrot.slane %v2049, 4
      %v2059 = vrot.slane %v2051, 4
      %v2060 = vrot.slane %v2053, 4
      %v2061 = vrot.slane %v2055, 4
      %v2062 = vrot.slane %v2057, 4
      %v2063 = vsel %vm258, %v2058, %v2059
      %v2064 = vsel %vm470, %v2049, %v2063
      %v2065 = vsel %vm258, %v2059, %v2060
      %v2066 = vsel %vm470, %v2051, %v2065
      %v2067 = vsel %vm258, %v2060, %v2061
      %v2068 = vsel %vm470, %v2053, %v2067
      %v2069 = vsel %vm258, %v2061, %v2062
      %v2070 = vsel %vm470, %v2055, %v2069
      %2075 = vst [vmem:[#allocation2 + $0x580] sm:$0xff] %v2064
      %2076 = vst [vmem:[#allocation2 + $0x588] sm:$0xff] %v2066
      %2077 = vst [vmem:[#allocation2 + $0x590] sm:$0xff] %v2068
      %2078 = vst [vmem:[#allocation2 + $0x598] sm:$0xff] %v2070
      %v2079 = vld [vmem:[%s158 + $0x4] sm:$0xff]
      %v2080 = vld [vmem:[%s158 + $0xc] sm:$0xff]
      %v2081 = vld [vmem:[%s158 + $0x14] sm:$0xff]
      %v2082 = vld [vmem:[%s158 + $0x1c] sm:$0xff]
      %v2083 = vld [vmem:[%s158 + $0x24] sm:$0xf]
      %2089 = vrot.lane.b32.xlu0 %v2079, 121
      %v2090 = vpop.permute.xlu0 %2089
      %2091 = vrot.lane.b32.xlu0 %v2080, 121
      %v2092 = vpop.permute.xlu0 %2091
      %2093 = vrot.lane.b32.xlu0 %v2081, 121
      %v2094 = vpop.permute.xlu0 %2093
      %2095 = vrot.lane.b32.xlu0 %v2082, 121
      %v2096 = vpop.permute.xlu0 %2095
      %2097 = vrot.lane.b32.xlu0 %v2083, 121
      %v2098 = vpop.permute.xlu0 %2097
      %v2099 = vrot.slane %v2090, 4
      %v2100 = vrot.slane %v2092, 4
      %v2101 = vrot.slane %v2094, 4
      %v2102 = vrot.slane %v2096, 4
      %v2103 = vrot.slane %v2098, 4
      %v2104 = vsel %vm258, %v2099, %v2100
      %vm2105 = vcmask 990208
      %v2106 = vsel %vm2105, %v2090, %v2104
      %v2107 = vsel %vm258, %v2100, %v2101
      %v2108 = vsel %vm2105, %v2092, %v2107
      %v2109 = vsel %vm258, %v2101, %v2102
      %v2110 = vsel %vm2105, %v2094, %v2109
      %v2111 = vsel %vm258, %v2102, %v2103
      %v2112 = vsel %vm2105, %v2096, %v2111
      %2117 = vst [vmem:[#allocation2 + $0x5a0] sm:$0xff] %v2106
      %2118 = vst [vmem:[#allocation2 + $0x5a8] sm:$0xff] %v2108
      %2119 = vst [vmem:[#allocation2 + $0x5b0] sm:$0xff] %v2110
      %2120 = vst [vmem:[#allocation2 + $0x5b8] sm:$0xff] %v2112
      %v2121 = vld [vmem:[%s158 + $0x4] sm:$0xff]
      %v2122 = vld [vmem:[%s158 + $0xc] sm:$0xff]
      %v2123 = vld [vmem:[%s158 + $0x14] sm:$0xff]
      %v2124 = vld [vmem:[%s158 + $0x1c] sm:$0xff]
      %v2125 = vld [vmem:[%s158 + $0x24] sm:$0xf]
      %2131 = vrot.lane.b32.xlu0 %v2121, 120
      %v2132 = vpop.permute.xlu0 %2131
      %2133 = vrot.lane.b32.xlu0 %v2122, 120
      %v2134 = vpop.permute.xlu0 %2133
      %2135 = vrot.lane.b32.xlu0 %v2123, 120
      %v2136 = vpop.permute.xlu0 %2135
      %2137 = vrot.lane.b32.xlu0 %v2124, 120
      %v2138 = vpop.permute.xlu0 %2137
      %2139 = vrot.lane.b32.xlu0 %v2125, 120
      %v2140 = vpop.permute.xlu0 %2139
      %v2141 = vrot.slane %v2132, 4
      %v2142 = vrot.slane %v2134, 4
      %v2143 = vrot.slane %v2136, 4
      %v2144 = vrot.slane %v2138, 4
      %v2145 = vrot.slane %v2140, 4
      %v2146 = vsel %vm258, %v2141, %v2142
      %vm2147 = vcmask 982016
      %v2148 = vsel %vm2147, %v2132, %v2146
      %v2149 = vsel %vm258, %v2142, %v2143
      %v2150 = vsel %vm2147, %v2134, %v2149
      %v2151 = vsel %vm258, %v2143, %v2144
      %v2152 = vsel %vm2147, %v2136, %v2151
      %v2153 = vsel %vm258, %v2144, %v2145
      %v2154 = vsel %vm2147, %v2138, %v2153
      %2159 = vst [vmem:[#allocation2 + $0x5c0] sm:$0xff] %v2148
      %2160 = vst [vmem:[#allocation2 + $0x5c8] sm:$0xff] %v2150
      %2161 = vst [vmem:[#allocation2 + $0x5d0] sm:$0xff] %v2152
      %2162 = vst [vmem:[#allocation2 + $0x5d8] sm:$0xff] %v2154
      %v2163 = vld [vmem:[%s158 + $0x4] sm:$0xff]
      %v2164 = vld [vmem:[%s158 + $0xc] sm:$0xff]
      %v2165 = vld [vmem:[%s158 + $0x14] sm:$0xff]
      %v2166 = vld [vmem:[%s158 + $0x1c] sm:$0xff]
      %v2167 = vld [vmem:[%s158 + $0x24] sm:$0xf]
      %2173 = vrot.lane.b32.xlu0 %v2163, 119
      %v2174 = vpop.permute.xlu0 %2173
      %2175 = vrot.lane.b32.xlu0 %v2164, 119
      %v2176 = vpop.permute.xlu0 %2175
      %2177 = vrot.lane.b32.xlu0 %v2165, 119
      %v2178 = vpop.permute.xlu0 %2177
      %2179 = vrot.lane.b32.xlu0 %v2166, 119
      %v2180 = vpop.permute.xlu0 %2179
      %2181 = vrot.lane.b32.xlu0 %v2167, 119
      %v2182 = vpop.permute.xlu0 %2181
      %v2183 = vrot.slane %v2174, 4
      %v2184 = vrot.slane %v2176, 4
      %v2185 = vrot.slane %v2178, 4
      %v2186 = vrot.slane %v2180, 4
      %v2187 = vrot.slane %v2182, 4
      %v2188 = vsel %vm258, %v2183, %v2184
      %vm2189 = vcmask 973824
      %v2190 = vsel %vm2189, %v2174, %v2188
      %v2191 = vsel %vm258, %v2184, %v2185
      %v2192 = vsel %vm2189, %v2176, %v2191
      %v2193 = vsel %vm258, %v2185, %v2186
      %v2194 = vsel %vm2189, %v2178, %v2193
      %v2195 = vsel %vm258, %v2186, %v2187
      %v2196 = vsel %vm2189, %v2180, %v2195
      %2201 = vst [vmem:[#allocation2 + $0x5e0] sm:$0xff] %v2190
      %2202 = vst [vmem:[#allocation2 + $0x5e8] sm:$0xff] %v2192
      %2203 = vst [vmem:[#allocation2 + $0x5f0] sm:$0xff] %v2194
      %2204 = vst [vmem:[#allocation2 + $0x5f8] sm:$0xff] %v2196
      %v2205 = vld [vmem:[%s158 + $0x4] sm:$0xff]
      %v2206 = vld [vmem:[%s158 + $0xc] sm:$0xff]
      %v2207 = vld [vmem:[%s158 + $0x14] sm:$0xff]
      %v2208 = vld [vmem:[%s158 + $0x1c] sm:$0xff]
      %v2209 = vld [vmem:[%s158 + $0x24] sm:$0xf]
      %2215 = vrot.lane.b32.xlu0 %v2205, 118
      %v2216 = vpop.permute.xlu0 %2215
      %2217 = vrot.lane.b32.xlu0 %v2206, 118
      %v2218 = vpop.permute.xlu0 %2217
      %2219 = vrot.lane.b32.xlu0 %v2207, 118
      %v2220 = vpop.permute.xlu0 %2219
      %2221 = vrot.lane.b32.xlu0 %v2208, 118
      %v2222 = vpop.permute.xlu0 %2221
      %2223 = vrot.lane.b32.xlu0 %v2209, 118
      %v2224 = vpop.permute.xlu0 %2223
      %v2225 = vrot.slane %v2216, 4
      %v2226 = vrot.slane %v2218, 4
      %v2227 = vrot.slane %v2220, 4
      %v2228 = vrot.slane %v2222, 4
      %v2229 = vrot.slane %v2224, 4
      %v2230 = vsel %vm258, %v2225, %v2226
      %vm2231 = vcmask 965632
      %v2232 = vsel %vm2231, %v2216, %v2230
      %v2233 = vsel %vm258, %v2226, %v2227
      %v2234 = vsel %vm2231, %v2218, %v2233
      %v2235 = vsel %vm258, %v2227, %v2228
      %v2236 = vsel %vm2231, %v2220, %v2235
      %v2237 = vsel %vm258, %v2228, %v2229
      %v2238 = vsel %vm2231, %v2222, %v2237
      %2243 = vst [vmem:[#allocation2 + $0x600] sm:$0xff] %v2232
      %2244 = vst [vmem:[#allocation2 + $0x608] sm:$0xff] %v2234
      %2245 = vst [vmem:[#allocation2 + $0x610] sm:$0xff] %v2236
      %2246 = vst [vmem:[#allocation2 + $0x618] sm:$0xff] %v2238
      %v2247 = vld [vmem:[%s153] sm:$0xff]
      %v2248 = vld [vmem:[%s153 + $0x8] sm:$0xff]
      %v2249 = vld [vmem:[#allocation2] sm:$0xff]
      %v2250 = vld [vmem:[#allocation2 + $0x8] sm:$0xff]
      %v2251 = vld [vmem:[#allocation2 + $0x10] sm:$0xff]
      %v2252 = vld [vmem:[#allocation2 + $0x18] sm:$0xff]
      %v2253 = vld [vmem:[#allocation2 + $0x20] sm:$0xff]
      %v2254 = vld [vmem:[#allocation2 + $0x28] sm:$0xff]
      %v2255 = vld [vmem:[#allocation2 + $0x30] sm:$0xff]
      %v2256 = vld [vmem:[#allocation2 + $0x38] sm:$0xff]
      %v2257 = vld [vmem:[#allocation2 + $0x40] sm:$0xff]
      %v2258 = vld [vmem:[#allocation2 + $0x48] sm:$0xff]
      %v2259 = vld [vmem:[#allocation2 + $0x50] sm:$0xff]
      %v2260 = vld [vmem:[#allocation2 + $0x58] sm:$0xff]
      %v2261 = vld [vmem:[#allocation2 + $0x60] sm:$0xff]
      %v2262 = vld [vmem:[#allocation2 + $0x68] sm:$0xff]
      %v2263 = vld [vmem:[#allocation2 + $0x70] sm:$0xff]
      %v2264 = vld [vmem:[#allocation2 + $0x78] sm:$0xff]
      %v2265 = vld [vmem:[#allocation2 + $0x80] sm:$0xff]
      %v2266 = vld [vmem:[#allocation2 + $0x88] sm:$0xff]
      %v2267 = vld [vmem:[#allocation2 + $0x90] sm:$0xff]
      %v2268 = vld [vmem:[#allocation2 + $0x98] sm:$0xff]
      %v2269 = vld [vmem:[#allocation2 + $0xa0] sm:$0xff]
      %v2270 = vld [vmem:[#allocation2 + $0xa8] sm:$0xff]
      %v2271 = vld [vmem:[#allocation2 + $0xb0] sm:$0xff]
      %v2272 = vld [vmem:[#allocation2 + $0xb8] sm:$0xff]
      %v2273 = vld [vmem:[#allocation2 + $0xc0] sm:$0xff]
      %v2274 = vld [vmem:[#allocation2 + $0xc8] sm:$0xff]
      %v2275 = vld [vmem:[#allocation2 + $0xd0] sm:$0xff]
      %v2276 = vld [vmem:[#allocation2 + $0xd8] sm:$0xff]
      %v2277 = vld [vmem:[#allocation2 + $0xe0] sm:$0xff]
      %v2278 = vld [vmem:[#allocation2 + $0xe8] sm:$0xff]
      %v2279 = vld [vmem:[#allocation2 + $0xf0] sm:$0xff]
      %v2280 = vld [vmem:[#allocation2 + $0xf8] sm:$0xff]
      %v2281 = vld [vmem:[#allocation2 + $0x100] sm:$0xff]
      %v2282 = vld [vmem:[#allocation2 + $0x108] sm:$0xff]
      %v2283 = vld [vmem:[#allocation2 + $0x110] sm:$0xff]
      %v2284 = vld [vmem:[#allocation2 + $0x118] sm:$0xff]
      %v2285 = vld [vmem:[#allocation2 + $0x120] sm:$0xff]
      %v2286 = vld [vmem:[#allocation2 + $0x128] sm:$0xff]
      %v2287 = vld [vmem:[#allocation2 + $0x130] sm:$0xff]
      %v2288 = vld [vmem:[#allocation2 + $0x138] sm:$0xff]
      %v2289 = vld [vmem:[#allocation2 + $0x140] sm:$0xff]
      %v2290 = vld [vmem:[#allocation2 + $0x148] sm:$0xff]
      %v2291 = vld [vmem:[#allocation2 + $0x150] sm:$0xff]
      %v2292 = vld [vmem:[#allocation2 + $0x158] sm:$0xff]
      %v2293 = vld [vmem:[#allocation2 + $0x160] sm:$0xff]
      %v2294 = vld [vmem:[#allocation2 + $0x168] sm:$0xff]
      %v2295 = vld [vmem:[#allocation2 + $0x170] sm:$0xff]
      %v2296 = vld [vmem:[#allocation2 + $0x178] sm:$0xff]
      %v2297 = vld [vmem:[#allocation2 + $0x180] sm:$0xff]
      %v2298 = vld [vmem:[#allocation2 + $0x188] sm:$0xff]
      %v2299 = vld [vmem:[#allocation2 + $0x190] sm:$0xff]
      %v2300 = vld [vmem:[#allocation2 + $0x198] sm:$0xff]
      %v2301 = vld [vmem:[#allocation2 + $0x1a0] sm:$0xff]
      %v2302 = vld [vmem:[#allocation2 + $0x1a8] sm:$0xff]
      %v2303 = vld [vmem:[#allocation2 + $0x1b0] sm:$0xff]
      %v2304 = vld [vmem:[#allocation2 + $0x1b8] sm:$0xff]
      %v2305 = vld [vmem:[#allocation2 + $0x1c0] sm:$0xff]
      %v2306 = vld [vmem:[#allocation2 + $0x1c8] sm:$0xff]
      %v2307 = vld [vmem:[#allocation2 + $0x1d0] sm:$0xff]
      %v2308 = vld [vmem:[#allocation2 + $0x1d8] sm:$0xff]
      %v2309 = vld [vmem:[#allocation2 + $0x1e0] sm:$0xff]
      %v2310 = vld [vmem:[#allocation2 + $0x1e8] sm:$0xff]
      %v2311 = vld [vmem:[#allocation2 + $0x1f0] sm:$0xff]
      %v2312 = vld [vmem:[#allocation2 + $0x1f8] sm:$0xff]
      %v2313 = vld [vmem:[#allocation2 + $0x200] sm:$0xff]
      %v2314 = vld [vmem:[#allocation2 + $0x208] sm:$0xff]
      %v2315 = vld [vmem:[#allocation2 + $0x210] sm:$0xff]
      %v2316 = vld [vmem:[#allocation2 + $0x218] sm:$0xff]
      %v2317 = vld [vmem:[#allocation2 + $0x220] sm:$0xff]
      %v2318 = vld [vmem:[#allocation2 + $0x228] sm:$0xff]
      %v2319 = vld [vmem:[#allocation2 + $0x230] sm:$0xff]
      %v2320 = vld [vmem:[#allocation2 + $0x238] sm:$0xff]
      %v2321 = vld [vmem:[#allocation2 + $0x240] sm:$0xff]
      %v2322 = vld [vmem:[#allocation2 + $0x248] sm:$0xff]
      %v2323 = vld [vmem:[#allocation2 + $0x250] sm:$0xff]
      %v2324 = vld [vmem:[#allocation2 + $0x258] sm:$0xff]
      %v2325 = vld [vmem:[#allocation2 + $0x260] sm:$0xff]
      %v2326 = vld [vmem:[#allocation2 + $0x268] sm:$0xff]
      %v2327 = vld [vmem:[#allocation2 + $0x270] sm:$0xff]
      %v2328 = vld [vmem:[#allocation2 + $0x278] sm:$0xff]
      %v2329 = vld [vmem:[#allocation2 + $0x280] sm:$0xff]
      %v2330 = vld [vmem:[#allocation2 + $0x288] sm:$0xff]
      %v2331 = vld [vmem:[#allocation2 + $0x290] sm:$0xff]
      %v2332 = vld [vmem:[#allocation2 + $0x298] sm:$0xff]
      %v2333 = vld [vmem:[#allocation2 + $0x2a0] sm:$0xff]
      %v2334 = vld [vmem:[#allocation2 + $0x2a8] sm:$0xff]
      %v2335 = vld [vmem:[#allocation2 + $0x2b0] sm:$0xff]
      %v2336 = vld [vmem:[#allocation2 + $0x2b8] sm:$0xff]
      %v2337 = vld [vmem:[#allocation2 + $0x2c0] sm:$0xff]
      %v2338 = vld [vmem:[#allocation2 + $0x2c8] sm:$0xff]
      %v2339 = vld [vmem:[#allocation2 + $0x2d0] sm:$0xff]
      %v2340 = vld [vmem:[#allocation2 + $0x2d8] sm:$0xff]
      %v2341 = vld [vmem:[#allocation2 + $0x2e0] sm:$0xff]
      %v2342 = vld [vmem:[#allocation2 + $0x2e8] sm:$0xff]
      %v2343 = vld [vmem:[#allocation2 + $0x2f0] sm:$0xff]
      %v2344 = vld [vmem:[#allocation2 + $0x2f8] sm:$0xff]
      %v2345 = vld [vmem:[#allocation2 + $0x300] sm:$0xff]
      %v2346 = vld [vmem:[#allocation2 + $0x308] sm:$0xff]
      %v2347 = vld [vmem:[#allocation2 + $0x310] sm:$0xff]
      %v2348 = vld [vmem:[#allocation2 + $0x318] sm:$0xff]
      %v2349 = vld [vmem:[#allocation2 + $0x320] sm:$0xff]
      %v2350 = vld [vmem:[#allocation2 + $0x328] sm:$0xff]
      %v2351 = vld [vmem:[#allocation2 + $0x330] sm:$0xff]
      %v2352 = vld [vmem:[#allocation2 + $0x338] sm:$0xff]
      %v2353 = vld [vmem:[#allocation2 + $0x340] sm:$0xff]
      %v2354 = vld [vmem:[#allocation2 + $0x348] sm:$0xff]
      %v2355 = vld [vmem:[#allocation2 + $0x350] sm:$0xff]
      %v2356 = vld [vmem:[#allocation2 + $0x358] sm:$0xff]
      %v2357 = vld [vmem:[#allocation2 + $0x360] sm:$0xff]
      %v2358 = vld [vmem:[#allocation2 + $0x368] sm:$0xff]
      %v2359 = vld [vmem:[#allocation2 + $0x370] sm:$0xff]
      %v2360 = vld [vmem:[#allocation2 + $0x378] sm:$0xff]
      %v2361 = vld [vmem:[#allocation2 + $0x380] sm:$0xff]
      %v2362 = vld [vmem:[#allocation2 + $0x388] sm:$0xff]
      %v2363 = vld [vmem:[#allocation2 + $0x390] sm:$0xff]
      %v2364 = vld [vmem:[#allocation2 + $0x398] sm:$0xff]
      %v2365 = vld [vmem:[#allocation2 + $0x3a0] sm:$0xff]
      %v2366 = vld [vmem:[#allocation2 + $0x3a8] sm:$0xff]
      %v2367 = vld [vmem:[#allocation2 + $0x3b0] sm:$0xff]
      %v2368 = vld [vmem:[#allocation2 + $0x3b8] sm:$0xff]
      %v2369 = vld [vmem:[#allocation2 + $0x3c0] sm:$0xff]
      %v2370 = vld [vmem:[#allocation2 + $0x3c8] sm:$0xff]
      %v2371 = vld [vmem:[#allocation2 + $0x3d0] sm:$0xff]
      %v2372 = vld [vmem:[#allocation2 + $0x3d8] sm:$0xff]
      %v2373 = vld [vmem:[#allocation2 + $0x3e0] sm:$0xff]
      %v2374 = vld [vmem:[#allocation2 + $0x3e8] sm:$0xff]
      %v2375 = vld [vmem:[#allocation2 + $0x3f0] sm:$0xff]
      %v2376 = vld [vmem:[#allocation2 + $0x3f8] sm:$0xff]
      %v2377 = vld [vmem:[#allocation2 + $0x400] sm:$0xff]
      %v2378 = vld [vmem:[#allocation2 + $0x408] sm:$0xff]
      %v2379 = vld [vmem:[#allocation2 + $0x410] sm:$0xff]
      %v2380 = vld [vmem:[#allocation2 + $0x418] sm:$0xff]
      %v2381 = vld [vmem:[#allocation2 + $0x420] sm:$0xff]
      %v2382 = vld [vmem:[#allocation2 + $0x428] sm:$0xff]
      %v2383 = vld [vmem:[#allocation2 + $0x430] sm:$0xff]
      %v2384 = vld [vmem:[#allocation2 + $0x438] sm:$0xff]
      %v2385 = vld [vmem:[#allocation2 + $0x440] sm:$0xff]
      %v2386 = vld [vmem:[#allocation2 + $0x448] sm:$0xff]
      %v2387 = vld [vmem:[#allocation2 + $0x450] sm:$0xff]
      %v2388 = vld [vmem:[#allocation2 + $0x458] sm:$0xff]
      %v2389 = vld [vmem:[#allocation2 + $0x460] sm:$0xff]
      %v2390 = vld [vmem:[#allocation2 + $0x468] sm:$0xff]
      %v2391 = vld [vmem:[#allocation2 + $0x470] sm:$0xff]
      %v2392 = vld [vmem:[#allocation2 + $0x478] sm:$0xff]
      %v2393 = vld [vmem:[#allocation2 + $0x480] sm:$0xff]
      %v2394 = vld [vmem:[#allocation2 + $0x488] sm:$0xff]
      %v2395 = vld [vmem:[#allocation2 + $0x490] sm:$0xff]
      %v2396 = vld [vmem:[#allocation2 + $0x498] sm:$0xff]
      %v2397 = vld [vmem:[#allocation2 + $0x4a0] sm:$0xff]
      %v2398 = vld [vmem:[#allocation2 + $0x4a8] sm:$0xff]
      %v2399 = vld [vmem:[#allocation2 + $0x4b0] sm:$0xff]
      %v2400 = vld [vmem:[#allocation2 + $0x4b8] sm:$0xff]
      %v2401 = vld [vmem:[#allocation2 + $0x4c0] sm:$0xff]
      %v2402 = vld [vmem:[#allocation2 + $0x4c8] sm:$0xff]
      %v2403 = vld [vmem:[#allocation2 + $0x4d0] sm:$0xff]
      %v2404 = vld [vmem:[#allocation2 + $0x4d8] sm:$0xff]
      %v2405 = vld [vmem:[#allocation2 + $0x4e0] sm:$0xff]
      %v2406 = vld [vmem:[#allocation2 + $0x4e8] sm:$0xff]
      %v2407 = vld [vmem:[#allocation2 + $0x4f0] sm:$0xff]
      %v2408 = vld [vmem:[#allocation2 + $0x4f8] sm:$0xff]
      %v2409 = vld [vmem:[#allocation2 + $0x500] sm:$0xff]
      %v2410 = vld [vmem:[#allocation2 + $0x508] sm:$0xff]
      %v2411 = vld [vmem:[#allocation2 + $0x510] sm:$0xff]
      %v2412 = vld [vmem:[#allocation2 + $0x518] sm:$0xff]
      %v2413 = vld [vmem:[#allocation2 + $0x520] sm:$0xff]
      %v2414 = vld [vmem:[#allocation2 + $0x528] sm:$0xff]
      %v2415 = vld [vmem:[#allocation2 + $0x530] sm:$0xff]
      %v2416 = vld [vmem:[#allocation2 + $0x538] sm:$0xff]
      %v2417 = vld [vmem:[#allocation2 + $0x540] sm:$0xff]
      %v2418 = vld [vmem:[#allocation2 + $0x548] sm:$0xff]
      %v2419 = vld [vmem:[#allocation2 + $0x550] sm:$0xff]
      %v2420 = vld [vmem:[#allocation2 + $0x558] sm:$0xff]
      %v2421 = vld [vmem:[#allocation2 + $0x560] sm:$0xff]
      %v2422 = vld [vmem:[#allocation2 + $0x568] sm:$0xff]
      %v2423 = vld [vmem:[#allocation2 + $0x570] sm:$0xff]
      %v2424 = vld [vmem:[#allocation2 + $0x578] sm:$0xff]
      %v2425 = vld [vmem:[#allocation2 + $0x580] sm:$0xff]
      %v2426 = vld [vmem:[#allocation2 + $0x588] sm:$0xff]
      %v2427 = vld [vmem:[#allocation2 + $0x590] sm:$0xff]
      %v2428 = vld [vmem:[#allocation2 + $0x598] sm:$0xff]
      %v2429 = vld [vmem:[#allocation2 + $0x5a0] sm:$0xff]
      %v2430 = vld [vmem:[#allocation2 + $0x5a8] sm:$0xff]
      %v2431 = vld [vmem:[#allocation2 + $0x5b0] sm:$0xff]
      %v2432 = vld [vmem:[#allocation2 + $0x5b8] sm:$0xff]
      %v2433 = vld [vmem:[#allocation2 + $0x5c0] sm:$0xff]
      %v2434 = vld [vmem:[#allocation2 + $0x5c8] sm:$0xff]
      %v2435 = vld [vmem:[#allocation2 + $0x5d0] sm:$0xff]
      %v2436 = vld [vmem:[#allocation2 + $0x5d8] sm:$0xff]
      %v2437 = vld [vmem:[#allocation2 + $0x5e0] sm:$0xff]
      %v2438 = vld [vmem:[#allocation2 + $0x5e8] sm:$0xff]
      %v2439 = vld [vmem:[#allocation2 + $0x5f0] sm:$0xff]
      %v2440 = vld [vmem:[#allocation2 + $0x5f8] sm:$0xff]
      %v2441 = vld [vmem:[#allocation2 + $0x600] sm:$0xff]
      %v2442 = vld [vmem:[#allocation2 + $0x608] sm:$0xff]
      %v2443 = vld [vmem:[#allocation2 + $0x610] sm:$0xff]
      %v2444 = vld [vmem:[#allocation2 + $0x618] sm:$0xff]
      %v2445 = vld [vmem:[#allocation2 + $0x620] sm:$0xff]
      %v2446 = vld [vmem:[#allocation2 + $0x628] sm:$0xff]
      %v2447 = vld [vmem:[#allocation2 + $0x630] sm:$0xff]
      %v2448 = vld [vmem:[#allocation2 + $0x638] sm:$0xff]
      %v2449 = vld [vmem:[#allocation2 + $0x640] sm:$0xff]
      %v2450 = vld [vmem:[#allocation2 + $0x648] sm:$0xff]
      %v2451 = vld [vmem:[#allocation2 + $0x650] sm:$0xff]
      %v2452 = vld [vmem:[#allocation2 + $0x658] sm:$0xff]
      %v2453 = vld [vmem:[#allocation2 + $0x660] sm:$0xff]
      %v2454 = vld [vmem:[#allocation2 + $0x668] sm:$0xff]
      %v2455 = vld [vmem:[#allocation2 + $0x670] sm:$0xff]
      %v2456 = vld [vmem:[#allocation2 + $0x678] sm:$0xff]
      %v2457 = vld [vmem:[#allocation2 + $0x680] sm:$0xff]
      %v2458 = vld [vmem:[#allocation2 + $0x688] sm:$0xff]
      %v2459 = vld [vmem:[#allocation2 + $0x690] sm:$0xff]
      %v2460 = vld [vmem:[#allocation2 + $0x698] sm:$0xff]
      %v2461 = vld [vmem:[#allocation2 + $0x6a0] sm:$0xff]
      %v2462 = vld [vmem:[#allocation2 + $0x6a8] sm:$0xff]
      %v2463 = vld [vmem:[#allocation2 + $0x6b0] sm:$0xff]
      %v2464 = vld [vmem:[#allocation2 + $0x6b8] sm:$0xff]
      %v2465 = vld [vmem:[#allocation2 + $0x6c0] sm:$0xff]
      %v2466 = vld [vmem:[#allocation2 + $0x6c8] sm:$0xff]
      %v2467 = vld [vmem:[#allocation2 + $0x6d0] sm:$0xff]
      %v2468 = vld [vmem:[#allocation2 + $0x6d8] sm:$0xff]
      %v2469 = vld [vmem:[#allocation2 + $0x6e0] sm:$0xff]
      %v2470 = vld [vmem:[#allocation2 + $0x6e8] sm:$0xff]
      %v2471 = vld [vmem:[#allocation2 + $0x6f0] sm:$0xff]
      %v2472 = vld [vmem:[#allocation2 + $0x6f8] sm:$0xff]
      %v2473 = vld [vmem:[#allocation2 + $0x700] sm:$0xff]
      %v2474 = vld [vmem:[#allocation2 + $0x708] sm:$0xff]
      %v2475 = vld [vmem:[#allocation2 + $0x710] sm:$0xff]
      %v2476 = vld [vmem:[#allocation2 + $0x718] sm:$0xff]
      %v2477 = vld [vmem:[#allocation2 + $0x720] sm:$0xff]
      %v2478 = vld [vmem:[#allocation2 + $0x728] sm:$0xff]
      %v2479 = vld [vmem:[#allocation2 + $0x730] sm:$0xff]
      %v2480 = vld [vmem:[#allocation2 + $0x738] sm:$0xff]
      %v2481 = vld [vmem:[#allocation2 + $0x740] sm:$0xff]
      %v2482 = vld [vmem:[#allocation2 + $0x748] sm:$0xff]
      %v2483 = vld [vmem:[#allocation2 + $0x750] sm:$0xff]
      %v2484 = vld [vmem:[#allocation2 + $0x758] sm:$0xff]
      %v2485 = vld [vmem:[#allocation2 + $0x760] sm:$0xff]
      %v2486 = vld [vmem:[#allocation2 + $0x768] sm:$0xff]
      %v2487 = vld [vmem:[#allocation2 + $0x770] sm:$0xff]
      %v2488 = vld [vmem:[#allocation2 + $0x778] sm:$0xff]
      %v2489 = vld [vmem:[#allocation2 + $0x780] sm:$0xff]
      %v2490 = vld [vmem:[#allocation2 + $0x788] sm:$0xff]
      %v2491 = vld [vmem:[#allocation2 + $0x790] sm:$0xff]
      %v2492 = vld [vmem:[#allocation2 + $0x798] sm:$0xff]
      %v2493 = vld [vmem:[#allocation2 + $0x7a0] sm:$0xff]
      %v2494 = vld [vmem:[#allocation2 + $0x7a8] sm:$0xff]
      %v2495 = vld [vmem:[#allocation2 + $0x7b0] sm:$0xff]
      %v2496 = vld [vmem:[#allocation2 + $0x7b8] sm:$0xff]
      %v2497 = vld [vmem:[#allocation2 + $0x7c0] sm:$0xff]
      %v2498 = vld [vmem:[#allocation2 + $0x7c8] sm:$0xff]
      %v2499 = vld [vmem:[#allocation2 + $0x7d0] sm:$0xff]
      %v2500 = vld [vmem:[#allocation2 + $0x7d8] sm:$0xff]
      %v2501 = vld [vmem:[#allocation2 + $0x7e0] sm:$0xff]
      %v2502 = vld [vmem:[#allocation2 + $0x7e8] sm:$0xff]
      %v2503 = vld [vmem:[#allocation2 + $0x7f0] sm:$0xff]
      %v2504 = vld [vmem:[#allocation2 + $0x7f8] sm:$0xff]
      %v2507 = vunpack.c.l.b16 %v2247
      %v2508 = vunpack.c.h.b16 %v2247
      %v2509 = vunpack.c.l.b16 %v2248
      %v2510 = vunpack.c.h.b16 %v2248
      %v2511 = vpack.c.b16 %v2507, %v2507
      %v2512 = vpack.c.b16 %v2508, %v2508
      %v2513 = vpack.c.b16 %v2509, %v2509
      %v2514 = vpack.c.b16 %v2510, %v2510
      %v2775 = vunpack.c.l.b16 %v2249
      %v2776 = vunpack.c.h.b16 %v2249
      %v2777 = vunpack.c.l.b16 %v2250
      %v2778 = vunpack.c.h.b16 %v2250
      %v2779 = vunpack.c.l.b16 %v2251
      %v2780 = vunpack.c.h.b16 %v2251
      %v2781 = vunpack.c.l.b16 %v2252
      %v2782 = vunpack.c.h.b16 %v2252
      %v2783 = vunpack.c.l.b16 %v2253
      %v2784 = vunpack.c.h.b16 %v2253
      %v2785 = vunpack.c.l.b16 %v2254
      %v2786 = vunpack.c.h.b16 %v2254
      %v2787 = vunpack.c.l.b16 %v2255
      %v2788 = vunpack.c.h.b16 %v2255
      %v2789 = vunpack.c.l.b16 %v2256
      %v2790 = vunpack.c.h.b16 %v2256
      %v2791 = vunpack.c.l.b16 %v2257
      %v2792 = vunpack.c.h.b16 %v2257
      %v2793 = vunpack.c.l.b16 %v2258
      %v2794 = vunpack.c.h.b16 %v2258
      %v2795 = vunpack.c.l.b16 %v2259
      %v2796 = vunpack.c.h.b16 %v2259
      %v2797 = vunpack.c.l.b16 %v2260
      %v2798 = vunpack.c.h.b16 %v2260
      %v2799 = vunpack.c.l.b16 %v2261
      %v2800 = vunpack.c.h.b16 %v2261
      %v2801 = vunpack.c.l.b16 %v2262
      %v2802 = vunpack.c.h.b16 %v2262
      %v2803 = vunpack.c.l.b16 %v2263
      %v2804 = vunpack.c.h.b16 %v2263
      %v2805 = vunpack.c.l.b16 %v2264
      %v2806 = vunpack.c.h.b16 %v2264
      %v2807 = vunpack.c.l.b16 %v2265
      %v2808 = vunpack.c.h.b16 %v2265
      %v2809 = vunpack.c.l.b16 %v2266
      %v2810 = vunpack.c.h.b16 %v2266
      %v2811 = vunpack.c.l.b16 %v2267
      %v2812 = vunpack.c.h.b16 %v2267
      %v2813 = vunpack.c.l.b16 %v2268
      %v2814 = vunpack.c.h.b16 %v2268
      %v2815 = vunpack.c.l.b16 %v2269
      %v2816 = vunpack.c.h.b16 %v2269
      %v2817 = vunpack.c.l.b16 %v2270
      %v2818 = vunpack.c.h.b16 %v2270
      %v2819 = vunpack.c.l.b16 %v2271
      %v2820 = vunpack.c.h.b16 %v2271
      %v2821 = vunpack.c.l.b16 %v2272
      %v2822 = vunpack.c.h.b16 %v2272
      %v2823 = vunpack.c.l.b16 %v2273
      %v2824 = vunpack.c.h.b16 %v2273
      %v2825 = vunpack.c.l.b16 %v2274
      %v2826 = vunpack.c.h.b16 %v2274
      %v2827 = vunpack.c.l.b16 %v2275
      %v2828 = vunpack.c.h.b16 %v2275
      %v2829 = vunpack.c.l.b16 %v2276
      %v2830 = vunpack.c.h.b16 %v2276
      %v2831 = vunpack.c.l.b16 %v2277
      %v2832 = vunpack.c.h.b16 %v2277
      %v2833 = vunpack.c.l.b16 %v2278
      %v2834 = vunpack.c.h.b16 %v2278
      %v2835 = vunpack.c.l.b16 %v2279
      %v2836 = vunpack.c.h.b16 %v2279
      %v2837 = vunpack.c.l.b16 %v2280
      %v2838 = vunpack.c.h.b16 %v2280
      %v2839 = vunpack.c.l.b16 %v2281
      %v2840 = vunpack.c.h.b16 %v2281
      %v2841 = vunpack.c.l.b16 %v2282
      %v2842 = vunpack.c.h.b16 %v2282
      %v2843 = vunpack.c.l.b16 %v2283
      %v2844 = vunpack.c.h.b16 %v2283
      %v2845 = vunpack.c.l.b16 %v2284
      %v2846 = vunpack.c.h.b16 %v2284
      %v2847 = vunpack.c.l.b16 %v2285
      %v2848 = vunpack.c.h.b16 %v2285
      %v2849 = vunpack.c.l.b16 %v2286
      %v2850 = vunpack.c.h.b16 %v2286
      %v2851 = vunpack.c.l.b16 %v2287
      %v2852 = vunpack.c.h.b16 %v2287
      %v2853 = vunpack.c.l.b16 %v2288
      %v2854 = vunpack.c.h.b16 %v2288
      %v2855 = vunpack.c.l.b16 %v2289
      %v2856 = vunpack.c.h.b16 %v2289
      %v2857 = vunpack.c.l.b16 %v2290
      %v2858 = vunpack.c.h.b16 %v2290
      %v2859 = vunpack.c.l.b16 %v2291
      %v2860 = vunpack.c.h.b16 %v2291
      %v2861 = vunpack.c.l.b16 %v2292
      %v2862 = vunpack.c.h.b16 %v2292
      %v2863 = vunpack.c.l.b16 %v2293
      %v2864 = vunpack.c.h.b16 %v2293
      %v2865 = vunpack.c.l.b16 %v2294
      %v2866 = vunpack.c.h.b16 %v2294
      %v2867 = vunpack.c.l.b16 %v2295
      %v2868 = vunpack.c.h.b16 %v2295
      %v2869 = vunpack.c.l.b16 %v2296
      %v2870 = vunpack.c.h.b16 %v2296
      %v2871 = vunpack.c.l.b16 %v2297
      %v2872 = vunpack.c.h.b16 %v2297
      %v2873 = vunpack.c.l.b16 %v2298
      %v2874 = vunpack.c.h.b16 %v2298
      %v2875 = vunpack.c.l.b16 %v2299
      %v2876 = vunpack.c.h.b16 %v2299
      %v2877 = vunpack.c.l.b16 %v2300
      %v2878 = vunpack.c.h.b16 %v2300
      %v2879 = vunpack.c.l.b16 %v2301
      %v2880 = vunpack.c.h.b16 %v2301
      %v2881 = vunpack.c.l.b16 %v2302
      %v2882 = vunpack.c.h.b16 %v2302
      %v2883 = vunpack.c.l.b16 %v2303
      %v2884 = vunpack.c.h.b16 %v2303
      %v2885 = vunpack.c.l.b16 %v2304
      %v2886 = vunpack.c.h.b16 %v2304
      %v2887 = vunpack.c.l.b16 %v2305
      %v2888 = vunpack.c.h.b16 %v2305
      %v2889 = vunpack.c.l.b16 %v2306
      %v2890 = vunpack.c.h.b16 %v2306
      %v2891 = vunpack.c.l.b16 %v2307
      %v2892 = vunpack.c.h.b16 %v2307
      %v2893 = vunpack.c.l.b16 %v2308
      %v2894 = vunpack.c.h.b16 %v2308
      %v2895 = vunpack.c.l.b16 %v2309
      %v2896 = vunpack.c.h.b16 %v2309
      %v2897 = vunpack.c.l.b16 %v2310
      %v2898 = vunpack.c.h.b16 %v2310
      %v2899 = vunpack.c.l.b16 %v2311
      %v2900 = vunpack.c.h.b16 %v2311
      %v2901 = vunpack.c.l.b16 %v2312
      %v2902 = vunpack.c.h.b16 %v2312
      %v2903 = vunpack.c.l.b16 %v2313
      %v2904 = vunpack.c.h.b16 %v2313
      %v2905 = vunpack.c.l.b16 %v2314
      %v2906 = vunpack.c.h.b16 %v2314
      %v2907 = vunpack.c.l.b16 %v2315
      %v2908 = vunpack.c.h.b16 %v2315
      %v2909 = vunpack.c.l.b16 %v2316
      %v2910 = vunpack.c.h.b16 %v2316
      %v2911 = vunpack.c.l.b16 %v2317
      %v2912 = vunpack.c.h.b16 %v2317
      %v2913 = vunpack.c.l.b16 %v2318
      %v2914 = vunpack.c.h.b16 %v2318
      %v2915 = vunpack.c.l.b16 %v2319
      %v2916 = vunpack.c.h.b16 %v2319
      %v2917 = vunpack.c.l.b16 %v2320
      %v2918 = vunpack.c.h.b16 %v2320
      %v2919 = vunpack.c.l.b16 %v2321
      %v2920 = vunpack.c.h.b16 %v2321
      %v2921 = vunpack.c.l.b16 %v2322
      %v2922 = vunpack.c.h.b16 %v2322
      %v2923 = vunpack.c.l.b16 %v2323
      %v2924 = vunpack.c.h.b16 %v2323
      %v2925 = vunpack.c.l.b16 %v2324
      %v2926 = vunpack.c.h.b16 %v2324
      %v2927 = vunpack.c.l.b16 %v2325
      %v2928 = vunpack.c.h.b16 %v2325
      %v2929 = vunpack.c.l.b16 %v2326
      %v2930 = vunpack.c.h.b16 %v2326
      %v2931 = vunpack.c.l.b16 %v2327
      %v2932 = vunpack.c.h.b16 %v2327
      %v2933 = vunpack.c.l.b16 %v2328
      %v2934 = vunpack.c.h.b16 %v2328
      %v2935 = vunpack.c.l.b16 %v2329
      %v2936 = vunpack.c.h.b16 %v2329
      %v2937 = vunpack.c.l.b16 %v2330
      %v2938 = vunpack.c.h.b16 %v2330
      %v2939 = vunpack.c.l.b16 %v2331
      %v2940 = vunpack.c.h.b16 %v2331
      %v2941 = vunpack.c.l.b16 %v2332
      %v2942 = vunpack.c.h.b16 %v2332
      %v2943 = vunpack.c.l.b16 %v2333
      %v2944 = vunpack.c.h.b16 %v2333
      %v2945 = vunpack.c.l.b16 %v2334
      %v2946 = vunpack.c.h.b16 %v2334
      %v2947 = vunpack.c.l.b16 %v2335
      %v2948 = vunpack.c.h.b16 %v2335
      %v2949 = vunpack.c.l.b16 %v2336
      %v2950 = vunpack.c.h.b16 %v2336
      %v2951 = vunpack.c.l.b16 %v2337
      %v2952 = vunpack.c.h.b16 %v2337
      %v2953 = vunpack.c.l.b16 %v2338
      %v2954 = vunpack.c.h.b16 %v2338
      %v2955 = vunpack.c.l.b16 %v2339
      %v2956 = vunpack.c.h.b16 %v2339
      %v2957 = vunpack.c.l.b16 %v2340
      %v2958 = vunpack.c.h.b16 %v2340
      %v2959 = vunpack.c.l.b16 %v2341
      %v2960 = vunpack.c.h.b16 %v2341
      %v2961 = vunpack.c.l.b16 %v2342
      %v2962 = vunpack.c.h.b16 %v2342
      %v2963 = vunpack.c.l.b16 %v2343
      %v2964 = vunpack.c.h.b16 %v2343
      %v2965 = vunpack.c.l.b16 %v2344
      %v2966 = vunpack.c.h.b16 %v2344
      %v2967 = vunpack.c.l.b16 %v2345
      %v2968 = vunpack.c.h.b16 %v2345
      %v2969 = vunpack.c.l.b16 %v2346
      %v2970 = vunpack.c.h.b16 %v2346
      %v2971 = vunpack.c.l.b16 %v2347
      %v2972 = vunpack.c.h.b16 %v2347
      %v2973 = vunpack.c.l.b16 %v2348
      %v2974 = vunpack.c.h.b16 %v2348
      %v2975 = vunpack.c.l.b16 %v2349
      %v2976 = vunpack.c.h.b16 %v2349
      %v2977 = vunpack.c.l.b16 %v2350
      %v2978 = vunpack.c.h.b16 %v2350
      %v2979 = vunpack.c.l.b16 %v2351
      %v2980 = vunpack.c.h.b16 %v2351
      %v2981 = vunpack.c.l.b16 %v2352
      %v2982 = vunpack.c.h.b16 %v2352
      %v2983 = vunpack.c.l.b16 %v2353
      %v2984 = vunpack.c.h.b16 %v2353
      %v2985 = vunpack.c.l.b16 %v2354
      %v2986 = vunpack.c.h.b16 %v2354
      %v2987 = vunpack.c.l.b16 %v2355
      %v2988 = vunpack.c.h.b16 %v2355
      %v2989 = vunpack.c.l.b16 %v2356
      %v2990 = vunpack.c.h.b16 %v2356
      %v2991 = vunpack.c.l.b16 %v2357
      %v2992 = vunpack.c.h.b16 %v2357
      %v2993 = vunpack.c.l.b16 %v2358
      %v2994 = vunpack.c.h.b16 %v2358
      %v2995 = vunpack.c.l.b16 %v2359
      %v2996 = vunpack.c.h.b16 %v2359
      %v2997 = vunpack.c.l.b16 %v2360
      %v2998 = vunpack.c.h.b16 %v2360
      %v2999 = vunpack.c.l.b16 %v2361
      %v3000 = vunpack.c.h.b16 %v2361
      %v3001 = vunpack.c.l.b16 %v2362
      %v3002 = vunpack.c.h.b16 %v2362
      %v3003 = vunpack.c.l.b16 %v2363
      %v3004 = vunpack.c.h.b16 %v2363
      %v3005 = vunpack.c.l.b16 %v2364
      %v3006 = vunpack.c.h.b16 %v2364
      %v3007 = vunpack.c.l.b16 %v2365
      %v3008 = vunpack.c.h.b16 %v2365
      %v3009 = vunpack.c.l.b16 %v2366
      %v3010 = vunpack.c.h.b16 %v2366
      %v3011 = vunpack.c.l.b16 %v2367
      %v3012 = vunpack.c.h.b16 %v2367
      %v3013 = vunpack.c.l.b16 %v2368
      %v3014 = vunpack.c.h.b16 %v2368
      %v3015 = vunpack.c.l.b16 %v2369
      %v3016 = vunpack.c.h.b16 %v2369
      %v3017 = vunpack.c.l.b16 %v2370
      %v3018 = vunpack.c.h.b16 %v2370
      %v3019 = vunpack.c.l.b16 %v2371
      %v3020 = vunpack.c.h.b16 %v2371
      %v3021 = vunpack.c.l.b16 %v2372
      %v3022 = vunpack.c.h.b16 %v2372
      %v3023 = vunpack.c.l.b16 %v2373
      %v3024 = vunpack.c.h.b16 %v2373
      %v3025 = vunpack.c.l.b16 %v2374
      %v3026 = vunpack.c.h.b16 %v2374
      %v3027 = vunpack.c.l.b16 %v2375
      %v3028 = vunpack.c.h.b16 %v2375
      %v3029 = vunpack.c.l.b16 %v2376
      %v3030 = vunpack.c.h.b16 %v2376
      %v3031 = vunpack.c.l.b16 %v2377
      %v3032 = vunpack.c.h.b16 %v2377
      %v3033 = vunpack.c.l.b16 %v2378
      %v3034 = vunpack.c.h.b16 %v2378
      %v3035 = vunpack.c.l.b16 %v2379
      %v3036 = vunpack.c.h.b16 %v2379
      %v3037 = vunpack.c.l.b16 %v2380
      %v3038 = vunpack.c.h.b16 %v2380
      %v3039 = vunpack.c.l.b16 %v2381
      %v3040 = vunpack.c.h.b16 %v2381
      %v3041 = vunpack.c.l.b16 %v2382
      %v3042 = vunpack.c.h.b16 %v2382
      %v3043 = vunpack.c.l.b16 %v2383
      %v3044 = vunpack.c.h.b16 %v2383
      %v3045 = vunpack.c.l.b16 %v2384
      %v3046 = vunpack.c.h.b16 %v2384
      %v3047 = vunpack.c.l.b16 %v2385
      %v3048 = vunpack.c.h.b16 %v2385
      %v3049 = vunpack.c.l.b16 %v2386
      %v3050 = vunpack.c.h.b16 %v2386
      %v3051 = vunpack.c.l.b16 %v2387
      %v3052 = vunpack.c.h.b16 %v2387
      %v3053 = vunpack.c.l.b16 %v2388
      %v3054 = vunpack.c.h.b16 %v2388
      %v3055 = vunpack.c.l.b16 %v2389
      %v3056 = vunpack.c.h.b16 %v2389
      %v3057 = vunpack.c.l.b16 %v2390
      %v3058 = vunpack.c.h.b16 %v2390
      %v3059 = vunpack.c.l.b16 %v2391
      %v3060 = vunpack.c.h.b16 %v2391
      %v3061 = vunpack.c.l.b16 %v2392
      %v3062 = vunpack.c.h.b16 %v2392
      %v3063 = vunpack.c.l.b16 %v2393
      %v3064 = vunpack.c.h.b16 %v2393
      %v3065 = vunpack.c.l.b16 %v2394
      %v3066 = vunpack.c.h.b16 %v2394
      %v3067 = vunpack.c.l.b16 %v2395
      %v3068 = vunpack.c.h.b16 %v2395
      %v3069 = vunpack.c.l.b16 %v2396
      %v3070 = vunpack.c.h.b16 %v2396
      %v3071 = vunpack.c.l.b16 %v2397
      %v3072 = vunpack.c.h.b16 %v2397
      %v3073 = vunpack.c.l.b16 %v2398
      %v3074 = vunpack.c.h.b16 %v2398
      %v3075 = vunpack.c.l.b16 %v2399
      %v3076 = vunpack.c.h.b16 %v2399
      %v3077 = vunpack.c.l.b16 %v2400
      %v3078 = vunpack.c.h.b16 %v2400
      %v3079 = vunpack.c.l.b16 %v2401
      %v3080 = vunpack.c.h.b16 %v2401
      %v3081 = vunpack.c.l.b16 %v2402
      %v3082 = vunpack.c.h.b16 %v2402
      %v3083 = vunpack.c.l.b16 %v2403
      %v3084 = vunpack.c.h.b16 %v2403
      %v3085 = vunpack.c.l.b16 %v2404
      %v3086 = vunpack.c.h.b16 %v2404
      %v3087 = vunpack.c.l.b16 %v2405
      %v3088 = vunpack.c.h.b16 %v2405
      %v3089 = vunpack.c.l.b16 %v2406
      %v3090 = vunpack.c.h.b16 %v2406
      %v3091 = vunpack.c.l.b16 %v2407
      %v3092 = vunpack.c.h.b16 %v2407
      %v3093 = vunpack.c.l.b16 %v2408
      %v3094 = vunpack.c.h.b16 %v2408
      %v3095 = vunpack.c.l.b16 %v2409
      %v3096 = vunpack.c.h.b16 %v2409
      %v3097 = vunpack.c.l.b16 %v2410
      %v3098 = vunpack.c.h.b16 %v2410
      %v3099 = vunpack.c.l.b16 %v2411
      %v3100 = vunpack.c.h.b16 %v2411
      %v3101 = vunpack.c.l.b16 %v2412
      %v3102 = vunpack.c.h.b16 %v2412
      %v3103 = vunpack.c.l.b16 %v2413
      %v3104 = vunpack.c.h.b16 %v2413
      %v3105 = vunpack.c.l.b16 %v2414
      %v3106 = vunpack.c.h.b16 %v2414
      %v3107 = vunpack.c.l.b16 %v2415
      %v3108 = vunpack.c.h.b16 %v2415
      %v3109 = vunpack.c.l.b16 %v2416
      %v3110 = vunpack.c.h.b16 %v2416
      %v3111 = vunpack.c.l.b16 %v2417
      %v3112 = vunpack.c.h.b16 %v2417
      %v3113 = vunpack.c.l.b16 %v2418
      %v3114 = vunpack.c.h.b16 %v2418
      %v3115 = vunpack.c.l.b16 %v2419
      %v3116 = vunpack.c.h.b16 %v2419
      %v3117 = vunpack.c.l.b16 %v2420
      %v3118 = vunpack.c.h.b16 %v2420
      %v3119 = vunpack.c.l.b16 %v2421
      %v3120 = vunpack.c.h.b16 %v2421
      %v3121 = vunpack.c.l.b16 %v2422
      %v3122 = vunpack.c.h.b16 %v2422
      %v3123 = vunpack.c.l.b16 %v2423
      %v3124 = vunpack.c.h.b16 %v2423
      %v3125 = vunpack.c.l.b16 %v2424
      %v3126 = vunpack.c.h.b16 %v2424
      %v3127 = vunpack.c.l.b16 %v2425
      %v3128 = vunpack.c.h.b16 %v2425
      %v3129 = vunpack.c.l.b16 %v2426
      %v3130 = vunpack.c.h.b16 %v2426
      %v3131 = vunpack.c.l.b16 %v2427
      %v3132 = vunpack.c.h.b16 %v2427
      %v3133 = vunpack.c.l.b16 %v2428
      %v3134 = vunpack.c.h.b16 %v2428
      %v3135 = vunpack.c.l.b16 %v2429
      %v3136 = vunpack.c.h.b16 %v2429
      %v3137 = vunpack.c.l.b16 %v2430
      %v3138 = vunpack.c.h.b16 %v2430
      %v3139 = vunpack.c.l.b16 %v2431
      %v3140 = vunpack.c.h.b16 %v2431
      %v3141 = vunpack.c.l.b16 %v2432
      %v3142 = vunpack.c.h.b16 %v2432
      %v3143 = vunpack.c.l.b16 %v2433
      %v3144 = vunpack.c.h.b16 %v2433
      %v3145 = vunpack.c.l.b16 %v2434
      %v3146 = vunpack.c.h.b16 %v2434
      %v3147 = vunpack.c.l.b16 %v2435
      %v3148 = vunpack.c.h.b16 %v2435
      %v3149 = vunpack.c.l.b16 %v2436
      %v3150 = vunpack.c.h.b16 %v2436
      %v3151 = vunpack.c.l.b16 %v2437
      %v3152 = vunpack.c.h.b16 %v2437
      %v3153 = vunpack.c.l.b16 %v2438
      %v3154 = vunpack.c.h.b16 %v2438
      %v3155 = vunpack.c.l.b16 %v2439
      %v3156 = vunpack.c.h.b16 %v2439
      %v3157 = vunpack.c.l.b16 %v2440
      %v3158 = vunpack.c.h.b16 %v2440
      %v3159 = vunpack.c.l.b16 %v2441
      %v3160 = vunpack.c.h.b16 %v2441
      %v3161 = vunpack.c.l.b16 %v2442
      %v3162 = vunpack.c.h.b16 %v2442
      %v3163 = vunpack.c.l.b16 %v2443
      %v3164 = vunpack.c.h.b16 %v2443
      %v3165 = vunpack.c.l.b16 %v2444
      %v3166 = vunpack.c.h.b16 %v2444
      %v3167 = vunpack.c.l.b16 %v2445
      %v3168 = vunpack.c.h.b16 %v2445
      %v3169 = vunpack.c.l.b16 %v2446
      %v3170 = vunpack.c.h.b16 %v2446
      %v3171 = vunpack.c.l.b16 %v2447
      %v3172 = vunpack.c.h.b16 %v2447
      %v3173 = vunpack.c.l.b16 %v2448
      %v3174 = vunpack.c.h.b16 %v2448
      %v3175 = vunpack.c.l.b16 %v2449
      %v3176 = vunpack.c.h.b16 %v2449
      %v3177 = vunpack.c.l.b16 %v2450
      %v3178 = vunpack.c.h.b16 %v2450
      %v3179 = vunpack.c.l.b16 %v2451
      %v3180 = vunpack.c.h.b16 %v2451
      %v3181 = vunpack.c.l.b16 %v2452
      %v3182 = vunpack.c.h.b16 %v2452
      %v3183 = vunpack.c.l.b16 %v2453
      %v3184 = vunpack.c.h.b16 %v2453
      %v3185 = vunpack.c.l.b16 %v2454
      %v3186 = vunpack.c.h.b16 %v2454
      %v3187 = vunpack.c.l.b16 %v2455
      %v3188 = vunpack.c.h.b16 %v2455
      %v3189 = vunpack.c.l.b16 %v2456
      %v3190 = vunpack.c.h.b16 %v2456
      %v3191 = vunpack.c.l.b16 %v2457
      %v3192 = vunpack.c.h.b16 %v2457
      %v3193 = vunpack.c.l.b16 %v2458
      %v3194 = vunpack.c.h.b16 %v2458
      %v3195 = vunpack.c.l.b16 %v2459
      %v3196 = vunpack.c.h.b16 %v2459
      %v3197 = vunpack.c.l.b16 %v2460
      %v3198 = vunpack.c.h.b16 %v2460
      %v3199 = vunpack.c.l.b16 %v2461
      %v3200 = vunpack.c.h.b16 %v2461
      %v3201 = vunpack.c.l.b16 %v2462
      %v3202 = vunpack.c.h.b16 %v2462
      %v3203 = vunpack.c.l.b16 %v2463
      %v3204 = vunpack.c.h.b16 %v2463
      %v3205 = vunpack.c.l.b16 %v2464
      %v3206 = vunpack.c.h.b16 %v2464
      %v3207 = vunpack.c.l.b16 %v2465
      %v3208 = vunpack.c.h.b16 %v2465
      %v3209 = vunpack.c.l.b16 %v2466
      %v3210 = vunpack.c.h.b16 %v2466
      %v3211 = vunpack.c.l.b16 %v2467
      %v3212 = vunpack.c.h.b16 %v2467
      %v3213 = vunpack.c.l.b16 %v2468
      %v3214 = vunpack.c.h.b16 %v2468
      %v3215 = vunpack.c.l.b16 %v2469
      %v3216 = vunpack.c.h.b16 %v2469
      %v3217 = vunpack.c.l.b16 %v2470
      %v3218 = vunpack.c.h.b16 %v2470
      %v3219 = vunpack.c.l.b16 %v2471
      %v3220 = vunpack.c.h.b16 %v2471
      %v3221 = vunpack.c.l.b16 %v2472
      %v3222 = vunpack.c.h.b16 %v2472
      %v3223 = vunpack.c.l.b16 %v2473
      %v3224 = vunpack.c.h.b16 %v2473
      %v3225 = vunpack.c.l.b16 %v2474
      %v3226 = vunpack.c.h.b16 %v2474
      %v3227 = vunpack.c.l.b16 %v2475
      %v3228 = vunpack.c.h.b16 %v2475
      %v3229 = vunpack.c.l.b16 %v2476
      %v3230 = vunpack.c.h.b16 %v2476
      %v3231 = vunpack.c.l.b16 %v2477
      %v3232 = vunpack.c.h.b16 %v2477
      %v3233 = vunpack.c.l.b16 %v2478
      %v3234 = vunpack.c.h.b16 %v2478
      %v3235 = vunpack.c.l.b16 %v2479
      %v3236 = vunpack.c.h.b16 %v2479
      %v3237 = vunpack.c.l.b16 %v2480
      %v3238 = vunpack.c.h.b16 %v2480
      %v3239 = vunpack.c.l.b16 %v2481
      %v3240 = vunpack.c.h.b16 %v2481
      %v3241 = vunpack.c.l.b16 %v2482
      %v3242 = vunpack.c.h.b16 %v2482
      %v3243 = vunpack.c.l.b16 %v2483
      %v3244 = vunpack.c.h.b16 %v2483
      %v3245 = vunpack.c.l.b16 %v2484
      %v3246 = vunpack.c.h.b16 %v2484
      %v3247 = vunpack.c.l.b16 %v2485
      %v3248 = vunpack.c.h.b16 %v2485
      %v3249 = vunpack.c.l.b16 %v2486
      %v3250 = vunpack.c.h.b16 %v2486
      %v3251 = vunpack.c.l.b16 %v2487
      %v3252 = vunpack.c.h.b16 %v2487
      %v3253 = vunpack.c.l.b16 %v2488
      %v3254 = vunpack.c.h.b16 %v2488
      %v3255 = vunpack.c.l.b16 %v2489
      %v3256 = vunpack.c.h.b16 %v2489
      %v3257 = vunpack.c.l.b16 %v2490
      %v3258 = vunpack.c.h.b16 %v2490
      %v3259 = vunpack.c.l.b16 %v2491
      %v3260 = vunpack.c.h.b16 %v2491
      %v3261 = vunpack.c.l.b16 %v2492
      %v3262 = vunpack.c.h.b16 %v2492
      %v3263 = vunpack.c.l.b16 %v2493
      %v3264 = vunpack.c.h.b16 %v2493
      %v3265 = vunpack.c.l.b16 %v2494
      %v3266 = vunpack.c.h.b16 %v2494
      %v3267 = vunpack.c.l.b16 %v2495
      %v3268 = vunpack.c.h.b16 %v2495
      %v3269 = vunpack.c.l.b16 %v2496
      %v3270 = vunpack.c.h.b16 %v2496
      %v3271 = vunpack.c.l.b16 %v2497
      %v3272 = vunpack.c.h.b16 %v2497
      %v3273 = vunpack.c.l.b16 %v2498
      %v3274 = vunpack.c.h.b16 %v2498
      %v3275 = vunpack.c.l.b16 %v2499
      %v3276 = vunpack.c.h.b16 %v2499
      %v3277 = vunpack.c.l.b16 %v2500
      %v3278 = vunpack.c.h.b16 %v2500
      %v3279 = vunpack.c.l.b16 %v2501
      %v3280 = vunpack.c.h.b16 %v2501
      %v3281 = vunpack.c.l.b16 %v2502
      %v3282 = vunpack.c.h.b16 %v2502
      %v3283 = vunpack.c.l.b16 %v2503
      %v3284 = vunpack.c.h.b16 %v2503
      %v3285 = vunpack.c.l.b16 %v2504
      %v3286 = vunpack.c.h.b16 %v2504
      %v3287 = vpack.c.b16 %v2783, %v2775
      %v3288 = vpack.c.b16 %v2784, %v2776
      %v3289 = vpack.c.b16 %v2785, %v2777
      %v3290 = vpack.c.b16 %v2786, %v2778
      %v3291 = vpack.c.b16 %v2787, %v2779
      %v3292 = vpack.c.b16 %v2788, %v2780
      %v3293 = vpack.c.b16 %v2789, %v2781
      %v3294 = vpack.c.b16 %v2790, %v2782
      %v3295 = vpack.c.b16 %v2799, %v2791
      %v3296 = vpack.c.b16 %v2800, %v2792
      %v3297 = vpack.c.b16 %v2801, %v2793
      %v3298 = vpack.c.b16 %v2802, %v2794
      %v3299 = vpack.c.b16 %v2803, %v2795
      %v3300 = vpack.c.b16 %v2804, %v2796
      %v3301 = vpack.c.b16 %v2805, %v2797
      %v3302 = vpack.c.b16 %v2806, %v2798
      %v3303 = vpack.c.b16 %v2815, %v2807
      %v3304 = vpack.c.b16 %v2816, %v2808
      %v3305 = vpack.c.b16 %v2817, %v2809
      %v3306 = vpack.c.b16 %v2818, %v2810
      %v3307 = vpack.c.b16 %v2819, %v2811
      %v3308 = vpack.c.b16 %v2820, %v2812
      %v3309 = vpack.c.b16 %v2821, %v2813
      %v3310 = vpack.c.b16 %v2822, %v2814
      %v3311 = vpack.c.b16 %v2831, %v2823
      %v3312 = vpack.c.b16 %v2832, %v2824
      %v3313 = vpack.c.b16 %v2833, %v2825
      %v3314 = vpack.c.b16 %v2834, %v2826
      %v3315 = vpack.c.b16 %v2835, %v2827
      %v3316 = vpack.c.b16 %v2836, %v2828
      %v3317 = vpack.c.b16 %v2837, %v2829
      %v3318 = vpack.c.b16 %v2838, %v2830
      %v3319 = vpack.c.b16 %v2847, %v2839
      %v3320 = vpack.c.b16 %v2848, %v2840
      %v3321 = vpack.c.b16 %v2849, %v2841
      %v3322 = vpack.c.b16 %v2850, %v2842
      %v3323 = vpack.c.b16 %v2851, %v2843
      %v3324 = vpack.c.b16 %v2852, %v2844
      %v3325 = vpack.c.b16 %v2853, %v2845
      %v3326 = vpack.c.b16 %v2854, %v2846
      %v3327 = vpack.c.b16 %v2863, %v2855
      %v3328 = vpack.c.b16 %v2864, %v2856
      %v3329 = vpack.c.b16 %v2865, %v2857
      %v3330 = vpack.c.b16 %v2866, %v2858
      %v3331 = vpack.c.b16 %v2867, %v2859
      %v3332 = vpack.c.b16 %v2868, %v2860
      %v3333 = vpack.c.b16 %v2869, %v2861
      %v3334 = vpack.c.b16 %v2870, %v2862
      %v3335 = vpack.c.b16 %v2879, %v2871
      %v3336 = vpack.c.b16 %v2880, %v2872
      %v3337 = vpack.c.b16 %v2881, %v2873
      %v3338 = vpack.c.b16 %v2882, %v2874
      %v3339 = vpack.c.b16 %v2883, %v2875
      %v3340 = vpack.c.b16 %v2884, %v2876
      %v3341 = vpack.c.b16 %v2885, %v2877
      %v3342 = vpack.c.b16 %v2886, %v2878
      %v3343 = vpack.c.b16 %v2895, %v2887
      %v3344 = vpack.c.b16 %v2896, %v2888
      %v3345 = vpack.c.b16 %v2897, %v2889
      %v3346 = vpack.c.b16 %v2898, %v2890
      %v3347 = vpack.c.b16 %v2899, %v2891
      %v3348 = vpack.c.b16 %v2900, %v2892
      %v3349 = vpack.c.b16 %v2901, %v2893
      %v3350 = vpack.c.b16 %v2902, %v2894
      %v3351 = vpack.c.b16 %v2911, %v2903
      %v3352 = vpack.c.b16 %v2912, %v2904
      %v3353 = vpack.c.b16 %v2913, %v2905
      %v3354 = vpack.c.b16 %v2914, %v2906
      %v3355 = vpack.c.b16 %v2915, %v2907
      %v3356 = vpack.c.b16 %v2916, %v2908
      %v3357 = vpack.c.b16 %v2917, %v2909
      %v3358 = vpack.c.b16 %v2918, %v2910
      %v3359 = vpack.c.b16 %v2927, %v2919
      %v3360 = vpack.c.b16 %v2928, %v2920
      %v3361 = vpack.c.b16 %v2929, %v2921
      %v3362 = vpack.c.b16 %v2930, %v2922
      %v3363 = vpack.c.b16 %v2931, %v2923
      %v3364 = vpack.c.b16 %v2932, %v2924
      %v3365 = vpack.c.b16 %v2933, %v2925
      %v3366 = vpack.c.b16 %v2934, %v2926
      %v3367 = vpack.c.b16 %v2943, %v2935
      %v3368 = vpack.c.b16 %v2944, %v2936
      %v3369 = vpack.c.b16 %v2945, %v2937
      %v3370 = vpack.c.b16 %v2946, %v2938
      %v3371 = vpack.c.b16 %v2947, %v2939
      %v3372 = vpack.c.b16 %v2948, %v2940
      %v3373 = vpack.c.b16 %v2949, %v2941
      %v3374 = vpack.c.b16 %v2950, %v2942
      %v3375 = vpack.c.b16 %v2959, %v2951
      %v3376 = vpack.c.b16 %v2960, %v2952
      %v3377 = vpack.c.b16 %v2961, %v2953
      %v3378 = vpack.c.b16 %v2962, %v2954
      %v3379 = vpack.c.b16 %v2963, %v2955
      %v3380 = vpack.c.b16 %v2964, %v2956
      %v3381 = vpack.c.b16 %v2965, %v2957
      %v3382 = vpack.c.b16 %v2966, %v2958
      %v3383 = vpack.c.b16 %v2975, %v2967
      %v3384 = vpack.c.b16 %v2976, %v2968
      %v3385 = vpack.c.b16 %v2977, %v2969
      %v3386 = vpack.c.b16 %v2978, %v2970
      %v3387 = vpack.c.b16 %v2979, %v2971
      %v3388 = vpack.c.b16 %v2980, %v2972
      %v3389 = vpack.c.b16 %v2981, %v2973
      %v3390 = vpack.c.b16 %v2982, %v2974
      %v3391 = vpack.c.b16 %v2991, %v2983
      %v3392 = vpack.c.b16 %v2992, %v2984
      %v3393 = vpack.c.b16 %v2993, %v2985
      %v3394 = vpack.c.b16 %v2994, %v2986
      %v3395 = vpack.c.b16 %v2995, %v2987
      %v3396 = vpack.c.b16 %v2996, %v2988
      %v3397 = vpack.c.b16 %v2997, %v2989
      %v3398 = vpack.c.b16 %v2998, %v2990
      %v3399 = vpack.c.b16 %v3007, %v2999
      %v3400 = vpack.c.b16 %v3008, %v3000
      %v3401 = vpack.c.b16 %v3009, %v3001
      %v3402 = vpack.c.b16 %v3010, %v3002
      %v3403 = vpack.c.b16 %v3011, %v3003
      %v3404 = vpack.c.b16 %v3012, %v3004
      %v3405 = vpack.c.b16 %v3013, %v3005
      %v3406 = vpack.c.b16 %v3014, %v3006
      %v3407 = vpack.c.b16 %v3023, %v3015
      %v3408 = vpack.c.b16 %v3024, %v3016
      %v3409 = vpack.c.b16 %v3025, %v3017
      %v3410 = vpack.c.b16 %v3026, %v3018
      %v3411 = vpack.c.b16 %v3027, %v3019
      %v3412 = vpack.c.b16 %v3028, %v3020
      %v3413 = vpack.c.b16 %v3029, %v3021
      %v3414 = vpack.c.b16 %v3030, %v3022
      %v3415 = vpack.c.b16 %v3039, %v3031
      %v3416 = vpack.c.b16 %v3040, %v3032
      %v3417 = vpack.c.b16 %v3041, %v3033
      %v3418 = vpack.c.b16 %v3042, %v3034
      %v3419 = vpack.c.b16 %v3043, %v3035
      %v3420 = vpack.c.b16 %v3044, %v3036
      %v3421 = vpack.c.b16 %v3045, %v3037
      %v3422 = vpack.c.b16 %v3046, %v3038
      %v3423 = vpack.c.b16 %v3055, %v3047
      %v3424 = vpack.c.b16 %v3056, %v3048
      %v3425 = vpack.c.b16 %v3057, %v3049
      %v3426 = vpack.c.b16 %v3058, %v3050
      %v3427 = vpack.c.b16 %v3059, %v3051
      %v3428 = vpack.c.b16 %v3060, %v3052
      %v3429 = vpack.c.b16 %v3061, %v3053
      %v3430 = vpack.c.b16 %v3062, %v3054
      %v3431 = vpack.c.b16 %v3071, %v3063
      %v3432 = vpack.c.b16 %v3072, %v3064
      %v3433 = vpack.c.b16 %v3073, %v3065
      %v3434 = vpack.c.b16 %v3074, %v3066
      %v3435 = vpack.c.b16 %v3075, %v3067
      %v3436 = vpack.c.b16 %v3076, %v3068
      %v3437 = vpack.c.b16 %v3077, %v3069
      %v3438 = vpack.c.b16 %v3078, %v3070
      %v3439 = vpack.c.b16 %v3087, %v3079
      %v3440 = vpack.c.b16 %v3088, %v3080
      %v3441 = vpack.c.b16 %v3089, %v3081
      %v3442 = vpack.c.b16 %v3090, %v3082
      %v3443 = vpack.c.b16 %v3091, %v3083
      %v3444 = vpack.c.b16 %v3092, %v3084
      %v3445 = vpack.c.b16 %v3093, %v3085
      %v3446 = vpack.c.b16 %v3094, %v3086
      %v3447 = vpack.c.b16 %v3103, %v3095
      %v3448 = vpack.c.b16 %v3104, %v3096
      %v3449 = vpack.c.b16 %v3105, %v3097
      %v3450 = vpack.c.b16 %v3106, %v3098
      %v3451 = vpack.c.b16 %v3107, %v3099
      %v3452 = vpack.c.b16 %v3108, %v3100
      %v3453 = vpack.c.b16 %v3109, %v3101
      %v3454 = vpack.c.b16 %v3110, %v3102
      %v3455 = vpack.c.b16 %v3119, %v3111
      %v3456 = vpack.c.b16 %v3120, %v3112
      %v3457 = vpack.c.b16 %v3121, %v3113
      %v3458 = vpack.c.b16 %v3122, %v3114
      %v3459 = vpack.c.b16 %v3123, %v3115
      %v3460 = vpack.c.b16 %v3124, %v3116
      %v3461 = vpack.c.b16 %v3125, %v3117
      %v3462 = vpack.c.b16 %v3126, %v3118
      %v3463 = vpack.c.b16 %v3135, %v3127
      %v3464 = vpack.c.b16 %v3136, %v3128
      %v3465 = vpack.c.b16 %v3137, %v3129
      %v3466 = vpack.c.b16 %v3138, %v3130
      %v3467 = vpack.c.b16 %v3139, %v3131
      %v3468 = vpack.c.b16 %v3140, %v3132
      %v3469 = vpack.c.b16 %v3141, %v3133
      %v3470 = vpack.c.b16 %v3142, %v3134
      %v3471 = vpack.c.b16 %v3151, %v3143
      %v3472 = vpack.c.b16 %v3152, %v3144
      %v3473 = vpack.c.b16 %v3153, %v3145
      %v3474 = vpack.c.b16 %v3154, %v3146
      %v3475 = vpack.c.b16 %v3155, %v3147
      %v3476 = vpack.c.b16 %v3156, %v3148
      %v3477 = vpack.c.b16 %v3157, %v3149
      %v3478 = vpack.c.b16 %v3158, %v3150
      %v3479 = vpack.c.b16 %v3167, %v3159
      %v3480 = vpack.c.b16 %v3168, %v3160
      %v3481 = vpack.c.b16 %v3169, %v3161
      %v3482 = vpack.c.b16 %v3170, %v3162
      %v3483 = vpack.c.b16 %v3171, %v3163
      %v3484 = vpack.c.b16 %v3172, %v3164
      %v3485 = vpack.c.b16 %v3173, %v3165
      %v3486 = vpack.c.b16 %v3174, %v3166
      %v3487 = vpack.c.b16 %v3183, %v3175
      %v3488 = vpack.c.b16 %v3184, %v3176
      %v3489 = vpack.c.b16 %v3185, %v3177
      %v3490 = vpack.c.b16 %v3186, %v3178
      %v3491 = vpack.c.b16 %v3187, %v3179
      %v3492 = vpack.c.b16 %v3188, %v3180
      %v3493 = vpack.c.b16 %v3189, %v3181
      %v3494 = vpack.c.b16 %v3190, %v3182
      %v3495 = vpack.c.b16 %v3199, %v3191
      %v3496 = vpack.c.b16 %v3200, %v3192
      %v3497 = vpack.c.b16 %v3201, %v3193
      %v3498 = vpack.c.b16 %v3202, %v3194
      %v3499 = vpack.c.b16 %v3203, %v3195
      %v3500 = vpack.c.b16 %v3204, %v3196
      %v3501 = vpack.c.b16 %v3205, %v3197
      %v3502 = vpack.c.b16 %v3206, %v3198
      %v3503 = vpack.c.b16 %v3215, %v3207
      %v3504 = vpack.c.b16 %v3216, %v3208
      %v3505 = vpack.c.b16 %v3217, %v3209
      %v3506 = vpack.c.b16 %v3218, %v3210
      %v3507 = vpack.c.b16 %v3219, %v3211
      %v3508 = vpack.c.b16 %v3220, %v3212
      %v3509 = vpack.c.b16 %v3221, %v3213
      %v3510 = vpack.c.b16 %v3222, %v3214
      %v3511 = vpack.c.b16 %v3231, %v3223
      %v3512 = vpack.c.b16 %v3232, %v3224
      %v3513 = vpack.c.b16 %v3233, %v3225
      %v3514 = vpack.c.b16 %v3234, %v3226
      %v3515 = vpack.c.b16 %v3235, %v3227
      %v3516 = vpack.c.b16 %v3236, %v3228
      %v3517 = vpack.c.b16 %v3237, %v3229
      %v3518 = vpack.c.b16 %v3238, %v3230
      %v3519 = vpack.c.b16 %v3247, %v3239
      %v3520 = vpack.c.b16 %v3248, %v3240
      %v3521 = vpack.c.b16 %v3249, %v3241
      %v3522 = vpack.c.b16 %v3250, %v3242
      %v3523 = vpack.c.b16 %v3251, %v3243
      %v3524 = vpack.c.b16 %v3252, %v3244
      %v3525 = vpack.c.b16 %v3253, %v3245
      %v3526 = vpack.c.b16 %v3254, %v3246
      %v3527 = vpack.c.b16 %v3263, %v3255
      %v3528 = vpack.c.b16 %v3264, %v3256
      %v3529 = vpack.c.b16 %v3265, %v3257
      %v3530 = vpack.c.b16 %v3266, %v3258
      %v3531 = vpack.c.b16 %v3267, %v3259
      %v3532 = vpack.c.b16 %v3268, %v3260
      %v3533 = vpack.c.b16 %v3269, %v3261
      %v3534 = vpack.c.b16 %v3270, %v3262
      %v3535 = vpack.c.b16 %v3279, %v3271
      %v3536 = vpack.c.b16 %v3280, %v3272
      %v3537 = vpack.c.b16 %v3281, %v3273
      %v3538 = vpack.c.b16 %v3282, %v3274
      %v3539 = vpack.c.b16 %v3283, %v3275
      %v3540 = vpack.c.b16 %v3284, %v3276
      %v3541 = vpack.c.b16 %v3285, %v3277
      %v3542 = vpack.c.b16 %v3286, %v3278
      %3799 = vmatpush.bf16.msra.mxu0 %v3343
      %3800 = vmatpush.bf16.msra.mxu0 %v3335
      %3801 = vmatpush.bf16.msra.mxu0 %v3327
      %3802 = vmatpush.bf16.msra.mxu0 %v3319
      %3803 = vmatpush.bf16.msra.mxu0 %v3311
      %3804 = vmatpush.bf16.msra.mxu0 %v3303
      %3805 = vmatpush.bf16.msra.mxu0 %v3295
      %3806 = vmatpush.bf16.msra.mxu0 %v3287
      %3807 = vmatmul.bf16.gmra.mxu0 %v2511
      %v3808 = vpop.f32.mrf.mxu0
      %v3809 = vadd.f32 0.0, %v3808
      %v3810 = vpop.f32.mrf.mxu0
      %3811 = vdwg.mxu0
      %3812 = vmatpush.bf16.msra.mxu0 %v3407
      %3813 = vmatpush.bf16.msra.mxu0 %v3399
      %3814 = vmatpush.bf16.msra.mxu0 %v3391
      %3815 = vmatpush.bf16.msra.mxu0 %v3383
      %3816 = vmatpush.bf16.msra.mxu0 %v3375
      %3817 = vmatpush.bf16.msra.mxu0 %v3367
      %3818 = vmatpush.bf16.msra.mxu0 %v3359
      %3819 = vmatpush.bf16.msra.mxu0 %v3351
      %3820 = vmatmul.bf16.gmra.mxu0 %v2512
      %v3821 = vpop.f32.mrf.mxu0
      %v3822 = vadd.f32 %v3809, %v3821
      %v3823 = vpop.f32.mrf.mxu0
      %3824 = vdwg.mxu0
      %3825 = vmatpush.bf16.msra.mxu0 %v3471
      %3826 = vmatpush.bf16.msra.mxu0 %v3463
      %3827 = vmatpush.bf16.msra.mxu0 %v3455
      %3828 = vmatpush.bf16.msra.mxu0 %v3447
      %3829 = vmatpush.bf16.msra.mxu0 %v3439
      %3830 = vmatpush.bf16.msra.mxu0 %v3431
      %3831 = vmatpush.bf16.msra.mxu0 %v3423
      %3832 = vmatpush.bf16.msra.mxu0 %v3415
      %3833 = vmatmul.bf16.gmra.mxu0 %v2513
      %v3834 = vpop.f32.mrf.mxu0
      %v3835 = vadd.f32 %v3822, %v3834
      %v3836 = vpop.f32.mrf.mxu0
      %3837 = vdwg.mxu0
      %3838 = vmatpush.bf16.msra.mxu0 %v3535
      %3839 = vmatpush.bf16.msra.mxu0 %v3527
      %3840 = vmatpush.bf16.msra.mxu0 %v3519
      %3841 = vmatpush.bf16.msra.mxu0 %v3511
      %3842 = vmatpush.bf16.msra.mxu0 %v3503
      %3843 = vmatpush.bf16.msra.mxu0 %v3495
      %3844 = vmatpush.bf16.msra.mxu0 %v3487
      %3845 = vmatpush.bf16.msra.mxu0 %v3479
      %3846 = vmatmul.bf16.gmra.mxu0 %v2514
      %v3847 = vpop.f32.mrf.mxu0
      %v3848 = vadd.f32 %v3835, %v3847
      %v3849 = vpop.f32.mrf.mxu0
      %3850 = vdwg.mxu0
      %3851 = vmatpush.bf16.msra.mxu0 %v3344
      %3852 = vmatpush.bf16.msra.mxu0 %v3336
      %3853 = vmatpush.bf16.msra.mxu0 %v3328
      %3854 = vmatpush.bf16.msra.mxu0 %v3320
      %3855 = vmatpush.bf16.msra.mxu0 %v3312
      %3856 = vmatpush.bf16.msra.mxu0 %v3304
      %3857 = vmatpush.bf16.msra.mxu0 %v3296
      %3858 = vmatpush.bf16.msra.mxu0 %v3288
      %3859 = vmatmul.bf16.gmra.mxu0 %v2511
      %v3860 = vpop.f32.mrf.mxu0
      %v3861 = vadd.f32 0.0, %v3860
      %v3862 = vpop.f32.mrf.mxu0
      %3863 = vdwg.mxu0
      %3864 = vmatpush.bf16.msra.mxu0 %v3408
      %3865 = vmatpush.bf16.msra.mxu0 %v3400
      %3866 = vmatpush.bf16.msra.mxu0 %v3392
      %3867 = vmatpush.bf16.msra.mxu0 %v3384
      %3868 = vmatpush.bf16.msra.mxu0 %v3376
      %3869 = vmatpush.bf16.msra.mxu0 %v3368
      %3870 = vmatpush.bf16.msra.mxu0 %v3360
      %3871 = vmatpush.bf16.msra.mxu0 %v3352
      %3872 = vmatmul.bf16.gmra.mxu0 %v2512
      %v3873 = vpop.f32.mrf.mxu0
      %v3874 = vadd.f32 %v3861, %v3873
      %v3875 = vpop.f32.mrf.mxu0
      %3876 = vdwg.mxu0
      %3877 = vmatpush.bf16.msra.mxu0 %v3472
      %3878 = vmatpush.bf16.msra.mxu0 %v3464
      %3879 = vmatpush.bf16.msra.mxu0 %v3456
      %3880 = vmatpush.bf16.msra.mxu0 %v3448
      %3881 = vmatpush.bf16.msra.mxu0 %v3440
      %3882 = vmatpush.bf16.msra.mxu0 %v3432
      %3883 = vmatpush.bf16.msra.mxu0 %v3424
      %3884 = vmatpush.bf16.msra.mxu0 %v3416
      %3885 = vmatmul.bf16.gmra.mxu0 %v2513
      %v3886 = vpop.f32.mrf.mxu0
      %v3887 = vadd.f32 %v3874, %v3886
      %v3888 = vpop.f32.mrf.mxu0
      %3889 = vdwg.mxu0
      %3890 = vmatpush.bf16.msra.mxu0 %v3536
      %3891 = vmatpush.bf16.msra.mxu0 %v3528
      %3892 = vmatpush.bf16.msra.mxu0 %v3520
      %3893 = vmatpush.bf16.msra.mxu0 %v3512
      %3894 = vmatpush.bf16.msra.mxu0 %v3504
      %3895 = vmatpush.bf16.msra.mxu0 %v3496
      %3896 = vmatpush.bf16.msra.mxu0 %v3488
      %3897 = vmatpush.bf16.msra.mxu0 %v3480
      %3898 = vmatmul.bf16.gmra.mxu0 %v2514
      %v3899 = vpop.f32.mrf.mxu0
      %v3900 = vadd.f32 %v3887, %v3899
      %v3901 = vpop.f32.mrf.mxu0
      %3902 = vdwg.mxu0
      %3903 = vmatpush.bf16.msra.mxu0 %v3345
      %3904 = vmatpush.bf16.msra.mxu0 %v3337
      %3905 = vmatpush.bf16.msra.mxu0 %v3329
      %3906 = vmatpush.bf16.msra.mxu0 %v3321
      %3907 = vmatpush.bf16.msra.mxu0 %v3313
      %3908 = vmatpush.bf16.msra.mxu0 %v3305
      %3909 = vmatpush.bf16.msra.mxu0 %v3297
      %3910 = vmatpush.bf16.msra.mxu0 %v3289
      %3911 = vmatmul.bf16.gmra.mxu0 %v2511
      %v3912 = vpop.f32.mrf.mxu0
      %v3913 = vadd.f32 0.0, %v3912
      %v3914 = vpop.f32.mrf.mxu0
      %3915 = vdwg.mxu0
      %3916 = vmatpush.bf16.msra.mxu0 %v3409
      %3917 = vmatpush.bf16.msra.mxu0 %v3401
      %3918 = vmatpush.bf16.msra.mxu0 %v3393
      %3919 = vmatpush.bf16.msra.mxu0 %v3385
      %3920 = vmatpush.bf16.msra.mxu0 %v3377
      %3921 = vmatpush.bf16.msra.mxu0 %v3369
      %3922 = vmatpush.bf16.msra.mxu0 %v3361
      %3923 = vmatpush.bf16.msra.mxu0 %v3353
      %3924 = vmatmul.bf16.gmra.mxu0 %v2512
      %v3925 = vpop.f32.mrf.mxu0
      %v3926 = vadd.f32 %v3913, %v3925
      %v3927 = vpop.f32.mrf.mxu0
      %3928 = vdwg.mxu0
      %3929 = vmatpush.bf16.msra.mxu0 %v3473
      %3930 = vmatpush.bf16.msra.mxu0 %v3465
      %3931 = vmatpush.bf16.msra.mxu0 %v3457
      %3932 = vmatpush.bf16.msra.mxu0 %v3449
      %3933 = vmatpush.bf16.msra.mxu0 %v3441
      %3934 = vmatpush.bf16.msra.mxu0 %v3433
      %3935 = vmatpush.bf16.msra.mxu0 %v3425
      %3936 = vmatpush.bf16.msra.mxu0 %v3417
      %3937 = vmatmul.bf16.gmra.mxu0 %v2513
      %v3938 = vpop.f32.mrf.mxu0
      %v3939 = vadd.f32 %v3926, %v3938
      %v3940 = vpop.f32.mrf.mxu0
      %3941 = vdwg.mxu0
      %3942 = vmatpush.bf16.msra.mxu0 %v3537
      %3943 = vmatpush.bf16.msra.mxu0 %v3529
      %3944 = vmatpush.bf16.msra.mxu0 %v3521
      %3945 = vmatpush.bf16.msra.mxu0 %v3513
      %3946 = vmatpush.bf16.msra.mxu0 %v3505
      %3947 = vmatpush.bf16.msra.mxu0 %v3497
      %3948 = vmatpush.bf16.msra.mxu0 %v3489
      %3949 = vmatpush.bf16.msra.mxu0 %v3481
      %3950 = vmatmul.bf16.gmra.mxu0 %v2514
      %v3951 = vpop.f32.mrf.mxu0
      %v3952 = vadd.f32 %v3939, %v3951
      %v3953 = vpop.f32.mrf.mxu0
      %3954 = vdwg.mxu0
      %3955 = vmatpush.bf16.msra.mxu0 %v3346
      %3956 = vmatpush.bf16.msra.mxu0 %v3338
      %3957 = vmatpush.bf16.msra.mxu0 %v3330
      %3958 = vmatpush.bf16.msra.mxu0 %v3322
      %3959 = vmatpush.bf16.msra.mxu0 %v3314
      %3960 = vmatpush.bf16.msra.mxu0 %v3306
      %3961 = vmatpush.bf16.msra.mxu0 %v3298
      %3962 = vmatpush.bf16.msra.mxu0 %v3290
      %3963 = vmatmul.bf16.gmra.mxu0 %v2511
      %v3964 = vpop.f32.mrf.mxu0
      %v3965 = vadd.f32 0.0, %v3964
      %v3966 = vpop.f32.mrf.mxu0
      %3967 = vdwg.mxu0
      %3968 = vmatpush.bf16.msra.mxu0 %v3410
      %3969 = vmatpush.bf16.msra.mxu0 %v3402
      %3970 = vmatpush.bf16.msra.mxu0 %v3394
      %3971 = vmatpush.bf16.msra.mxu0 %v3386
      %3972 = vmatpush.bf16.msra.mxu0 %v3378
      %3973 = vmatpush.bf16.msra.mxu0 %v3370
      %3974 = vmatpush.bf16.msra.mxu0 %v3362
      %3975 = vmatpush.bf16.msra.mxu0 %v3354
      %3976 = vmatmul.bf16.gmra.mxu0 %v2512
      %v3977 = vpop.f32.mrf.mxu0
      %v3978 = vadd.f32 %v3965, %v3977
      %v3979 = vpop.f32.mrf.mxu0
      %3980 = vdwg.mxu0
      %3981 = vmatpush.bf16.msra.mxu0 %v3474
      %3982 = vmatpush.bf16.msra.mxu0 %v3466
      %3983 = vmatpush.bf16.msra.mxu0 %v3458
      %3984 = vmatpush.bf16.msra.mxu0 %v3450
      %3985 = vmatpush.bf16.msra.mxu0 %v3442
      %3986 = vmatpush.bf16.msra.mxu0 %v3434
      %3987 = vmatpush.bf16.msra.mxu0 %v3426
      %3988 = vmatpush.bf16.msra.mxu0 %v3418
      %3989 = vmatmul.bf16.gmra.mxu0 %v2513
      %v3990 = vpop.f32.mrf.mxu0
      %v3991 = vadd.f32 %v3978, %v3990
      %v3992 = vpop.f32.mrf.mxu0
      %3993 = vdwg.mxu0
      %3994 = vmatpush.bf16.msra.mxu0 %v3538
      %3995 = vmatpush.bf16.msra.mxu0 %v3530
      %3996 = vmatpush.bf16.msra.mxu0 %v3522
      %3997 = vmatpush.bf16.msra.mxu0 %v3514
      %3998 = vmatpush.bf16.msra.mxu0 %v3506
      %3999 = vmatpush.bf16.msra.mxu0 %v3498
      %4000 = vmatpush.bf16.msra.mxu0 %v3490
      %4001 = vmatpush.bf16.msra.mxu0 %v3482
      %4002 = vmatmul.bf16.gmra.mxu0 %v2514
      %v4003 = vpop.f32.mrf.mxu0
      %v4004 = vadd.f32 %v3991, %v4003
      %v4005 = vpop.f32.mrf.mxu0
      %4006 = vdwg.mxu0
      %4007 = vmatpush.bf16.msra.mxu0 %v3347
      %4008 = vmatpush.bf16.msra.mxu0 %v3339
      %4009 = vmatpush.bf16.msra.mxu0 %v3331
      %4010 = vmatpush.bf16.msra.mxu0 %v3323
      %4011 = vmatpush.bf16.msra.mxu0 %v3315
      %4012 = vmatpush.bf16.msra.mxu0 %v3307
      %4013 = vmatpush.bf16.msra.mxu0 %v3299
      %4014 = vmatpush.bf16.msra.mxu0 %v3291
      %4015 = vmatmul.bf16.gmra.mxu0 %v2511
      %v4016 = vpop.f32.mrf.mxu0
      %v4017 = vadd.f32 0.0, %v4016
      %v4018 = vpop.f32.mrf.mxu0
      %4019 = vdwg.mxu0
      %4020 = vmatpush.bf16.msra.mxu0 %v3411
      %4021 = vmatpush.bf16.msra.mxu0 %v3403
      %4022 = vmatpush.bf16.msra.mxu0 %v3395
      %4023 = vmatpush.bf16.msra.mxu0 %v3387
      %4024 = vmatpush.bf16.msra.mxu0 %v3379
      %4025 = vmatpush.bf16.msra.mxu0 %v3371
      %4026 = vmatpush.bf16.msra.mxu0 %v3363
      %4027 = vmatpush.bf16.msra.mxu0 %v3355
      %4028 = vmatmul.bf16.gmra.mxu0 %v2512
      %v4029 = vpop.f32.mrf.mxu0
      %v4030 = vadd.f32 %v4017, %v4029
      %v4031 = vpop.f32.mrf.mxu0
      %4032 = vdwg.mxu0
      %4033 = vmatpush.bf16.msra.mxu0 %v3475
      %4034 = vmatpush.bf16.msra.mxu0 %v3467
      %4035 = vmatpush.bf16.msra.mxu0 %v3459
      %4036 = vmatpush.bf16.msra.mxu0 %v3451
      %4037 = vmatpush.bf16.msra.mxu0 %v3443
      %4038 = vmatpush.bf16.msra.mxu0 %v3435
      %4039 = vmatpush.bf16.msra.mxu0 %v3427
      %4040 = vmatpush.bf16.msra.mxu0 %v3419
      %4041 = vmatmul.bf16.gmra.mxu0 %v2513
      %v4042 = vpop.f32.mrf.mxu0
      %v4043 = vadd.f32 %v4030, %v4042
      %v4044 = vpop.f32.mrf.mxu0
      %4045 = vdwg.mxu0
      %4046 = vmatpush.bf16.msra.mxu0 %v3539
      %4047 = vmatpush.bf16.msra.mxu0 %v3531
      %4048 = vmatpush.bf16.msra.mxu0 %v3523
      %4049 = vmatpush.bf16.msra.mxu0 %v3515
      %4050 = vmatpush.bf16.msra.mxu0 %v3507
      %4051 = vmatpush.bf16.msra.mxu0 %v3499
      %4052 = vmatpush.bf16.msra.mxu0 %v3491
      %4053 = vmatpush.bf16.msra.mxu0 %v3483
      %4054 = vmatmul.bf16.gmra.mxu0 %v2514
      %v4055 = vpop.f32.mrf.mxu0
      %v4056 = vadd.f32 %v4043, %v4055
      %v4057 = vpop.f32.mrf.mxu0
      %4058 = vdwg.mxu0
      %4059 = vmatpush.bf16.msra.mxu0 %v3348
      %4060 = vmatpush.bf16.msra.mxu0 %v3340
      %4061 = vmatpush.bf16.msra.mxu0 %v3332
      %4062 = vmatpush.bf16.msra.mxu0 %v3324
      %4063 = vmatpush.bf16.msra.mxu0 %v3316
      %4064 = vmatpush.bf16.msra.mxu0 %v3308
      %4065 = vmatpush.bf16.msra.mxu0 %v3300
      %4066 = vmatpush.bf16.msra.mxu0 %v3292
      %4067 = vmatmul.bf16.gmra.mxu0 %v2511
      %v4068 = vpop.f32.mrf.mxu0
      %v4069 = vadd.f32 0.0, %v4068
      %v4070 = vpop.f32.mrf.mxu0
      %4071 = vdwg.mxu0
      %4072 = vmatpush.bf16.msra.mxu0 %v3412
      %4073 = vmatpush.bf16.msra.mxu0 %v3404
      %4074 = vmatpush.bf16.msra.mxu0 %v3396
      %4075 = vmatpush.bf16.msra.mxu0 %v3388
      %4076 = vmatpush.bf16.msra.mxu0 %v3380
      %4077 = vmatpush.bf16.msra.mxu0 %v3372
      %4078 = vmatpush.bf16.msra.mxu0 %v3364
      %4079 = vmatpush.bf16.msra.mxu0 %v3356
      %4080 = vmatmul.bf16.gmra.mxu0 %v2512
      %v4081 = vpop.f32.mrf.mxu0
      %v4082 = vadd.f32 %v4069, %v4081
      %v4083 = vpop.f32.mrf.mxu0
      %4084 = vdwg.mxu0
      %4085 = vmatpush.bf16.msra.mxu0 %v3476
      %4086 = vmatpush.bf16.msra.mxu0 %v3468
      %4087 = vmatpush.bf16.msra.mxu0 %v3460
      %4088 = vmatpush.bf16.msra.mxu0 %v3452
      %4089 = vmatpush.bf16.msra.mxu0 %v3444
      %4090 = vmatpush.bf16.msra.mxu0 %v3436
      %4091 = vmatpush.bf16.msra.mxu0 %v3428
      %4092 = vmatpush.bf16.msra.mxu0 %v3420
      %4093 = vmatmul.bf16.gmra.mxu0 %v2513
      %v4094 = vpop.f32.mrf.mxu0
      %v4095 = vadd.f32 %v4082, %v4094
      %v4096 = vpop.f32.mrf.mxu0
      %4097 = vdwg.mxu0
      %4098 = vmatpush.bf16.msra.mxu0 %v3540
      %4099 = vmatpush.bf16.msra.mxu0 %v3532
      %4100 = vmatpush.bf16.msra.mxu0 %v3524
      %4101 = vmatpush.bf16.msra.mxu0 %v3516
      %4102 = vmatpush.bf16.msra.mxu0 %v3508
      %4103 = vmatpush.bf16.msra.mxu0 %v3500
      %4104 = vmatpush.bf16.msra.mxu0 %v3492
      %4105 = vmatpush.bf16.msra.mxu0 %v3484
      %4106 = vmatmul.bf16.gmra.mxu0 %v2514
      %v4107 = vpop.f32.mrf.mxu0
      %v4108 = vadd.f32 %v4095, %v4107
      %v4109 = vpop.f32.mrf.mxu0
      %4110 = vdwg.mxu0
      %4111 = vmatpush.bf16.msra.mxu0 %v3349
      %4112 = vmatpush.bf16.msra.mxu0 %v3341
      %4113 = vmatpush.bf16.msra.mxu0 %v3333
      %4114 = vmatpush.bf16.msra.mxu0 %v3325
      %4115 = vmatpush.bf16.msra.mxu0 %v3317
      %4116 = vmatpush.bf16.msra.mxu0 %v3309
      %4117 = vmatpush.bf16.msra.mxu0 %v3301
      %4118 = vmatpush.bf16.msra.mxu0 %v3293
      %4119 = vmatmul.bf16.gmra.mxu0 %v2511
      %v4120 = vpop.f32.mrf.mxu0
      %v4121 = vadd.f32 0.0, %v4120
      %v4122 = vpop.f32.mrf.mxu0
      %4123 = vdwg.mxu0
      %4124 = vmatpush.bf16.msra.mxu0 %v3413
      %4125 = vmatpush.bf16.msra.mxu0 %v3405
      %4126 = vmatpush.bf16.msra.mxu0 %v3397
      %4127 = vmatpush.bf16.msra.mxu0 %v3389
      %4128 = vmatpush.bf16.msra.mxu0 %v3381
      %4129 = vmatpush.bf16.msra.mxu0 %v3373
      %4130 = vmatpush.bf16.msra.mxu0 %v3365
      %4131 = vmatpush.bf16.msra.mxu0 %v3357
      %4132 = vmatmul.bf16.gmra.mxu0 %v2512
      %v4133 = vpop.f32.mrf.mxu0
      %v4134 = vadd.f32 %v4121, %v4133
      %v4135 = vpop.f32.mrf.mxu0
      %4136 = vdwg.mxu0
      %4137 = vmatpush.bf16.msra.mxu0 %v3477
      %4138 = vmatpush.bf16.msra.mxu0 %v3469
      %4139 = vmatpush.bf16.msra.mxu0 %v3461
      %4140 = vmatpush.bf16.msra.mxu0 %v3453
      %4141 = vmatpush.bf16.msra.mxu0 %v3445
      %4142 = vmatpush.bf16.msra.mxu0 %v3437
      %4143 = vmatpush.bf16.msra.mxu0 %v3429
      %4144 = vmatpush.bf16.msra.mxu0 %v3421
      %4145 = vmatmul.bf16.gmra.mxu0 %v2513
      %v4146 = vpop.f32.mrf.mxu0
      %v4147 = vadd.f32 %v4134, %v4146
      %v4148 = vpop.f32.mrf.mxu0
      %4149 = vdwg.mxu0
      %4150 = vmatpush.bf16.msra.mxu0 %v3541
      %4151 = vmatpush.bf16.msra.mxu0 %v3533
      %4152 = vmatpush.bf16.msra.mxu0 %v3525
      %4153 = vmatpush.bf16.msra.mxu0 %v3517
      %4154 = vmatpush.bf16.msra.mxu0 %v3509
      %4155 = vmatpush.bf16.msra.mxu0 %v3501
      %4156 = vmatpush.bf16.msra.mxu0 %v3493
      %4157 = vmatpush.bf16.msra.mxu0 %v3485
      %4158 = vmatmul.bf16.gmra.mxu0 %v2514
      %v4159 = vpop.f32.mrf.mxu0
      %v4160 = vadd.f32 %v4147, %v4159
      %v4161 = vpop.f32.mrf.mxu0
      %4162 = vdwg.mxu0
      %4163 = vmatpush.bf16.msra.mxu0 %v3350
      %4164 = vmatpush.bf16.msra.mxu0 %v3342
      %4165 = vmatpush.bf16.msra.mxu0 %v3334
      %4166 = vmatpush.bf16.msra.mxu0 %v3326
      %4167 = vmatpush.bf16.msra.mxu0 %v3318
      %4168 = vmatpush.bf16.msra.mxu0 %v3310
      %4169 = vmatpush.bf16.msra.mxu0 %v3302
      %4170 = vmatpush.bf16.msra.mxu0 %v3294
      %4171 = vmatmul.bf16.gmra.mxu0 %v2511
      %v4172 = vpop.f32.mrf.mxu0
      %v4173 = vadd.f32 0.0, %v4172
      %v4174 = vpop.f32.mrf.mxu0
      %4175 = vdwg.mxu0
      %4176 = vmatpush.bf16.msra.mxu0 %v3414
      %4177 = vmatpush.bf16.msra.mxu0 %v3406
      %4178 = vmatpush.bf16.msra.mxu0 %v3398
      %4179 = vmatpush.bf16.msra.mxu0 %v3390
      %4180 = vmatpush.bf16.msra.mxu0 %v3382
      %4181 = vmatpush.bf16.msra.mxu0 %v3374
      %4182 = vmatpush.bf16.msra.mxu0 %v3366
      %4183 = vmatpush.bf16.msra.mxu0 %v3358
      %4184 = vmatmul.bf16.gmra.mxu0 %v2512
      %v4185 = vpop.f32.mrf.mxu0
      %v4186 = vadd.f32 %v4173, %v4185
      %v4187 = vpop.f32.mrf.mxu0
      %4188 = vdwg.mxu0
      %4189 = vmatpush.bf16.msra.mxu0 %v3478
      %4190 = vmatpush.bf16.msra.mxu0 %v3470
      %4191 = vmatpush.bf16.msra.mxu0 %v3462
      %4192 = vmatpush.bf16.msra.mxu0 %v3454
      %4193 = vmatpush.bf16.msra.mxu0 %v3446
      %4194 = vmatpush.bf16.msra.mxu0 %v3438
      %4195 = vmatpush.bf16.msra.mxu0 %v3430
      %4196 = vmatpush.bf16.msra.mxu0 %v3422
      %4197 = vmatmul.bf16.gmra.mxu0 %v2513
      %v4198 = vpop.f32.mrf.mxu0
      %v4199 = vadd.f32 %v4186, %v4198
      %v4200 = vpop.f32.mrf.mxu0
      %4201 = vdwg.mxu0
      %4202 = vmatpush.bf16.msra.mxu0 %v3542
      %4203 = vmatpush.bf16.msra.mxu0 %v3534
      %4204 = vmatpush.bf16.msra.mxu0 %v3526
      %4205 = vmatpush.bf16.msra.mxu0 %v3518
      %4206 = vmatpush.bf16.msra.mxu0 %v3510
      %4207 = vmatpush.bf16.msra.mxu0 %v3502
      %4208 = vmatpush.bf16.msra.mxu0 %v3494
      %4209 = vmatpush.bf16.msra.mxu0 %v3486
      %4210 = vmatmul.bf16.gmra.mxu0 %v2514
      %v4211 = vpop.f32.mrf.mxu0
      %v4212 = vadd.f32 %v4199, %v4211
      %v4213 = vpop.f32.mrf.mxu0
      %4214 = vdwg.mxu0
      %4215 = vst [vmem:[%s163] sm:$0xff] %v3848
      %4216 = vst [vmem:[%s163 + $0x8] sm:$0xff] %v3900
      %4217 = vst [vmem:[%s163 + $0x10] sm:$0xff] %v3952
      %4218 = vst [vmem:[%s163 + $0x18] sm:$0xff] %v4004
      %4219 = vst [vmem:[%s163 + $0x20] sm:$0xff] %v4056
      %4220 = vst [vmem:[%s163 + $0x28] sm:$0xff] %v4108
      %4221 = vst [vmem:[%s163 + $0x30] sm:$0xff] %v4160
      %4222 = vst [vmem:[%s163 + $0x38] sm:$0xff] %v4212
      %p4223 = scmp.lt.s32.totalorder %s13, 2
      %s4224 = scalar_select %p4223, %s13, 2
      %s4225 = smul.addr %s4224, 8
      %s4226 = smul.addr %s4225, 8
      %s4227 = scalar_lea.vmem %s2, %s4226
      // Predicated region
      $region29: #{ses_conv_h_h_forward.1} parent=27 // pred_check
        %p4228 = pneg %p83
      $region30: #{ses_conv_h_h_forward.1} parent=27 // pred_check_branch
        %4230 = sbr.rel (%p4228) target = $region32
      $region31: #{ses_conv_h_h_forward.1} parent=27 // pred_region
        _
      $region32: #{ses_conv_h_h_forward.1} parent=27 // pred_fallthru
        _
    $region28: #{ses_conv_h_h_forward.1} parent=5 // pred_fallthru
      _
    %p4231 = scmp.le.s32.totalorder 2, %s8
    // Predicated region
    $region33: #{ses_conv_h_h_forward.1} parent=5 // pred_check
      %p4232 = pneg %p4231
    $region34: #{ses_conv_h_h_forward.1} parent=5 // pred_check_branch
      %4234 = sbr.rel (%p4232) target = $region36
    $region35: #{ses_conv_h_h_forward.1} parent=5 // pred_region
      %s4235 = ssub.s32 %s8, 2
      // Predicated region
      $region37: #{ses_conv_h_h_forward.1} parent=35 // pred_check
        %p4236 = pneg %p89
      $region38: #{ses_conv_h_h_forward.1} parent=35 // pred_check_branch
        %4238 = sbr.rel (%p4236) target = $region40
      $region39: #{ses_conv_h_h_forward.1} parent=35 // pred_region
        %p4239 = scmp.lt.s32.totalorder %s14, 2
        %s4240 = scalar_select %p4239, %s14, 2
        %s4241 = smul.addr %s4240, 8
        %s4242 = smul.addr %s4241, 8
        %s4243 = scalar_lea.vmem %s2, %s4242
      $region40: #{ses_conv_h_h_forward.1} parent=35 // pred_fallthru
        _
    $region36: #{ses_conv_h_h_forward.1} parent=5 // pred_fallthru
      _
  $region6: #{ses_conv_h_h_forward.1} parent=0 // loop_footer
    %s12 = sadd.s32 1, %s8
  $region7: #{ses_conv_h_h_forward.1} parent=0 // loop_footer_branch
    %7 = sbr.rel target = $region3
  $region8: #{ses_conv_h_h_forward.1} parent=0 // loop_exit
    _

</llo_original>
